<compile_context>
chip_gen: v7x
topology: tpu7x:2x2x1
jax: 0.10.0
libtpu: 0.0.40
codegen_flags: <defaults>
</compile_context>

<pallas_src>
import jax
import jax.numpy as jnp
from jax.experimental import pallas as pl
from jax.experimental.pallas import tpu as pltpu

_LANE = 128
_SUBLANE_BF16 = 16


def _round_up(n, m):
    return ((n + m - 1) // m) * m


def _encoder_kernel(x_ref,
                    w1_ref, s1_ref, b1_ref,
                    w2_ref, s2_ref, b2_ref,
                    w3_ref, s3_ref, b3_ref,
                    w4_ref, s4_ref, b4_ref,
                    alpha_ref,
                    o_ref,
                    acc_ref):
    """Fused 4-layer MLP with PReLU.

    Grid = (batch_tiles, k_steps).  Layer 1 is accumulated over the K axis
    into `acc_ref` (f32); layers 2-4 + output store run only on the last K
    step.  Weights are int8 and dequantized to bf16 on the fly; per-output
    -channel scales are applied post-matmul so accumulation stays exact f32.
    """
    k = pl.program_id(1)
    nk = pl.num_programs(1)

    @pl.when(k == 0)
    def _():
        acc_ref[...] = jnp.zeros_like(acc_ref)

    # Layer-1 partial matmul for this K tile (int8 weights -> bf16, f32 acc).
    x = x_ref[...].astype(jnp.bfloat16)
    acc_ref[...] += jnp.dot(x, w1_ref[...].astype(jnp.bfloat16),
                            preferred_element_type=jnp.float32)

    @pl.when(k == nk - 1)
    def _():
        def prelu(h, a):
            # PReLU with a single learnable scalar (PyTorch default
            # num_parameters=1).
            return jnp.where(h > 0, h, a * h)

        def qlinear(h_bf, w_ref, s_ref, b_ref):
            acc = jnp.dot(h_bf, w_ref[...].astype(jnp.bfloat16),
                          preferred_element_type=jnp.float32)
            return acc * s_ref[...] + b_ref[...]

        h = acc_ref[...] * s1_ref[...] + b1_ref[...]
        h = prelu(h, alpha_ref[0]).astype(jnp.bfloat16)
        h = prelu(qlinear(h, w2_ref, s2_ref, b2_ref), alpha_ref[1]).astype(jnp.bfloat16)
        h = prelu(qlinear(h, w3_ref, s3_ref, b3_ref), alpha_ref[2]).astype(jnp.bfloat16)
        o_ref[...] = qlinear(h, w4_ref, s4_ref, b4_ref).astype(o_ref.dtype)


def _quantize_per_out_channel(w):
    """Symmetric int8 weight quantization with one f32 scale per output col."""
    absmax = jnp.max(jnp.abs(w), axis=0, keepdims=True)
    scale = jnp.where(absmax > 0, absmax, 1.0) / 127.0
    w_q = jnp.clip(jnp.round(w / scale), -127, 127).astype(jnp.int8)
    return w_q, scale.astype(jnp.float32)


def prepare_encoder_params(params):
    """One-time padding (ragged dims -> multiples of 128) + int8 quantization.

    Zero-padding is exact: padded x/W1 columns give h==0, PReLU(0)==0, and the
    corresponding padded W2 rows are zero, so results are unchanged.
    """
    (w1, b1, a1), (w2, b2, a2), (w3, b3, a3), (w4, b4) = params
    assert a1.size == 1 and a2.size == 1 and a3.size == 1, \
        "kernel assumes PyTorch PReLU default num_parameters=1 (scalar alpha)"

    in_size, h1 = w1.shape
    h2, h3 = w2.shape[1], w3.shape[1]
    out_size = w4.shape[1]

    in_p = _round_up(in_size, _LANE)
    h1_p = _round_up(h1, _LANE)          # 786 -> 896 (not 1024: keeps bytes down)
    out_p = _round_up(out_size, _LANE)   # 60  -> 128

    def pad2(a, rows, cols):
        return jnp.pad(a, ((0, rows - a.shape[0]), (0, cols - a.shape[1])))

    w1q, s1 = _quantize_per_out_channel(pad2(w1, in_p, h1_p))
    w2q, s2 = _quantize_per_out_channel(pad2(w2, h1_p, h2))
    w3q, s3 = _quantize_per_out_channel(w3)
    w4q, s4 = _quantize_per_out_channel(pad2(w4, h3, out_p))

    return dict(
        in_size=in_size, in_p=in_p, h1_p=h1_p, h2=h2, h3=h3,
        out_size=out_size, out_p=out_p,
        w1=w1q, s1=s1, b1=pad2(b1, 1, h1_p).astype(jnp.float32),
        w2=w2q, s2=s2, b2=b2.astype(jnp.float32),
        w3=w3q, s3=s3, b3=b3.astype(jnp.float32),
        w4=w4q, s4=s4, b4=pad2(b4, 1, out_p).astype(jnp.float32),
        alphas=jnp.concatenate(
            [a1.reshape(-1), a2.reshape(-1), a3.reshape(-1)]).astype(jnp.float32),
    )


def encoder_forward(x, prepared, out_dtype=jnp.bfloat16):
    """x: [B, input_size] float32. prepared: output of prepare_encoder_params."""
    B, in_size = x.shape
    assert in_size == prepared["in_size"]
    in_p, h1_p = prepared["in_p"], prepared["h1_p"]
    h2, h3 = prepared["h2"], prepared["h3"]
    out_p, out_size = prepared["out_p"], prepared["out_size"]

    # Batch tile: bf16-native minimum of 16 rows; 256-row tiles for large B.
    tb = max(_round_up(B, _SUBLANE_BF16), _SUBLANE_BF16) if B <= 256 else 256
    b_pad = _round_up(B, tb)
    b_tiles = b_pad // tb

    # K tiling of layer 1: with a single batch tile, stream W1 in K-chunks so
    # the int8 HBM fetch overlaps dequant + matmul; with many batch tiles keep
    # W1 fully resident (fetched once) instead.
    if b_tiles == 1 and in_p > 1024:
        tk = 1024
        while in_p % tk:            # keep tk a multiple of 128 dividing in_p
            tk -= _LANE
    else:
        tk = in_p
    k_steps = in_p // tk

    # x stays f32 (cast to bf16 in-kernel); pad only when actually needed.
    if b_pad != B or in_p != in_size:
        x = jnp.pad(x, ((0, b_pad - B), (0, in_p - in_size)))

    # Right-size the VMEM reservation (v7x has only 64 MiB per TensorCore).
    weight_bytes = 2 * tk * h1_p + 2 * (h1_p * h2 + h2 * h3 + h3 * out_p)  # int8, dbl-buffered
    act_bytes = 2 * tb * tk * 4 + 2 * tb * out_p * 2 + tb * h1_p * 4
    misc_bytes = 8 * (h1_p + h2 + h3 + out_p) * 4
    vmem_limit = int(min(max(2 * (weight_bytes + act_bytes + misc_bytes), 16 << 20),
                         64 << 20))

    # Megacore sharding of the batch axis only pays off once B is large;
    # at small B it just duplicates the weight DMA per TensorCore.
    batch_sem = "parallel" if B > 512 else "arbitrary"

    out = pl.pallas_call(
        _encoder_kernel,
        out_shape=jax.ShapeDtypeStruct((b_pad, out_p), out_dtype),
        grid_spec=pltpu.PrefetchScalarGridSpec(
            num_scalar_prefetch=0,
            grid=(b_tiles, k_steps),
            in_specs=[
                pl.BlockSpec((tb, tk), lambda i, k: (i, k)),        # x tile (f32)
                pl.BlockSpec((tk, h1_p), lambda i, k: (k, 0)),      # W1 int8 (K-streamed)
                pl.BlockSpec((1, h1_p), lambda i, k: (0, 0)),       # s1
                pl.BlockSpec((1, h1_p), lambda i, k: (0, 0)),       # b1
                pl.BlockSpec((h1_p, h2), lambda i, k: (0, 0)),      # W2 int8 (resident)
                pl.BlockSpec((1, h2), lambda i, k: (0, 0)),         # s2
                pl.BlockSpec((1, h2), lambda i, k: (0, 0)),         # b2
                pl.BlockSpec((h2, h3), lambda i, k: (0, 0)),        # W3 int8
                pl.BlockSpec((1, h3), lambda i, k: (0, 0)),         # s3
                pl.BlockSpec((1, h3), lambda i, k: (0, 0)),         # b3
                pl.BlockSpec((h3, out_p), lambda i, k: (0, 0)),     # W4 int8
                pl.BlockSpec((1, out_p), lambda i, k: (0, 0)),      # s4
                pl.BlockSpec((1, out_p), lambda i, k: (0, 0)),      # b4
                pl.BlockSpec(memory_space=pltpu.MemorySpace.SMEM),  # alphas (3,)
            ],
            out_specs=pl.BlockSpec((tb, out_p), lambda i, k: (i, 0)),
            scratch_shapes=[pltpu.VMEM((tb, h1_p), jnp.float32)],   # layer-1 accumulator
        ),
        compiler_params=pltpu.CompilerParams(
            dimension_semantics=(batch_sem, "arbitrary"),
            vmem_limit_bytes=vmem_limit,
        ),
    )(
        x,
        prepared["w1"], prepared["s1"], prepared["b1"],
        prepared["w2"], prepared["s2"], prepared["b2"],
        prepared["w3"], prepared["s3"], prepared["b3"],
        prepared["w4"], prepared["s4"], prepared["b4"],
        prepared["alphas"],
    )
    return out[:B, :out_size]


def encoder_ref(x, params):
    """Pure-JAX fp32 reference (mirrors the PyTorch forward exactly)."""
    (w1, b1, a1), (w2, b2, a2), (w3, b3, a3), (w4, b4) = params

    def prelu(h, a):
        return jnp.where(h > 0, h, a * h)

    h = prelu(x @ w1 + b1, a1.reshape(()))
    h = prelu(h @ w2 + b2, a2.reshape(()))
    h = prelu(h @ w3 + b3, a3.reshape(()))
    return h @ w4 + b4


def encoder_ref_quant(x, prepared):
    """Pure-JAX reference at the kernel's precision (int8 weights, bf16 acts,
    f32 accumulation) for tight tolerance checking."""
    bf = jnp.bfloat16

    def prelu(h, a):
        return jnp.where(h > 0, h, a * h)

    def qlin(h, w_q, s, b):
        acc = jnp.dot(h.astype(bf), w_q.astype(bf),
                      preferred_element_type=jnp.float32)
        return acc * s + b

    xp = jnp.pad(x, ((0, 0), (0, prepared["in_p"] - x.shape[1])))
    a = prepared["alphas"]
    h = prelu(qlin(xp, prepared["w1"], prepared["s1"], prepared["b1"]), a[0]).astype(bf)
    h = prelu(qlin(h, prepared["w2"], prepared["s2"], prepared["b2"]), a[1]).astype(bf)
    h = prelu(qlin(h, prepared["w3"], prepared["s3"], prepared["b3"]), a[2]).astype(bf)
    out = qlin(h, prepared["w4"], prepared["s4"], prepared["b4"])
    return out[:, :prepared["out_size"]]


def init_params(key, input_size, output_size):
    """nn.Linear-style U(-1/sqrt(fan_in), 1/sqrt(fan_in)) init, PReLU alpha=0.25.
    Weights stored as [in, out]."""
    dims = [input_size, 786, 512, 256, output_size]
    keys = jax.random.split(key, 2 * (len(dims) - 1))
    layers = []
    for li in range(len(dims) - 1):
        fan_in, fan_out = dims[li], dims[li + 1]
        bound = 1.0 / jnp.sqrt(fan_in)
        w = jax.random.uniform(keys[2 * li], (fan_in, fan_out),
                               minval=-bound, maxval=bound, dtype=jnp.float32)
        b = jax.random.uniform(keys[2 * li + 1], (1, fan_out),
                               minval=-bound, maxval=bound, dtype=jnp.float32)
        if li < 3:
            alpha = jnp.full((1, 1), 0.25, dtype=jnp.float32)
            layers.append((w, b, alpha))
        else:
            layers.append((w, b))
    return tuple(layers)


if __name__ == "__main__":
    # Small shapes consistent with the module (hidden widths 786/512/256 fixed
    # by the architecture); Encoder(input_size=2048, output_size=60), batch=4.
    batch = 4
    input_size = 2048
    output_size = 60

    key = jax.random.PRNGKey(0)
    k_x, k_p = jax.random.split(key)
    x = jax.random.normal(k_x, (batch, input_size), dtype=jnp.float32)
    params = init_params(k_p, input_size, output_size)
    prepared = prepare_encoder_params(params)

    out = jax.block_until_ready(encoder_forward(x, prepared))
    assert out.shape == (batch, output_size), out.shape
    out_f32 = out.astype(jnp.float32)

    ref_q = jax.block_until_ready(encoder_ref_quant(x, prepared)).astype(jnp.float32)
    ref_f = jax.block_until_ready(encoder_ref(x, params))

    err_q = jnp.max(jnp.abs(out_f32 - ref_q))
    err_f = jnp.max(jnp.abs(out_f32 - ref_f))
    assert jnp.allclose(out_f32, ref_q, rtol=2e-2, atol=2e-2), \
        f"vs matching-precision (int8/bf16) ref: max abs err {err_q}"
    assert jnp.allclose(out_f32, ref_f, rtol=8e-2, atol=8e-2), \
        f"vs fp32 ref: max abs err {err_f}"

    print("KERNEL_OK")
</pallas_src>

<mosaic_0001>
module attributes {stable_mosaic.version = 11 : i64} {
  func.func @_encoder_kernel(%arg0: i32, %arg1: i32, %arg2: memref<16x1024xf32, #tpu.memory_space<vmem>>, %arg3: memref<1024x896xi8, #tpu.memory_space<vmem>>, %arg4: memref<1x896xf32, #tpu.memory_space<vmem>>, %arg5: memref<1x896xf32, #tpu.memory_space<vmem>>, %arg6: memref<896x512xi8, #tpu.memory_space<vmem>>, %arg7: memref<1x512xf32, #tpu.memory_space<vmem>>, %arg8: memref<1x512xf32, #tpu.memory_space<vmem>>, %arg9: memref<512x256xi8, #tpu.memory_space<vmem>>, %arg10: memref<1x256xf32, #tpu.memory_space<vmem>>, %arg11: memref<1x256xf32, #tpu.memory_space<vmem>>, %arg12: memref<256x128xi8, #tpu.memory_space<vmem>>, %arg13: memref<1x128xf32, #tpu.memory_space<vmem>>, %arg14: memref<1x128xf32, #tpu.memory_space<vmem>>, %arg15: memref<3xf32, #tpu.memory_space<smem>>, %arg16: memref<16x128xbf16, #tpu.memory_space<vmem>>, %arg17: memref<16x896xf32, #tpu.memory_space<vmem>>) attributes {dimension_semantics = [#tpu.dimension_semantics<arbitrary>, #tpu.dimension_semantics<arbitrary>], iteration_bounds = array<i64: 1, 2>, scalar_prefetch = 0 : i64, scratch_operands = 1 : i64, tpu.core_type = #tpu.core_type<tc>, window_params = [{transform_indices = @transform_0, window_bounds = array<i64: 16, 1024>}, {transform_indices = @transform_1, window_bounds = array<i64: 1024, 896>}, {pipeline_mode = #tpu.pipeline_mode<synchronous>, transform_indices = @transform_2, window_bounds = array<i64: 1, 896>}, {pipeline_mode = #tpu.pipeline_mode<synchronous>, transform_indices = @transform_3, window_bounds = array<i64: 1, 896>}, {pipeline_mode = #tpu.pipeline_mode<synchronous>, transform_indices = @transform_4, window_bounds = array<i64: 896, 512>}, {pipeline_mode = #tpu.pipeline_mode<synchronous>, transform_indices = @transform_5, window_bounds = array<i64: 1, 512>}, {pipeline_mode = #tpu.pipeline_mode<synchronous>, transform_indices = @transform_6, window_bounds = array<i64: 1, 512>}, {pipeline_mode = #tpu.pipeline_mode<synchronous>, transform_indices = @transform_7, window_bounds = array<i64: 512, 256>}, {pipeline_mode = #tpu.pipeline_mode<synchronous>, transform_indices = @transform_8, window_bounds = array<i64: 1, 256>}, {pipeline_mode = #tpu.pipeline_mode<synchronous>, transform_indices = @transform_9, window_bounds = array<i64: 1, 256>}, {pipeline_mode = #tpu.pipeline_mode<synchronous>, transform_indices = @transform_10, window_bounds = array<i64: 256, 128>}, {pipeline_mode = #tpu.pipeline_mode<synchronous>, transform_indices = @transform_11, window_bounds = array<i64: 1, 128>}, {pipeline_mode = #tpu.pipeline_mode<synchronous>, transform_indices = @transform_12, window_bounds = array<i64: 1, 128>}, {transform_indices = @transform_13, window_bounds = array<i64: 3>}, {transform_indices = @transform_14, window_bounds = array<i64: 16, 128>}]} {
    %c0_i32 = arith.constant 0 : i32
    %0 = arith.cmpi eq, %arg1, %c0_i32 : i32
    %1 = arith.extui %0 : i1 to i32
    %c0_i32_0 = arith.constant 0 : i32
    %2 = arith.cmpi ne, %1, %c0_i32_0 : i32
    scf.if %2 {
      %cst_9 = arith.constant 0.000000e+00 : f32
      %14 = vector.broadcast %cst_9 : f32 to vector<16x896xf32>
      %c0_10 = arith.constant 0 : index
      %c0_11 = arith.constant 0 : index
      %15 = vector.load %arg17[%c0_10, %c0_11] : memref<16x896xf32, #tpu.memory_space<vmem>>, vector<16x896xf32>
      tpu.vector_store %arg17[%c0_10, %c0_11], %14 {strides = array<i32>} : memref<16x896xf32, #tpu.memory_space<vmem>>, vector<16x896xf32>,
    } else {
    }
    %c0 = arith.constant 0 : index
    %c0_1 = arith.constant 0 : index
    %3 = vector.load %arg2[%c0, %c0_1] : memref<16x1024xf32, #tpu.memory_space<vmem>>, vector<16x1024xf32>
    %4 = arith.truncf %3 : vector<16x1024xf32> to vector<16x1024xbf16>
    %c0_2 = arith.constant 0 : index
    %c0_3 = arith.constant 0 : index
    %5 = vector.load %arg17[%c0_2, %c0_3] : memref<16x896xf32, #tpu.memory_space<vmem>>, vector<16x896xf32>
    %c0_4 = arith.constant 0 : index
    %c0_5 = arith.constant 0 : index
    %6 = vector.load %arg3[%c0_4, %c0_5] : memref<1024x896xi8, #tpu.memory_space<vmem>>, vector<1024x896xi8>
    %7 = arith.sitofp %6 : vector<1024x896xi8> to vector<1024x896xbf16>
    %cst = arith.constant dense<0.000000e+00> : vector<16x896xf32>
    %8 = tpu.matmul %4, %7, %cst {dimension_numbers = #tpu.dot_dimension_numbers<[1], [0], [0], [1], [0, 0, 1, 1], [], []>} : vector<16x1024xbf16>, vector<1024x896xbf16>, vector<16x896xf32> -> vector<16x896xf32>
    %9 = arith.addf %5, %8 : vector<16x896xf32>
    %c0_6 = arith.constant 0 : index
    %c0_7 = arith.constant 0 : index
    %10 = vector.load %arg17[%c0_6, %c0_7] : memref<16x896xf32, #tpu.memory_space<vmem>>, vector<16x896xf32>
    tpu.vector_store %arg17[%c0_6, %c0_7], %9 {strides = array<i32>} : memref<16x896xf32, #tpu.memory_space<vmem>>, vector<16x896xf32>,
    %c1_i32 = arith.constant 1 : i32
    %11 = arith.cmpi eq, %arg1, %c1_i32 : i32
    %12 = arith.extui %11 : i1 to i32
    %c0_i32_8 = arith.constant 0 : i32
    %13 = arith.cmpi ne, %12, %c0_i32_8 : i32
    scf.if %13 {
      %c0_9 = arith.constant 0 : index
      %c0_10 = arith.constant 0 : index
      %14 = vector.load %arg17[%c0_9, %c0_10] : memref<16x896xf32, #tpu.memory_space<vmem>>, vector<16x896xf32>
      %c0_11 = arith.constant 0 : index
      %c0_12 = arith.constant 0 : index
      %15 = vector.load %arg4[%c0_11, %c0_12] : memref<1x896xf32, #tpu.memory_space<vmem>>, vector<1x896xf32>
      %16 = vector.broadcast %15 : vector<1x896xf32> to vector<16x896xf32>
      %17 = arith.mulf %14, %16 : vector<16x896xf32>
      %c0_13 = arith.constant 0 : index
      %c0_14 = arith.constant 0 : index
      %18 = vector.load %arg5[%c0_13, %c0_14] : memref<1x896xf32, #tpu.memory_space<vmem>>, vector<1x896xf32>
      %19 = vector.broadcast %18 : vector<1x896xf32> to vector<16x896xf32>
      %20 = arith.addf %17, %19 : vector<16x896xf32>
      %c0_15 = arith.constant 0 : index
      %21 = memref.load %arg15[%c0_15] : memref<3xf32, #tpu.memory_space<smem>>
      %cst_16 = arith.constant 0.000000e+00 : f32
      %22 = vector.broadcast %cst_16 : f32 to vector<16x896xf32>
      %23 = arith.cmpf ogt, %20, %22 : vector<16x896xf32>
      %24 = vector.broadcast %21 : f32 to vector<16x896xf32>
      %25 = arith.mulf %24, %20 : vector<16x896xf32>
      %26 = arith.select %23, %20, %25 : vector<16x896xi1>, vector<16x896xf32>
      %27 = arith.truncf %26 : vector<16x896xf32> to vector<16x896xbf16>
      %c0_17 = arith.constant 0 : index
      %c0_18 = arith.constant 0 : index
      %28 = vector.load %arg6[%c0_17, %c0_18] : memref<896x512xi8, #tpu.memory_space<vmem>>, vector<896x512xi8>
      %29 = arith.sitofp %28 : vector<896x512xi8> to vector<896x512xbf16>
      %cst_19 = arith.constant dense<0.000000e+00> : vector<16x512xf32>
      %30 = tpu.matmul %27, %29, %cst_19 {dimension_numbers = #tpu.dot_dimension_numbers<[1], [0], [0], [1], [0, 0, 1, 1], [], []>} : vector<16x896xbf16>, vector<896x512xbf16>, vector<16x512xf32> -> vector<16x512xf32>
      %c0_20 = arith.constant 0 : index
      %c0_21 = arith.constant 0 : index
      %31 = vector.load %arg7[%c0_20, %c0_21] : memref<1x512xf32, #tpu.memory_space<vmem>>, vector<1x512xf32>
      %32 = vector.broadcast %31 : vector<1x512xf32> to vector<16x512xf32>
      %33 = arith.mulf %30, %32 : vector<16x512xf32>
      %c0_22 = arith.constant 0 : index
      %c0_23 = arith.constant 0 : index
      %34 = vector.load %arg8[%c0_22, %c0_23] : memref<1x512xf32, #tpu.memory_space<vmem>>, vector<1x512xf32>
      %35 = vector.broadcast %34 : vector<1x512xf32> to vector<16x512xf32>
      %36 = arith.addf %33, %35 : vector<16x512xf32>
      %c1 = arith.constant 1 : index
      %37 = memref.load %arg15[%c1] : memref<3xf32, #tpu.memory_space<smem>>
      %cst_24 = arith.constant 0.000000e+00 : f32
      %38 = vector.broadcast %cst_24 : f32 to vector<16x512xf32>
      %39 = arith.cmpf ogt, %36, %38 : vector<16x512xf32>
      %40 = vector.broadcast %37 : f32 to vector<16x512xf32>
      %41 = arith.mulf %40, %36 : vector<16x512xf32>
      %42 = arith.select %39, %36, %41 : vector<16x512xi1>, vector<16x512xf32>
      %43 = arith.truncf %42 : vector<16x512xf32> to vector<16x512xbf16>
      %c0_25 = arith.constant 0 : index
      %c0_26 = arith.constant 0 : index
      %44 = vector.load %arg9[%c0_25, %c0_26] : memref<512x256xi8, #tpu.memory_space<vmem>>, vector<512x256xi8>
      %45 = arith.sitofp %44 : vector<512x256xi8> to vector<512x256xbf16>
      %cst_27 = arith.constant dense<0.000000e+00> : vector<16x256xf32>
      %46 = tpu.matmul %43, %45, %cst_27 {dimension_numbers = #tpu.dot_dimension_numbers<[1], [0], [0], [1], [0, 0, 1, 1], [], []>} : vector<16x512xbf16>, vector<512x256xbf16>, vector<16x256xf32> -> vector<16x256xf32>
      %c0_28 = arith.constant 0 : index
      %c0_29 = arith.constant 0 : index
      %47 = vector.load %arg10[%c0_28, %c0_29] : memref<1x256xf32, #tpu.memory_space<vmem>>, vector<1x256xf32>
      %48 = vector.broadcast %47 : vector<1x256xf32> to vector<16x256xf32>
      %49 = arith.mulf %46, %48 : vector<16x256xf32>
      %c0_30 = arith.constant 0 : index
      %c0_31 = arith.constant 0 : index
      %50 = vector.load %arg11[%c0_30, %c0_31] : memref<1x256xf32, #tpu.memory_space<vmem>>, vector<1x256xf32>
      %51 = vector.broadcast %50 : vector<1x256xf32> to vector<16x256xf32>
      %52 = arith.addf %49, %51 : vector<16x256xf32>
      %c2 = arith.constant 2 : index
      %53 = memref.load %arg15[%c2] : memref<3xf32, #tpu.memory_space<smem>>
      %cst_32 = arith.constant 0.000000e+00 : f32
      %54 = vector.broadcast %cst_32 : f32 to vector<16x256xf32>
      %55 = arith.cmpf ogt, %52, %54 : vector<16x256xf32>
      %56 = vector.broadcast %53 : f32 to vector<16x256xf32>
      %57 = arith.mulf %56, %52 : vector<16x256xf32>
      %58 = arith.select %55, %52, %57 : vector<16x256xi1>, vector<16x256xf32>
      %59 = arith.truncf %58 : vector<16x256xf32> to vector<16x256xbf16>
      %c0_33 = arith.constant 0 : index
      %c0_34 = arith.constant 0 : index
      %60 = vector.load %arg12[%c0_33, %c0_34] : memref<256x128xi8, #tpu.memory_space<vmem>>, vector<256x128xi8>
      %61 = arith.sitofp %60 : vector<256x128xi8> to vector<256x128xbf16>
      %cst_35 = arith.constant dense<0.000000e+00> : vector<16x128xf32>
      %62 = tpu.matmul %59, %61, %cst_35 {dimension_numbers = #tpu.dot_dimension_numbers<[1], [0], [0], [1], [0, 0, 1, 1], [], []>} : vector<16x256xbf16>, vector<256x128xbf16>, vector<16x128xf32> -> vector<16x128xf32>
      %c0_36 = arith.constant 0 : index
      %c0_37 = arith.constant 0 : index
      %63 = vector.load %arg13[%c0_36, %c0_37] : memref<1x128xf32, #tpu.memory_space<vmem>>, vector<1x128xf32>
      %64 = vector.broadcast %63 : vector<1x128xf32> to vector<16x128xf32>
      %65 = arith.mulf %62, %64 : vector<16x128xf32>
      %c0_38 = arith.constant 0 : index
      %c0_39 = arith.constant 0 : index
      %66 = vector.load %arg14[%c0_38, %c0_39] : memref<1x128xf32, #tpu.memory_space<vmem>>, vector<1x128xf32>
      %67 = vector.broadcast %66 : vector<1x128xf32> to vector<16x128xf32>
      %68 = arith.addf %65, %67 : vector<16x128xf32>
      %69 = arith.truncf %68 : vector<16x128xf32> to vector<16x128xbf16>
      %c0_40 = arith.constant 0 : index
      %c0_41 = arith.constant 0 : index
      %70 = vector.load %arg16[%c0_40, %c0_41] : memref<16x128xbf16, #tpu.memory_space<vmem>>, vector<16x128xbf16>
      tpu.vector_store %arg16[%c0_40, %c0_41], %69 {strides = array<i32>} : memref<16x128xbf16, #tpu.memory_space<vmem>>, vector<16x128xbf16>,
    } else {
    }
    return
  }
  func.func @transform_0(%arg0: i32, %arg1: i32) -> (i32, i32) {
    %c0_i32 = arith.constant 0 : i32
    return %arg0, %arg1 : i32, i32
  }
  func.func @transform_1(%arg0: i32, %arg1: i32) -> (i32, i32) {
    %c0_i32 = arith.constant 0 : i32
    %c0_i32_0 = arith.constant 0 : i32
    return %arg1, %c0_i32 : i32, i32
  }
  func.func @transform_2(%arg0: i32, %arg1: i32) -> (i32, i32) {
    %c0_i32 = arith.constant 0 : i32
    %c0_i32_0 = arith.constant 0 : i32
    %c0_i32_1 = arith.constant 0 : i32
    return %c0_i32, %c0_i32_0 : i32, i32
  }
  func.func @transform_3(%arg0: i32, %arg1: i32) -> (i32, i32) {
    %c0_i32 = arith.constant 0 : i32
    %c0_i32_0 = arith.constant 0 : i32
    %c0_i32_1 = arith.constant 0 : i32
    return %c0_i32, %c0_i32_0 : i32, i32
  }
  func.func @transform_4(%arg0: i32, %arg1: i32) -> (i32, i32) {
    %c0_i32 = arith.constant 0 : i32
    %c0_i32_0 = arith.constant 0 : i32
    %c0_i32_1 = arith.constant 0 : i32
    return %c0_i32, %c0_i32_0 : i32, i32
  }
  func.func @transform_5(%arg0: i32, %arg1: i32) -> (i32, i32) {
    %c0_i32 = arith.constant 0 : i32
    %c0_i32_0 = arith.constant 0 : i32
    %c0_i32_1 = arith.constant 0 : i32
    return %c0_i32, %c0_i32_0 : i32, i32
  }
  func.func @transform_6(%arg0: i32, %arg1: i32) -> (i32, i32) {
    %c0_i32 = arith.constant 0 : i32
    %c0_i32_0 = arith.constant 0 : i32
    %c0_i32_1 = arith.constant 0 : i32
    return %c0_i32, %c0_i32_0 : i32, i32
  }
  func.func @transform_7(%arg0: i32, %arg1: i32) -> (i32, i32) {
    %c0_i32 = arith.constant 0 : i32
    %c0_i32_0 = arith.constant 0 : i32
    %c0_i32_1 = arith.constant 0 : i32
    return %c0_i32, %c0_i32_0 : i32, i32
  }
  func.func @transform_8(%arg0: i32, %arg1: i32) -> (i32, i32) {
    %c0_i32 = arith.constant 0 : i32
    %c0_i32_0 = arith.constant 0 : i32
    %c0_i32_1 = arith.constant 0 : i32
    return %c0_i32, %c0_i32_0 : i32, i32
  }
  func.func @transform_9(%arg0: i32, %arg1: i32) -> (i32, i32) {
    %c0_i32 = arith.constant 0 : i32
    %c0_i32_0 = arith.constant 0 : i32
    %c0_i32_1 = arith.constant 0 : i32
    return %c0_i32, %c0_i32_0 : i32, i32
  }
  func.func @transform_10(%arg0: i32, %arg1: i32) -> (i32, i32) {
    %c0_i32 = arith.constant 0 : i32
    %c0_i32_0 = arith.constant 0 : i32
    %c0_i32_1 = arith.constant 0 : i32
    return %c0_i32, %c0_i32_0 : i32, i32
  }
  func.func @transform_11(%arg0: i32, %arg1: i32) -> (i32, i32) {
    %c0_i32 = arith.constant 0 : i32
    %c0_i32_0 = arith.constant 0 : i32
    %c0_i32_1 = arith.constant 0 : i32
    return %c0_i32, %c0_i32_0 : i32, i32
  }
  func.func @transform_12(%arg0: i32, %arg1: i32) -> (i32, i32) {
    %c0_i32 = arith.constant 0 : i32
    %c0_i32_0 = arith.constant 0 : i32
    %c0_i32_1 = arith.constant 0 : i32
    return %c0_i32, %c0_i32_0 : i32, i32
  }
  func.func @transform_13(%arg0: i32, %arg1: i32) -> i32 {
    %c0_i32 = arith.constant 0 : i32
    %c0_i32_0 = arith.constant 0 : i32
    return %c0_i32 : i32
  }
  func.func @transform_14(%arg0: i32, %arg1: i32) -> (i32, i32) {
    %c0_i32 = arith.constant 0 : i32
    %c0_i32_0 = arith.constant 0 : i32
    return %arg0, %c0_i32 : i32, i32
  }
}

</mosaic_0001>

<llo_original>
// kernel: tpu_custom_call.1
$region0: #{tpu_custom_call.1}
  #allocation0 [shape = 'u32[]', space=smem, size = 0x4, offset = 0x4, fixed_abs, tag = 'smem constant byte address 0x4 - core index']
  #allocation1 [shape = 'u32[144,128]{1,0:T(1,128)}', space=vmem, size = 0x12000, scoped, tag = 'internal scratch']
  #allocation2 [shape = 'f32[16,896]{1,0:T(8,128)}', space=vmem, size = 0xe000, scoped, tag = 'scratch operand']
  %s0 = inlined_call_operand.hbm [shape: f32[16,2048], index: 0, kind: input, shape index: {}]
  %s1 = inlined_call_operand.hbm [shape: s8[2048,896], index: 1, kind: input, shape index: {}]
  %s2 = inlined_call_operand.hbm [shape: f32[1,896], index: 2, kind: input, shape index: {}]
  %s3 = inlined_call_operand.hbm [shape: f32[1,896], index: 3, kind: input, shape index: {}]
  %s4 = inlined_call_operand.hbm [shape: s8[896,512], index: 4, kind: input, shape index: {}]
  %s5 = inlined_call_operand.hbm [shape: f32[1,512], index: 5, kind: input, shape index: {}]
  %s6 = inlined_call_operand.hbm [shape: f32[1,512], index: 6, kind: input, shape index: {}]
  %s7 = inlined_call_operand.hbm [shape: s8[512,256], index: 7, kind: input, shape index: {}]
  %s8 = inlined_call_operand.hbm [shape: f32[1,256], index: 8, kind: input, shape index: {}]
  %s9 = inlined_call_operand.hbm [shape: f32[1,256], index: 9, kind: input, shape index: {}]
  %s10 = inlined_call_operand.hbm [shape: s8[256,128], index: 10, kind: input, shape index: {}]
  %s11 = inlined_call_operand.hbm [shape: f32[1,128], index: 11, kind: input, shape index: {}]
  %s12 = inlined_call_operand.hbm [shape: f32[1,128], index: 12, kind: input, shape index: {}]
  %s13 = inlined_call_operand.hbm [shape: f32[3], index: 13, kind: input, shape index: {}]
  %s14 = inlined_call_operand.hbm [shape: bf16[16,128], index: 14, kind: output, shape index: {}]
  %s15 = sld [smem:[#allocation0]]
  $region153: #{tpu_custom_call.1} parent=0
    _
  %s17 = ssub.s32 1, %s15
  %s18 = scalar_select 0, %s17, %s15
  $region1: #{tpu_custom_call.1} parent=0
    #allocation3 [shape = 'u8[131072]{0}', space=vmem, size = 0x20000, scoped, tag = 'input window, operand 0']
    #allocation4 [shape = 's32[2]{0}', space=sflag, size = 0x8, scoped, tag = 'scoped memory for tpu_custom_call.1']
    #allocation5 [shape = 's32[2]{0}', space=sflag, size = 0x8, scoped, tag = 'scoped memory for tpu_custom_call.1']
    #allocation6 [shape = 's32[2]{0}', space=sflag, size = 0x8, scoped, tag = 'scoped memory for tpu_custom_call.1']
    #allocation7 [shape = 'u8[1835008]{0}', space=vmem, size = 0x1c0000, scoped, tag = 'input window, operand 1']
    #allocation8 [shape = 's32[2]{0}', space=sflag, size = 0x8, scoped, tag = 'scoped memory for tpu_custom_call.1']
    #allocation9 [shape = 'u8[3584]{0}', space=vmem, size = 0x1000, scoped, tag = 'input window, operand 2, single buffered']
    #allocation10 [shape = 'u8[3584]{0}', space=vmem, size = 0x1000, scoped, tag = 'input window, operand 3, single buffered']
    #allocation11 [shape = 's32[1]{0}', space=sflag, size = 0x4, scoped, tag = 'scoped memory for tpu_custom_call.1']
    #allocation12 [shape = 'u8[458752]{0}', space=vmem, size = 0x70000, scoped, tag = 'input window, operand 4, single buffered']
    #allocation13 [shape = 'u8[2048]{0}', space=vmem, size = 0x800, scoped, tag = 'input window, operand 5, single buffered']
    #allocation14 [shape = 's32[1]{0}', space=sflag, size = 0x4, scoped, tag = 'scoped memory for tpu_custom_call.1']
    #allocation15 [shape = 'u8[2048]{0}', space=vmem, size = 0x800, scoped, tag = 'input window, operand 6, single buffered']
    #allocation16 [shape = 'u8[131072]{0}', space=vmem, size = 0x20000, scoped, tag = 'input window, operand 7, single buffered']
    #allocation17 [shape = 's32[1]{0}', space=sflag, size = 0x4, scoped, tag = 'scoped memory for tpu_custom_call.1']
    #allocation18 [shape = 'u8[1024]{0}', space=vmem, size = 0x400, scoped, tag = 'input window, operand 8, single buffered']
    #allocation19 [shape = 'u8[1024]{0}', space=vmem, size = 0x400, scoped, tag = 'input window, operand 9, single buffered']
    #allocation20 [shape = 's32[1]{0}', space=sflag, size = 0x4, scoped, tag = 'scoped memory for tpu_custom_call.1']
    #allocation21 [shape = 'u8[32768]{0}', space=vmem, size = 0x8000, scoped, tag = 'input window, operand 10, single buffered']
    #allocation22 [shape = 'u8[512]{0}', space=vmem, size = 0x400, scoped, tag = 'input window, operand 11, single buffered']
    #allocation23 [shape = 's32[1]{0}', space=sflag, size = 0x4, scoped, tag = 'scoped memory for tpu_custom_call.1']
    #allocation24 [shape = 'u8[512]{0}', space=vmem, size = 0x400, scoped, tag = 'input window, operand 12, single buffered']
    #allocation25 [shape = 'u8[512]{0}', space=smem, size = 0x200, scoped, tag = 'input window, operand 13, single buffered']
    #allocation26 [shape = 'u8[4096]{0}', space=vmem, size = 0x1000, scoped, tag = 'output window, operand 0, single buffered']
    %19 = vsyncpa [#allocation4], 0
    %s20 = scalar_lea.sflag [#allocation4], 1
    %21 = vsyncpa %s20, 0
    %22 = vsyncpa [#allocation8], 0
    %s23 = scalar_lea.sflag [#allocation8], 1
    %24 = vsyncpa %s23, 0
    %25 = vsyncpa [#allocation11], 0
    %26 = vsyncpa [#allocation14], 0
    %27 = vsyncpa [#allocation17], 0
    %28 = vsyncpa [#allocation20], 0
    %29 = vsyncpa [#allocation23], 0
    %30 = vsyncpa [#allocation6], 0
    %31 = vsyncpa [#allocation5], 0
    loop: start=0, step=1, limit=4
    $region2: #{tpu_custom_call.1} parent=1 // loop_pre_header
      _
    $region3: #{tpu_custom_call.1} parent=1 // loop_header
      %s33 = sphi 0, %s37
      %p34 = scmp.ge.s32.totalorder %s33, 4
      %s40 = sphi 0, %s52
      %s41 = sphi 0, %s48
      %s42 = sphi 0, %s40
      %s43 = sphi 0, %s41
      %s44 = sphi 0, %s42
      %s45 = sphi 0, %s43
      %s57 = sphi 0, %s59
      %s60 = sphi 0, %s57
      %s61 = sphi 0, %s60
      %s77 = sphi 0, %s61
      %s83 = sphi 0, %s85
      %s86 = sphi 0, %s83
      %s87 = sphi 0, %s86
      %s103 = sphi 0, %s87
      %s107 = sphi 0, %s107
      %s109 = sphi 0, %s107
      %s110 = sphi 0, %s109
      %s124 = sphi 0, %s110
      %s128 = sphi 0, %s128
      %s130 = sphi 0, %s128
      %s131 = sphi 0, %s130
      %s145 = sphi 0, %s131
      %s149 = sphi 0, %s149
      %s151 = sphi 0, %s149
      %s152 = sphi 0, %s151
      %s166 = sphi 0, %s152
      %s170 = sphi 0, %s170
      %s172 = sphi 0, %s170
      %s173 = sphi 0, %s172
      %s187 = sphi 0, %s173
      %s191 = sphi 0, %s191
      %s193 = sphi 0, %s191
      %s194 = sphi 0, %s193
      %s208 = sphi 0, %s194
      %s212 = sphi 0, %s212
      %s214 = sphi 0, %s212
      %s215 = sphi 0, %s214
      %s229 = sphi 0, %s215
      %s233 = sphi 0, %s233
      %s235 = sphi 0, %s233
      %s236 = sphi 0, %s235
      %s250 = sphi 0, %s236
      %s254 = sphi 0, %s254
      %s256 = sphi 0, %s254
      %s257 = sphi 0, %s256
      %s271 = sphi 0, %s257
      %s275 = sphi 0, %s275
      %s277 = sphi 0, %s275
      %s278 = sphi 0, %s277
      %s292 = sphi 0, %s278
      %s296 = sphi 0, %s296
      %s298 = sphi 0, %s296
      %s299 = sphi 0, %s298
      %s313 = sphi 0, %s299
      %s317 = sphi 0, %s317
      %s319 = sphi 0, %s317
      %s320 = sphi 0, %s319
      %s334 = sphi 0, %s320
      %s338 = sphi 0, %s338
      %s340 = sphi 0, %s338
      %s341 = sphi 0, %s340
      %s355 = sphi 0, %s341
      %s361 = sphi 0, %s363
      %s364 = sphi 0, %s361
      %s365 = sphi 0, %s364
      %s381 = sphi 0, %s365
    $region4: #{tpu_custom_call.1} parent=1 // loop_header_branch
      %36 = sbr.rel (%p34) target = $region8
    $region5: #{tpu_custom_call.1} parent=1 // loop_body
      %s38 = ssub.s32 %s33, 1
      %s39 = ssub.s32 %s33, 2
      %s46 = sadd.s32 1, %s41
      %p47 = scmp.ge.s32.totalorder %s46, 2
      %s48 = scalar_select %p47, 0, %s46
      %s49 = sadd.s32 1, %s40
      %s50 = scalar_select %p47, %s49, %s40
      %p51 = scmp.ge.s32.totalorder %s50, 1
      %s52 = scalar_select %p51, 0, %s50
      %s53 = ssub.s32 %s40, %s52
      %s54 = ssub.s32 %s41, %s48
      %s55 = sor.u32 %s53, %s54
      %p56 = scmp.eq.s32.totalorder %s55, 0
      %s58 = sadd.s32 %s57, 1
      %s59 = scalar_select %p56, %s57, %s58
      %p62 = pneg %p56
      %p63 = scmp.eq.s32.totalorder %s33, 1
      %p64 = por %p62, %p63
      %p65 = scmp.ne.s32.totalorder %s57, %s60
      %p66 = scmp.eq.s32.totalorder %s33, 0
      %p67 = por %p65, %p66
      %p68 = scmp.ne.s32.totalorder %s57, %s60
      %p69 = scmp.eq.s32.totalorder %s38, 1
      %p70 = por %p68, %p69
      %p71 = scmp.ne.s32.totalorder %s60, %s61
      %p72 = scmp.eq.s32.totalorder %s38, 0
      %p73 = por %p71, %p72
      %p74 = scmp.ne.s32.totalorder %s60, %s61
      %p75 = scmp.eq.s32.totalorder %s39, 1
      %p76 = por %p74, %p75
      %p78 = scmp.ne.s32.totalorder %s61, %s77
      %p79 = scmp.eq.s32.totalorder %s39, 0
      %p80 = por %p78, %p79
      %s81 = ssub.s32 %s41, %s48
      %p82 = scmp.eq.s32.totalorder %s81, 0
      %s84 = sadd.s32 %s83, 1
      %s85 = scalar_select %p82, %s83, %s84
      %p88 = pneg %p82
      %p89 = scmp.eq.s32.totalorder %s33, 1
      %p90 = por %p88, %p89
      %p91 = scmp.ne.s32.totalorder %s83, %s86
      %p92 = scmp.eq.s32.totalorder %s33, 0
      %p93 = por %p91, %p92
      %p94 = scmp.ne.s32.totalorder %s83, %s86
      %p95 = scmp.eq.s32.totalorder %s38, 1
      %p96 = por %p94, %p95
      %p97 = scmp.ne.s32.totalorder %s86, %s87
      %p98 = scmp.eq.s32.totalorder %s38, 0
      %p99 = por %p97, %p98
      %p100 = scmp.ne.s32.totalorder %s86, %s87
      %p101 = scmp.eq.s32.totalorder %s39, 1
      %p102 = por %p100, %p101
      %p104 = scmp.ne.s32.totalorder %s87, %s103
      %p105 = scmp.eq.s32.totalorder %s39, 0
      %p106 = por %p104, %p105
      %s108 = sadd.s32 %s107, 1
      %p111 = scmp.eq.s32.totalorder %s33, 1
      %p112 = scmp.ne.s32.totalorder %s107, %s109
      %p113 = scmp.eq.s32.totalorder %s33, 0
      %p114 = por %p112, %p113
      %p115 = scmp.ne.s32.totalorder %s107, %s109
      %p116 = scmp.eq.s32.totalorder %s38, 1
      %p117 = por %p115, %p116
      %p118 = scmp.ne.s32.totalorder %s109, %s110
      %p119 = scmp.eq.s32.totalorder %s38, 0
      %p120 = por %p118, %p119
      %p121 = scmp.ne.s32.totalorder %s109, %s110
      %p122 = scmp.eq.s32.totalorder %s39, 1
      %p123 = por %p121, %p122
      %p125 = scmp.ne.s32.totalorder %s110, %s124
      %p126 = scmp.eq.s32.totalorder %s39, 0
      %p127 = por %p125, %p126
      %s129 = sadd.s32 %s128, 1
      %p132 = scmp.eq.s32.totalorder %s33, 1
      %p133 = scmp.ne.s32.totalorder %s128, %s130
      %p134 = scmp.eq.s32.totalorder %s33, 0
      %p135 = por %p133, %p134
      %p136 = scmp.ne.s32.totalorder %s128, %s130
      %p137 = scmp.eq.s32.totalorder %s38, 1
      %p138 = por %p136, %p137
      %p139 = scmp.ne.s32.totalorder %s130, %s131
      %p140 = scmp.eq.s32.totalorder %s38, 0
      %p141 = por %p139, %p140
      %p142 = scmp.ne.s32.totalorder %s130, %s131
      %p143 = scmp.eq.s32.totalorder %s39, 1
      %p144 = por %p142, %p143
      %p146 = scmp.ne.s32.totalorder %s131, %s145
      %p147 = scmp.eq.s32.totalorder %s39, 0
      %p148 = por %p146, %p147
      %s150 = sadd.s32 %s149, 1
      %p153 = scmp.eq.s32.totalorder %s33, 1
      %p154 = scmp.ne.s32.totalorder %s149, %s151
      %p155 = scmp.eq.s32.totalorder %s33, 0
      %p156 = por %p154, %p155
      %p157 = scmp.ne.s32.totalorder %s149, %s151
      %p158 = scmp.eq.s32.totalorder %s38, 1
      %p159 = por %p157, %p158
      %p160 = scmp.ne.s32.totalorder %s151, %s152
      %p161 = scmp.eq.s32.totalorder %s38, 0
      %p162 = por %p160, %p161
      %p163 = scmp.ne.s32.totalorder %s151, %s152
      %p164 = scmp.eq.s32.totalorder %s39, 1
      %p165 = por %p163, %p164
      %p167 = scmp.ne.s32.totalorder %s152, %s166
      %p168 = scmp.eq.s32.totalorder %s39, 0
      %p169 = por %p167, %p168
      %s171 = sadd.s32 %s170, 1
      %p174 = scmp.eq.s32.totalorder %s33, 1
      %p175 = scmp.ne.s32.totalorder %s170, %s172
      %p176 = scmp.eq.s32.totalorder %s33, 0
      %p177 = por %p175, %p176
      %p178 = scmp.ne.s32.totalorder %s170, %s172
      %p179 = scmp.eq.s32.totalorder %s38, 1
      %p180 = por %p178, %p179
      %p181 = scmp.ne.s32.totalorder %s172, %s173
      %p182 = scmp.eq.s32.totalorder %s38, 0
      %p183 = por %p181, %p182
      %p184 = scmp.ne.s32.totalorder %s172, %s173
      %p185 = scmp.eq.s32.totalorder %s39, 1
      %p186 = por %p184, %p185
      %p188 = scmp.ne.s32.totalorder %s173, %s187
      %p189 = scmp.eq.s32.totalorder %s39, 0
      %p190 = por %p188, %p189
      %s192 = sadd.s32 %s191, 1
      %p195 = scmp.eq.s32.totalorder %s33, 1
      %p196 = scmp.ne.s32.totalorder %s191, %s193
      %p197 = scmp.eq.s32.totalorder %s33, 0
      %p198 = por %p196, %p197
      %p199 = scmp.ne.s32.totalorder %s191, %s193
      %p200 = scmp.eq.s32.totalorder %s38, 1
      %p201 = por %p199, %p200
      %p202 = scmp.ne.s32.totalorder %s193, %s194
      %p203 = scmp.eq.s32.totalorder %s38, 0
      %p204 = por %p202, %p203
      %p205 = scmp.ne.s32.totalorder %s193, %s194
      %p206 = scmp.eq.s32.totalorder %s39, 1
      %p207 = por %p205, %p206
      %p209 = scmp.ne.s32.totalorder %s194, %s208
      %p210 = scmp.eq.s32.totalorder %s39, 0
      %p211 = por %p209, %p210
      %s213 = sadd.s32 %s212, 1
      %p216 = scmp.eq.s32.totalorder %s33, 1
      %p217 = scmp.ne.s32.totalorder %s212, %s214
      %p218 = scmp.eq.s32.totalorder %s33, 0
      %p219 = por %p217, %p218
      %p220 = scmp.ne.s32.totalorder %s212, %s214
      %p221 = scmp.eq.s32.totalorder %s38, 1
      %p222 = por %p220, %p221
      %p223 = scmp.ne.s32.totalorder %s214, %s215
      %p224 = scmp.eq.s32.totalorder %s38, 0
      %p225 = por %p223, %p224
      %p226 = scmp.ne.s32.totalorder %s214, %s215
      %p227 = scmp.eq.s32.totalorder %s39, 1
      %p228 = por %p226, %p227
      %p230 = scmp.ne.s32.totalorder %s215, %s229
      %p231 = scmp.eq.s32.totalorder %s39, 0
      %p232 = por %p230, %p231
      %s234 = sadd.s32 %s233, 1
      %p237 = scmp.eq.s32.totalorder %s33, 1
      %p238 = scmp.ne.s32.totalorder %s233, %s235
      %p239 = scmp.eq.s32.totalorder %s33, 0
      %p240 = por %p238, %p239
      %p241 = scmp.ne.s32.totalorder %s233, %s235
      %p242 = scmp.eq.s32.totalorder %s38, 1
      %p243 = por %p241, %p242
      %p244 = scmp.ne.s32.totalorder %s235, %s236
      %p245 = scmp.eq.s32.totalorder %s38, 0
      %p246 = por %p244, %p245
      %p247 = scmp.ne.s32.totalorder %s235, %s236
      %p248 = scmp.eq.s32.totalorder %s39, 1
      %p249 = por %p247, %p248
      %p251 = scmp.ne.s32.totalorder %s236, %s250
      %p252 = scmp.eq.s32.totalorder %s39, 0
      %p253 = por %p251, %p252
      %s255 = sadd.s32 %s254, 1
      %p258 = scmp.eq.s32.totalorder %s33, 1
      %p259 = scmp.ne.s32.totalorder %s254, %s256
      %p260 = scmp.eq.s32.totalorder %s33, 0
      %p261 = por %p259, %p260
      %p262 = scmp.ne.s32.totalorder %s254, %s256
      %p263 = scmp.eq.s32.totalorder %s38, 1
      %p264 = por %p262, %p263
      %p265 = scmp.ne.s32.totalorder %s256, %s257
      %p266 = scmp.eq.s32.totalorder %s38, 0
      %p267 = por %p265, %p266
      %p268 = scmp.ne.s32.totalorder %s256, %s257
      %p269 = scmp.eq.s32.totalorder %s39, 1
      %p270 = por %p268, %p269
      %p272 = scmp.ne.s32.totalorder %s257, %s271
      %p273 = scmp.eq.s32.totalorder %s39, 0
      %p274 = por %p272, %p273
      %s276 = sadd.s32 %s275, 1
      %p279 = scmp.eq.s32.totalorder %s33, 1
      %p280 = scmp.ne.s32.totalorder %s275, %s277
      %p281 = scmp.eq.s32.totalorder %s33, 0
      %p282 = por %p280, %p281
      %p283 = scmp.ne.s32.totalorder %s275, %s277
      %p284 = scmp.eq.s32.totalorder %s38, 1
      %p285 = por %p283, %p284
      %p286 = scmp.ne.s32.totalorder %s277, %s278
      %p287 = scmp.eq.s32.totalorder %s38, 0
      %p288 = por %p286, %p287
      %p289 = scmp.ne.s32.totalorder %s277, %s278
      %p290 = scmp.eq.s32.totalorder %s39, 1
      %p291 = por %p289, %p290
      %p293 = scmp.ne.s32.totalorder %s278, %s292
      %p294 = scmp.eq.s32.totalorder %s39, 0
      %p295 = por %p293, %p294
      %s297 = sadd.s32 %s296, 1
      %p300 = scmp.eq.s32.totalorder %s33, 1
      %p301 = scmp.ne.s32.totalorder %s296, %s298
      %p302 = scmp.eq.s32.totalorder %s33, 0
      %p303 = por %p301, %p302
      %p304 = scmp.ne.s32.totalorder %s296, %s298
      %p305 = scmp.eq.s32.totalorder %s38, 1
      %p306 = por %p304, %p305
      %p307 = scmp.ne.s32.totalorder %s298, %s299
      %p308 = scmp.eq.s32.totalorder %s38, 0
      %p309 = por %p307, %p308
      %p310 = scmp.ne.s32.totalorder %s298, %s299
      %p311 = scmp.eq.s32.totalorder %s39, 1
      %p312 = por %p310, %p311
      %p314 = scmp.ne.s32.totalorder %s299, %s313
      %p315 = scmp.eq.s32.totalorder %s39, 0
      %p316 = por %p314, %p315
      %s318 = sadd.s32 %s317, 1
      %p321 = scmp.eq.s32.totalorder %s33, 1
      %p322 = scmp.ne.s32.totalorder %s317, %s319
      %p323 = scmp.eq.s32.totalorder %s33, 0
      %p324 = por %p322, %p323
      %p325 = scmp.ne.s32.totalorder %s317, %s319
      %p326 = scmp.eq.s32.totalorder %s38, 1
      %p327 = por %p325, %p326
      %p328 = scmp.ne.s32.totalorder %s319, %s320
      %p329 = scmp.eq.s32.totalorder %s38, 0
      %p330 = por %p328, %p329
      %p331 = scmp.ne.s32.totalorder %s319, %s320
      %p332 = scmp.eq.s32.totalorder %s39, 1
      %p333 = por %p331, %p332
      %p335 = scmp.ne.s32.totalorder %s320, %s334
      %p336 = scmp.eq.s32.totalorder %s39, 0
      %p337 = por %p335, %p336
      %s339 = sadd.s32 %s338, 1
      %p342 = scmp.eq.s32.totalorder %s33, 1
      %p343 = scmp.ne.s32.totalorder %s338, %s340
      %p344 = scmp.eq.s32.totalorder %s33, 0
      %p345 = por %p343, %p344
      %p346 = scmp.ne.s32.totalorder %s338, %s340
      %p347 = scmp.eq.s32.totalorder %s38, 1
      %p348 = por %p346, %p347
      %p349 = scmp.ne.s32.totalorder %s340, %s341
      %p350 = scmp.eq.s32.totalorder %s38, 0
      %p351 = por %p349, %p350
      %p352 = scmp.ne.s32.totalorder %s340, %s341
      %p353 = scmp.eq.s32.totalorder %s39, 1
      %p354 = por %p352, %p353
      %p356 = scmp.ne.s32.totalorder %s341, %s355
      %p357 = scmp.eq.s32.totalorder %s39, 0
      %p358 = por %p356, %p357
      %s359 = ssub.s32 %s40, %s52
      %p360 = scmp.eq.s32.totalorder %s359, 0
      %s362 = sadd.s32 %s361, 1
      %s363 = scalar_select %p360, %s361, %s362
      %p366 = pneg %p360
      %p367 = scmp.eq.s32.totalorder %s33, 1
      %p368 = por %p366, %p367
      %p369 = scmp.ne.s32.totalorder %s361, %s364
      %p370 = scmp.eq.s32.totalorder %s33, 0
      %p371 = por %p369, %p370
      %p372 = scmp.ne.s32.totalorder %s361, %s364
      %p373 = scmp.eq.s32.totalorder %s38, 1
      %p374 = por %p372, %p373
      %p375 = scmp.ne.s32.totalorder %s364, %s365
      %p376 = scmp.eq.s32.totalorder %s38, 0
      %p377 = por %p375, %p376
      %p378 = scmp.ne.s32.totalorder %s364, %s365
      %p379 = scmp.eq.s32.totalorder %s39, 1
      %p380 = por %p378, %p379
      %p382 = scmp.ne.s32.totalorder %s365, %s381
      %p383 = scmp.eq.s32.totalorder %s39, 0
      %p384 = por %p382, %p383
      %p385 = scmp.le.s32.totalorder 1, %s33
      %p386 = scmp.lt.s32.totalorder %s33, 3
      %p387 = pnand %p385, %p386
      %p388 = pneg %p387
      // Predicated region
      $region9: #{tpu_custom_call.1} parent=5 // pred_check
        _
      $region10: #{tpu_custom_call.1} parent=5 // pred_check_branch
        %390 = sbr.rel (%p387) target = $region12
      $region11: #{tpu_custom_call.1} parent=5 // pred_region
        %s391 = ssub.s32 %s33, 1
        // Predicated region
        $region13: #{tpu_custom_call.1} parent=11 // pred_check
          %p392 = pneg %p120
        $region14: #{tpu_custom_call.1} parent=11 // pred_check_branch
          %394 = sbr.rel (%p392) target = $region16
        $region15: #{tpu_custom_call.1} parent=11 // pred_region
          %s396 = ssub.s32 112, 112
          %397 = vsyncadd [#allocation8], %s396
          %s399 = sshll.u32 [#allocation9], 4
          %s400 = int_to_ptr.vmem [resolvable:$true] %s399
          %402 = dma.hbm_to_vmem [thread:$0]  %s2, 112, %s400, [#allocation8]
        $region16: #{tpu_custom_call.1} parent=11 // pred_fallthru
          _
        // Predicated region
        $region17: #{tpu_custom_call.1} parent=11 // pred_check
          %p403 = pneg %p141
        $region18: #{tpu_custom_call.1} parent=11 // pred_check_branch
          %405 = sbr.rel (%p403) target = $region20
        $region19: #{tpu_custom_call.1} parent=11 // pred_region
          %s407 = ssub.s32 112, 112
          %408 = vsyncadd [#allocation11], %s407
          %s410 = sshll.u32 [#allocation10], 4
          %s411 = int_to_ptr.vmem [resolvable:$true] %s410
          %413 = dma.hbm_to_vmem [thread:$0]  %s3, 112, %s411, [#allocation11]
        $region20: #{tpu_custom_call.1} parent=11 // pred_fallthru
          _
        // Predicated region
        $region21: #{tpu_custom_call.1} parent=11 // pred_check
          %p414 = pneg %p162
        $region22: #{tpu_custom_call.1} parent=11 // pred_check_branch
          %416 = sbr.rel (%p414) target = $region24
        $region23: #{tpu_custom_call.1} parent=11 // pred_region
          %s418 = ssub.s32 14336, 14336
          %419 = vsyncadd [#allocation11], %s418
          %s420 = sshll.u32 [#allocation12], 4
          %s421 = int_to_ptr.vmem [resolvable:$true] %s420
          %426 = dma.hbm_to_vmem [thread:$0]  %s4, 14336, %s421, [#allocation11], 512, 512, 32
        $region24: #{tpu_custom_call.1} parent=11 // pred_fallthru
          _
        // Predicated region
        $region25: #{tpu_custom_call.1} parent=11 // pred_check
          %p427 = pneg %p183
        $region26: #{tpu_custom_call.1} parent=11 // pred_check_branch
          %429 = sbr.rel (%p427) target = $region28
        $region27: #{tpu_custom_call.1} parent=11 // pred_region
          %s431 = ssub.s32 64, 64
          %432 = vsyncadd [#allocation14], %s431
          %s434 = sshll.u32 [#allocation13], 4
          %s435 = int_to_ptr.vmem [resolvable:$true] %s434
          %437 = dma.hbm_to_vmem [thread:$0]  %s5, 64, %s435, [#allocation14]
        $region28: #{tpu_custom_call.1} parent=11 // pred_fallthru
          _
        // Predicated region
        $region29: #{tpu_custom_call.1} parent=11 // pred_check
          %p438 = pneg %p204
        $region30: #{tpu_custom_call.1} parent=11 // pred_check_branch
          %440 = sbr.rel (%p438) target = $region32
        $region31: #{tpu_custom_call.1} parent=11 // pred_region
          %s442 = ssub.s32 64, 64
          %443 = vsyncadd [#allocation14], %s442
          %s445 = sshll.u32 [#allocation15], 4
          %s446 = int_to_ptr.vmem [resolvable:$true] %s445
          %448 = dma.hbm_to_vmem [thread:$0]  %s6, 64, %s446, [#allocation14]
        $region32: #{tpu_custom_call.1} parent=11 // pred_fallthru
          _
        // Predicated region
        $region33: #{tpu_custom_call.1} parent=11 // pred_check
          %p449 = pneg %p225
        $region34: #{tpu_custom_call.1} parent=11 // pred_check_branch
          %451 = sbr.rel (%p449) target = $region36
        $region35: #{tpu_custom_call.1} parent=11 // pred_region
          %s453 = ssub.s32 4096, 4096
          %454 = vsyncadd [#allocation17], %s453
          %s455 = sshll.u32 [#allocation16], 4
          %s456 = int_to_ptr.vmem [resolvable:$true] %s455
          %461 = dma.hbm_to_vmem [thread:$0]  %s7, 4096, %s456, [#allocation17], 256, 256, 16
        $region36: #{tpu_custom_call.1} parent=11 // pred_fallthru
          _
        // Predicated region
        $region37: #{tpu_custom_call.1} parent=11 // pred_check
          %p462 = pneg %p246
        $region38: #{tpu_custom_call.1} parent=11 // pred_check_branch
          %464 = sbr.rel (%p462) target = $region40
        $region39: #{tpu_custom_call.1} parent=11 // pred_region
          %s466 = ssub.s32 32, 32
          %467 = vsyncadd [#allocation17], %s466
          %s469 = sshll.u32 [#allocation18], 4
          %s470 = int_to_ptr.vmem [resolvable:$true] %s469
          %472 = dma.hbm_to_vmem [thread:$0]  %s8, 32, %s470, [#allocation17]
        $region40: #{tpu_custom_call.1} parent=11 // pred_fallthru
          _
        // Predicated region
        $region41: #{tpu_custom_call.1} parent=11 // pred_check
          %p473 = pneg %p267
        $region42: #{tpu_custom_call.1} parent=11 // pred_check_branch
          %475 = sbr.rel (%p473) target = $region44
        $region43: #{tpu_custom_call.1} parent=11 // pred_region
          %s477 = ssub.s32 32, 32
          %478 = vsyncadd [#allocation20], %s477
          %s480 = sshll.u32 [#allocation19], 4
          %s481 = int_to_ptr.vmem [resolvable:$true] %s480
          %483 = dma.hbm_to_vmem [thread:$0]  %s9, 32, %s481, [#allocation20]
        $region44: #{tpu_custom_call.1} parent=11 // pred_fallthru
          _
        // Predicated region
        $region45: #{tpu_custom_call.1} parent=11 // pred_check
          %p484 = pneg %p288
        $region46: #{tpu_custom_call.1} parent=11 // pred_check_branch
          %486 = sbr.rel (%p484) target = $region48
        $region47: #{tpu_custom_call.1} parent=11 // pred_region
          %s488 = ssub.s32 1024, 1024
          %489 = vsyncadd [#allocation20], %s488
          %s490 = sshll.u32 [#allocation21], 4
          %s491 = int_to_ptr.vmem [resolvable:$true] %s490
          %496 = dma.hbm_to_vmem [thread:$0]  %s10, 1024, %s491, [#allocation20], 128, 128, 8
        $region48: #{tpu_custom_call.1} parent=11 // pred_fallthru
          _
        // Predicated region
        $region49: #{tpu_custom_call.1} parent=11 // pred_check
          %p497 = pneg %p309
        $region50: #{tpu_custom_call.1} parent=11 // pred_check_branch
          %499 = sbr.rel (%p497) target = $region52
        $region51: #{tpu_custom_call.1} parent=11 // pred_region
          %s501 = ssub.s32 16, 16
          %502 = vsyncadd [#allocation23], %s501
          %s504 = sshll.u32 [#allocation22], 4
          %s505 = int_to_ptr.vmem [resolvable:$true] %s504
          %507 = dma.hbm_to_vmem [thread:$0]  %s11, 16, %s505, [#allocation23]
        $region52: #{tpu_custom_call.1} parent=11 // pred_fallthru
          _
        // Predicated region
        $region53: #{tpu_custom_call.1} parent=11 // pred_check
          %p508 = pneg %p330
        $region54: #{tpu_custom_call.1} parent=11 // pred_check_branch
          %510 = sbr.rel (%p508) target = $region56
        $region55: #{tpu_custom_call.1} parent=11 // pred_region
          %s512 = ssub.s32 16, 16
          %513 = vsyncadd [#allocation23], %s512
          %s515 = sshll.u32 [#allocation24], 4
          %s516 = int_to_ptr.vmem [resolvable:$true] %s515
          %518 = dma.hbm_to_vmem [thread:$0]  %s12, 16, %s516, [#allocation23]
        $region56: #{tpu_custom_call.1} parent=11 // pred_fallthru
          _
        // Predicated region
        $region57: #{tpu_custom_call.1} parent=11 // pred_check
          %p519 = pneg %p351
        $region58: #{tpu_custom_call.1} parent=11 // pred_check_branch
          %521 = sbr.rel (%p519) target = $region60
        $region59: #{tpu_custom_call.1} parent=11 // pred_region
          %s523 = ssub.s32 16, 16
          %524 = vsyncadd [#allocation6], %s523
          %527 = dma.hbm_to_smem %s13, 16, [#allocation25], [#allocation6]
        $region60: #{tpu_custom_call.1} parent=11 // pred_fallthru
          _
      $region12: #{tpu_custom_call.1} parent=5 // pred_fallthru
        _
      %p528 = scmp.lt.s32.totalorder %s33, 2
      // Predicated region
      $region61: #{tpu_custom_call.1} parent=5 // pred_check
        %p529 = pneg %p528
      $region62: #{tpu_custom_call.1} parent=5 // pred_check_branch
        %531 = sbr.rel (%p529) target = $region64
      $region63: #{tpu_custom_call.1} parent=5 // pred_region
        // Predicated region
        $region65: #{tpu_custom_call.1} parent=63 // pred_check
          %p532 = pneg %p67
        $region66: #{tpu_custom_call.1} parent=63 // pred_check_branch
          %534 = sbr.rel (%p532) target = $region68
        $region67: #{tpu_custom_call.1} parent=63 // pred_region
          %s535 = sand.u32 %s57, 1
          %s536 = scalar_lea.sflag [#allocation4], %s535
          %s537 = sand.u32 %s57, 1
          %s538 = smul.addr %s537, 128
          %s539 = scalar_lea.vmem [#allocation3], %s538
          %s540 = smul.u32 2, %s40
          %s541 = smul.u32 8, %s41
          %s543 = ssub.s32 2048, 2048
          %544 = vsyncadd %s536, %s543
          %s545 = smul.addr %s540, 16
          %s546 = sadd.s32 %s541, %s545
          %s547 = smul.addr %s546, 128
          %s548 = scalar_lea.hbm %s0, %s547
          %s549 = sshll.u32 %s539, 4
          %s550 = int_to_ptr.vmem [resolvable:$true] %s549
          %555 = dma.hbm_to_vmem [thread:$0]  %s548, 2048, %s550, %s536, 2048, 1024, 64
        $region68: #{tpu_custom_call.1} parent=63 // pred_fallthru
          _
        // Predicated region
        $region69: #{tpu_custom_call.1} parent=63 // pred_check
          %p556 = pneg %p93
        $region70: #{tpu_custom_call.1} parent=63 // pred_check_branch
          %558 = sbr.rel (%p556) target = $region72
        $region71: #{tpu_custom_call.1} parent=63 // pred_region
          %s559 = sand.u32 %s33, 1
          %s560 = scalar_lea.sflag [#allocation8], %s559
          %s561 = sand.u32 %s83, 1
          %s562 = smul.addr %s561, 1792
          %s563 = scalar_lea.vmem [#allocation7], %s562
          %s564 = smul.u32 32, %s41
          %s566 = ssub.s32 28672, 28672
          %567 = vsyncadd %s560, %s566
          %s568 = smul.addr %s564, 7
          %s569 = smul.addr %s568, 128
          %s570 = scalar_lea.hbm %s1, %s569
          %s571 = sshll.u32 %s563, 4
          %s572 = int_to_ptr.vmem [resolvable:$true] %s571
          %577 = dma.hbm_to_vmem [thread:$0]  %s570, 28672, %s572, %s560, 896, 896, 56
        $region72: #{tpu_custom_call.1} parent=63 // pred_fallthru
          _
      $region64: #{tpu_custom_call.1} parent=5 // pred_fallthru
        _
      %p578 = scmp.le.s32.totalorder 1, %s33
      %p579 = scmp.lt.s32.totalorder %s33, 3
      %p580 = pnand %p578, %p579
      %p581 = pneg %p580
      // Predicated region
      $region73: #{tpu_custom_call.1} parent=5 // pred_check
        _
      $region74: #{tpu_custom_call.1} parent=5 // pred_check_branch
        %583 = sbr.rel (%p580) target = $region76
      $region75: #{tpu_custom_call.1} parent=5 // pred_region
        %s584 = ssub.s32 %s33, 1
        %s585 = sand.u32 %s60, 1
        %s586 = scalar_lea.sflag [#allocation4], %s585
        %s587 = sand.u32 %s60, 1
        %s588 = smul.addr %s587, 128
        %s589 = scalar_lea.vmem [#allocation3], %s588
        // Predicated region
        $region77: #{tpu_custom_call.1} parent=75 // pred_check
          %p590 = pneg %p73
        $region78: #{tpu_custom_call.1} parent=75 // pred_check_branch
          %592 = sbr.rel (%p590) target = $region80
        $region79: #{tpu_custom_call.1} parent=75 // pred_region
          %593 = dma.done %s586, 2048
        $region80: #{tpu_custom_call.1} parent=75 // pred_fallthru
          _
        %s594 = sand.u32 %s38, 1
        %s595 = scalar_lea.sflag [#allocation8], %s594
        %s596 = sand.u32 %s86, 1
        %s597 = smul.addr %s596, 1792
        %s598 = scalar_lea.vmem [#allocation7], %s597
        // Predicated region
        $region81: #{tpu_custom_call.1} parent=75 // pred_check
          %p599 = pneg %p99
        $region82: #{tpu_custom_call.1} parent=75 // pred_check_branch
          %601 = sbr.rel (%p599) target = $region84
        $region83: #{tpu_custom_call.1} parent=75 // pred_region
          %602 = dma.done %s595, 28672
        $region84: #{tpu_custom_call.1} parent=75 // pred_fallthru
          _
        // Predicated region
        $region85: #{tpu_custom_call.1} parent=75 // pred_check
          %p603 = pneg %p120
        $region86: #{tpu_custom_call.1} parent=75 // pred_check_branch
          %605 = sbr.rel (%p603) target = $region88
        $region87: #{tpu_custom_call.1} parent=75 // pred_region
          %606 = dma.done [#allocation8], 112
        $region88: #{tpu_custom_call.1} parent=75 // pred_fallthru
          _
        // Predicated region
        $region89: #{tpu_custom_call.1} parent=75 // pred_check
          %p607 = pneg %p141
        $region90: #{tpu_custom_call.1} parent=75 // pred_check_branch
          %609 = sbr.rel (%p607) target = $region92
        $region91: #{tpu_custom_call.1} parent=75 // pred_region
          %610 = dma.done [#allocation11], 112
        $region92: #{tpu_custom_call.1} parent=75 // pred_fallthru
          _
        // Predicated region
        $region93: #{tpu_custom_call.1} parent=75 // pred_check
          %p611 = pneg %p162
        $region94: #{tpu_custom_call.1} parent=75 // pred_check_branch
          %613 = sbr.rel (%p611) target = $region96
        $region95: #{tpu_custom_call.1} parent=75 // pred_region
          %614 = dma.done [#allocation11], 14336
        $region96: #{tpu_custom_call.1} parent=75 // pred_fallthru
          _
        // Predicated region
        $region97: #{tpu_custom_call.1} parent=75 // pred_check
          %p615 = pneg %p183
        $region98: #{tpu_custom_call.1} parent=75 // pred_check_branch
          %617 = sbr.rel (%p615) target = $region100
        $region99: #{tpu_custom_call.1} parent=75 // pred_region
          %618 = dma.done [#allocation14], 64
        $region100: #{tpu_custom_call.1} parent=75 // pred_fallthru
          _
        // Predicated region
        $region101: #{tpu_custom_call.1} parent=75 // pred_check
          %p619 = pneg %p204
        $region102: #{tpu_custom_call.1} parent=75 // pred_check_branch
          %621 = sbr.rel (%p619) target = $region104
        $region103: #{tpu_custom_call.1} parent=75 // pred_region
          %622 = dma.done [#allocation14], 64
        $region104: #{tpu_custom_call.1} parent=75 // pred_fallthru
          _
        // Predicated region
        $region105: #{tpu_custom_call.1} parent=75 // pred_check
          %p623 = pneg %p225
        $region106: #{tpu_custom_call.1} parent=75 // pred_check_branch
          %625 = sbr.rel (%p623) target = $region108
        $region107: #{tpu_custom_call.1} parent=75 // pred_region
          %626 = dma.done [#allocation17], 4096
        $region108: #{tpu_custom_call.1} parent=75 // pred_fallthru
          _
        // Predicated region
        $region109: #{tpu_custom_call.1} parent=75 // pred_check
          %p627 = pneg %p246
        $region110: #{tpu_custom_call.1} parent=75 // pred_check_branch
          %629 = sbr.rel (%p627) target = $region112
        $region111: #{tpu_custom_call.1} parent=75 // pred_region
          %630 = dma.done [#allocation17], 32
        $region112: #{tpu_custom_call.1} parent=75 // pred_fallthru
          _
        // Predicated region
        $region113: #{tpu_custom_call.1} parent=75 // pred_check
          %p631 = pneg %p267
        $region114: #{tpu_custom_call.1} parent=75 // pred_check_branch
          %633 = sbr.rel (%p631) target = $region116
        $region115: #{tpu_custom_call.1} parent=75 // pred_region
          %634 = dma.done [#allocation20], 32
        $region116: #{tpu_custom_call.1} parent=75 // pred_fallthru
          _
        // Predicated region
        $region117: #{tpu_custom_call.1} parent=75 // pred_check
          %p635 = pneg %p288
        $region118: #{tpu_custom_call.1} parent=75 // pred_check_branch
          %637 = sbr.rel (%p635) target = $region120
        $region119: #{tpu_custom_call.1} parent=75 // pred_region
          %638 = dma.done [#allocation20], 1024
        $region120: #{tpu_custom_call.1} parent=75 // pred_fallthru
          _
        // Predicated region
        $region121: #{tpu_custom_call.1} parent=75 // pred_check
          %p639 = pneg %p309
        $region122: #{tpu_custom_call.1} parent=75 // pred_check_branch
          %641 = sbr.rel (%p639) target = $region124
        $region123: #{tpu_custom_call.1} parent=75 // pred_region
          %642 = dma.done [#allocation23], 16
        $region124: #{tpu_custom_call.1} parent=75 // pred_fallthru
          _
        // Predicated region
        $region125: #{tpu_custom_call.1} parent=75 // pred_check
          %p643 = pneg %p330
        $region126: #{tpu_custom_call.1} parent=75 // pred_check_branch
          %645 = sbr.rel (%p643) target = $region128
        $region127: #{tpu_custom_call.1} parent=75 // pred_region
          %646 = dma.done [#allocation23], 16
        $region128: #{tpu_custom_call.1} parent=75 // pred_fallthru
          _
        // Predicated region
        $region129: #{tpu_custom_call.1} parent=75 // pred_check
          %p647 = pneg %p351
        $region130: #{tpu_custom_call.1} parent=75 // pred_check_branch
          %649 = sbr.rel (%p647) target = $region132
        $region131: #{tpu_custom_call.1} parent=75 // pred_region
          %650 = dma.done [#allocation6], 16
        $region132: #{tpu_custom_call.1} parent=75 // pred_fallthru
          _
        %651 = sfence
        %s652 = sand.u32 %s60, 1
        %s653 = scalar_lea.sflag [#allocation4], %s652
        %s654 = sand.u32 %s60, 1
        %s655 = smul.addr %s654, 128
        %s656 = scalar_lea.vmem [#allocation3], %s655
        %p657 = pneg %p73
        %p658 = pneg %p70
        %s659 = sand.u32 %s38, 1
        %s660 = scalar_lea.sflag [#allocation8], %s659
        %s661 = sand.u32 %s86, 1
        %s662 = smul.addr %s661, 1792
        %s663 = scalar_lea.vmem [#allocation7], %s662
        %p664 = pneg %p99
        %p665 = pneg %p96
        %p666 = pneg %p120
        %p667 = pneg %p117
        %p668 = pneg %p141
        %p669 = pneg %p138
        %p670 = pneg %p162
        %p671 = pneg %p159
        %p672 = pneg %p183
        %p673 = pneg %p180
        %p674 = pneg %p204
        %p675 = pneg %p201
        %p676 = pneg %p225
        %p677 = pneg %p222
        %p678 = pneg %p246
        %p679 = pneg %p243
        %p680 = pneg %p267
        %p681 = pneg %p264
        %p682 = pneg %p288
        %p683 = pneg %p285
        %p684 = pneg %p309
        %p685 = pneg %p306
        %p686 = pneg %p330
        %p687 = pneg %p327
        %p688 = pneg %p351
        %p689 = pneg %p348
        %p690 = pneg %p377
        %p691 = pneg %p374
        %s692 = smul.u32 2, %s42
        %s693 = smul.u32 8, %s43
        %s694 = smul.u32 32, %s43
        %s695 = smul.u32 2, %s42
        %p697 = scmp.eq.s32.totalorder %s43, 0
        // Predicated region
        $region133: #{tpu_custom_call.1} parent=75 // pred_check
          %p698 = pneg %p697
        $region134: #{tpu_custom_call.1} parent=75 // pred_check_branch
          %700 = sbr.rel (%p698) target = $region136
        $region135: #{tpu_custom_call.1} parent=75 // pred_region
          %701 = vst [vmem:[#allocation2] sm:$0xff] 0.0
          %702 = vst [vmem:[#allocation2 + $0x8] sm:$0xff] 0.0
          %703 = vst [vmem:[#allocation2 + $0x10] sm:$0xff] 0.0
          %704 = vst [vmem:[#allocation2 + $0x18] sm:$0xff] 0.0
          %705 = vst [vmem:[#allocation2 + $0x20] sm:$0xff] 0.0
          %706 = vst [vmem:[#allocation2 + $0x28] sm:$0xff] 0.0
          %707 = vst [vmem:[#allocation2 + $0x30] sm:$0xff] 0.0
          %708 = vst [vmem:[#allocation2 + $0x38] sm:$0xff] 0.0
          %709 = vst [vmem:[#allocation2 + $0x40] sm:$0xff] 0.0
          %710 = vst [vmem:[#allocation2 + $0x48] sm:$0xff] 0.0
          %711 = vst [vmem:[#allocation2 + $0x50] sm:$0xff] 0.0
          %712 = vst [vmem:[#allocation2 + $0x58] sm:$0xff] 0.0
          %713 = vst [vmem:[#allocation2 + $0x60] sm:$0xff] 0.0
          %714 = vst [vmem:[#allocation2 + $0x68] sm:$0xff] 0.0
        $region136: #{tpu_custom_call.1} parent=75 // pred_fallthru
          _
        %v715 = vld [vmem:[%s589] sm:$0xff]
        %v716 = vld [vmem:[%s589 + $0x8] sm:$0xff]
        %v717 = vld [vmem:[%s589 + $0x10] sm:$0xff]
        %v718 = vld [vmem:[%s589 + $0x18] sm:$0xff]
        %v719 = vld [vmem:[%s589 + $0x20] sm:$0xff]
        %v720 = vld [vmem:[%s589 + $0x28] sm:$0xff]
        %v721 = vld [vmem:[%s589 + $0x30] sm:$0xff]
        %v722 = vld [vmem:[%s589 + $0x38] sm:$0xff]
        %v723 = vld [vmem:[%s589 + $0x40] sm:$0xff]
        %v724 = vld [vmem:[%s589 + $0x48] sm:$0xff]
        %v725 = vld [vmem:[%s589 + $0x50] sm:$0xff]
        %v726 = vld [vmem:[%s589 + $0x58] sm:$0xff]
        %v727 = vld [vmem:[%s589 + $0x60] sm:$0xff]
        %v728 = vld [vmem:[%s589 + $0x68] sm:$0xff]
        %v729 = vld [vmem:[%s589 + $0x70] sm:$0xff]
        %v730 = vld [vmem:[%s589 + $0x78] sm:$0xff]
        %v731 = vpack.c.bf16 %v723, %v715
        %v732 = vpack.c.bf16 %v724, %v716
        %v733 = vpack.c.bf16 %v725, %v717
        %v734 = vpack.c.bf16 %v726, %v718
        %v735 = vpack.c.bf16 %v727, %v719
        %v736 = vpack.c.bf16 %v728, %v720
        %v737 = vpack.c.bf16 %v729, %v721
        %v738 = vpack.c.bf16 %v730, %v722
        %v739 = vld [vmem:[#allocation2] sm:$0xff]
        %v740 = vld [vmem:[#allocation2 + $0x8] sm:$0xff]
        %v741 = vld [vmem:[#allocation2 + $0x10] sm:$0xff]
        %v742 = vld [vmem:[#allocation2 + $0x18] sm:$0xff]
        %v743 = vld [vmem:[#allocation2 + $0x20] sm:$0xff]
        %v744 = vld [vmem:[#allocation2 + $0x28] sm:$0xff]
        %v745 = vld [vmem:[#allocation2 + $0x30] sm:$0xff]
        %v746 = vld [vmem:[#allocation2 + $0x38] sm:$0xff]
        %v747 = vld [vmem:[#allocation2 + $0x40] sm:$0xff]
        %v748 = vld [vmem:[#allocation2 + $0x48] sm:$0xff]
        %v749 = vld [vmem:[#allocation2 + $0x50] sm:$0xff]
        %v750 = vld [vmem:[#allocation2 + $0x58] sm:$0xff]
        %v751 = vld [vmem:[#allocation2 + $0x60] sm:$0xff]
        %v752 = vld [vmem:[#allocation2 + $0x68] sm:$0xff]
        %v753 = vld [vmem:[%s598] sm:$0xff]
        %v754 = vld [vmem:[%s598 + $0x8] sm:$0xff]
        %v755 = vld [vmem:[%s598 + $0x10] sm:$0xff]
        %v756 = vld [vmem:[%s598 + $0x18] sm:$0xff]
        %v757 = vld [vmem:[%s598 + $0x20] sm:$0xff]
        %v758 = vld [vmem:[%s598 + $0x28] sm:$0xff]
        %v759 = vld [vmem:[%s598 + $0x30] sm:$0xff]
        %v760 = vld [vmem:[%s598 + $0x38] sm:$0xff]
        %v761 = vld [vmem:[%s598 + $0x40] sm:$0xff]
        %v762 = vld [vmem:[%s598 + $0x48] sm:$0xff]
        %v763 = vld [vmem:[%s598 + $0x50] sm:$0xff]
        %v764 = vld [vmem:[%s598 + $0x58] sm:$0xff]
        %v765 = vld [vmem:[%s598 + $0x60] sm:$0xff]
        %v766 = vld [vmem:[%s598 + $0x68] sm:$0xff]
        %v767 = vld [vmem:[%s598 + $0x70] sm:$0xff]
        %v768 = vld [vmem:[%s598 + $0x78] sm:$0xff]
        %v769 = vld [vmem:[%s598 + $0x80] sm:$0xff]
        %v770 = vld [vmem:[%s598 + $0x88] sm:$0xff]
        %v771 = vld [vmem:[%s598 + $0x90] sm:$0xff]
        %v772 = vld [vmem:[%s598 + $0x98] sm:$0xff]
        %v773 = vld [vmem:[%s598 + $0xa0] sm:$0xff]
        %v774 = vld [vmem:[%s598 + $0xa8] sm:$0xff]
        %v775 = vld [vmem:[%s598 + $0xb0] sm:$0xff]
        %v776 = vld [vmem:[%s598 + $0xb8] sm:$0xff]
        %v777 = vld [vmem:[%s598 + $0xc0] sm:$0xff]
        %v778 = vld [vmem:[%s598 + $0xc8] sm:$0xff]
        %v779 = vld [vmem:[%s598 + $0xd0] sm:$0xff]
        %v780 = vld [vmem:[%s598 + $0xd8] sm:$0xff]
        %v781 = vld [vmem:[%s598 + $0xe0] sm:$0xff]
        %v782 = vld [vmem:[%s598 + $0xe8] sm:$0xff]
        %v783 = vld [vmem:[%s598 + $0xf0] sm:$0xff]
        %v784 = vld [vmem:[%s598 + $0xf8] sm:$0xff]
        %v785 = vld [vmem:[%s598 + $0x100] sm:$0xff]
        %v786 = vld [vmem:[%s598 + $0x108] sm:$0xff]
        %v787 = vld [vmem:[%s598 + $0x110] sm:$0xff]
        %v788 = vld [vmem:[%s598 + $0x118] sm:$0xff]
        %v789 = vld [vmem:[%s598 + $0x120] sm:$0xff]
        %v790 = vld [vmem:[%s598 + $0x128] sm:$0xff]
        %v791 = vld [vmem:[%s598 + $0x130] sm:$0xff]
        %v792 = vld [vmem:[%s598 + $0x138] sm:$0xff]
        %v793 = vld [vmem:[%s598 + $0x140] sm:$0xff]
        %v794 = vld [vmem:[%s598 + $0x148] sm:$0xff]
        %v795 = vld [vmem:[%s598 + $0x150] sm:$0xff]
        %v796 = vld [vmem:[%s598 + $0x158] sm:$0xff]
        %v797 = vld [vmem:[%s598 + $0x160] sm:$0xff]
        %v798 = vld [vmem:[%s598 + $0x168] sm:$0xff]
        %v799 = vld [vmem:[%s598 + $0x170] sm:$0xff]
        %v800 = vld [vmem:[%s598 + $0x178] sm:$0xff]
        %v801 = vld [vmem:[%s598 + $0x180] sm:$0xff]
        %v802 = vld [vmem:[%s598 + $0x188] sm:$0xff]
        %v803 = vld [vmem:[%s598 + $0x190] sm:$0xff]
        %v804 = vld [vmem:[%s598 + $0x198] sm:$0xff]
        %v805 = vld [vmem:[%s598 + $0x1a0] sm:$0xff]
        %v806 = vld [vmem:[%s598 + $0x1a8] sm:$0xff]
        %v807 = vld [vmem:[%s598 + $0x1b0] sm:$0xff]
        %v808 = vld [vmem:[%s598 + $0x1b8] sm:$0xff]
        %v809 = vld [vmem:[%s598 + $0x1c0] sm:$0xff]
        %v810 = vld [vmem:[%s598 + $0x1c8] sm:$0xff]
        %v811 = vld [vmem:[%s598 + $0x1d0] sm:$0xff]
        %v812 = vld [vmem:[%s598 + $0x1d8] sm:$0xff]
        %v813 = vld [vmem:[%s598 + $0x1e0] sm:$0xff]
        %v814 = vld [vmem:[%s598 + $0x1e8] sm:$0xff]
        %v815 = vld [vmem:[%s598 + $0x1f0] sm:$0xff]
        %v816 = vld [vmem:[%s598 + $0x1f8] sm:$0xff]
        %v817 = vld [vmem:[%s598 + $0x200] sm:$0xff]
        %v818 = vld [vmem:[%s598 + $0x208] sm:$0xff]
        %v819 = vld [vmem:[%s598 + $0x210] sm:$0xff]
        %v820 = vld [vmem:[%s598 + $0x218] sm:$0xff]
        %v821 = vld [vmem:[%s598 + $0x220] sm:$0xff]
        %v822 = vld [vmem:[%s598 + $0x228] sm:$0xff]
        %v823 = vld [vmem:[%s598 + $0x230] sm:$0xff]
        %v824 = vld [vmem:[%s598 + $0x238] sm:$0xff]
        %v825 = vld [vmem:[%s598 + $0x240] sm:$0xff]
        %v826 = vld [vmem:[%s598 + $0x248] sm:$0xff]
        %v827 = vld [vmem:[%s598 + $0x250] sm:$0xff]
        %v828 = vld [vmem:[%s598 + $0x258] sm:$0xff]
        %v829 = vld [vmem:[%s598 + $0x260] sm:$0xff]
        %v830 = vld [vmem:[%s598 + $0x268] sm:$0xff]
        %v831 = vld [vmem:[%s598 + $0x270] sm:$0xff]
        %v832 = vld [vmem:[%s598 + $0x278] sm:$0xff]
        %v833 = vld [vmem:[%s598 + $0x280] sm:$0xff]
        %v834 = vld [vmem:[%s598 + $0x288] sm:$0xff]
        %v835 = vld [vmem:[%s598 + $0x290] sm:$0xff]
        %v836 = vld [vmem:[%s598 + $0x298] sm:$0xff]
        %v837 = vld [vmem:[%s598 + $0x2a0] sm:$0xff]
        %v838 = vld [vmem:[%s598 + $0x2a8] sm:$0xff]
        %v839 = vld [vmem:[%s598 + $0x2b0] sm:$0xff]
        %v840 = vld [vmem:[%s598 + $0x2b8] sm:$0xff]
        %v841 = vld [vmem:[%s598 + $0x2c0] sm:$0xff]
        %v842 = vld [vmem:[%s598 + $0x2c8] sm:$0xff]
        %v843 = vld [vmem:[%s598 + $0x2d0] sm:$0xff]
        %v844 = vld [vmem:[%s598 + $0x2d8] sm:$0xff]
        %v845 = vld [vmem:[%s598 + $0x2e0] sm:$0xff]
        %v846 = vld [vmem:[%s598 + $0x2e8] sm:$0xff]
        %v847 = vld [vmem:[%s598 + $0x2f0] sm:$0xff]
        %v848 = vld [vmem:[%s598 + $0x2f8] sm:$0xff]
        %v849 = vld [vmem:[%s598 + $0x300] sm:$0xff]
        %v850 = vld [vmem:[%s598 + $0x308] sm:$0xff]
        %v851 = vld [vmem:[%s598 + $0x310] sm:$0xff]
        %v852 = vld [vmem:[%s598 + $0x318] sm:$0xff]
        %v853 = vld [vmem:[%s598 + $0x320] sm:$0xff]
        %v854 = vld [vmem:[%s598 + $0x328] sm:$0xff]
        %v855 = vld [vmem:[%s598 + $0x330] sm:$0xff]
        %v856 = vld [vmem:[%s598 + $0x338] sm:$0xff]
        %v857 = vld [vmem:[%s598 + $0x340] sm:$0xff]
        %v858 = vld [vmem:[%s598 + $0x348] sm:$0xff]
        %v859 = vld [vmem:[%s598 + $0x350] sm:$0xff]
        %v860 = vld [vmem:[%s598 + $0x358] sm:$0xff]
        %v861 = vld [vmem:[%s598 + $0x360] sm:$0xff]
        %v862 = vld [vmem:[%s598 + $0x368] sm:$0xff]
        %v863 = vld [vmem:[%s598 + $0x370] sm:$0xff]
        %v864 = vld [vmem:[%s598 + $0x378] sm:$0xff]
        %v865 = vld [vmem:[%s598 + $0x380] sm:$0xff]
        %v866 = vld [vmem:[%s598 + $0x388] sm:$0xff]
        %v867 = vld [vmem:[%s598 + $0x390] sm:$0xff]
        %v868 = vld [vmem:[%s598 + $0x398] sm:$0xff]
        %v869 = vld [vmem:[%s598 + $0x3a0] sm:$0xff]
        %v870 = vld [vmem:[%s598 + $0x3a8] sm:$0xff]
        %v871 = vld [vmem:[%s598 + $0x3b0] sm:$0xff]
        %v872 = vld [vmem:[%s598 + $0x3b8] sm:$0xff]
        %v873 = vld [vmem:[%s598 + $0x3c0] sm:$0xff]
        %v874 = vld [vmem:[%s598 + $0x3c8] sm:$0xff]
        %v875 = vld [vmem:[%s598 + $0x3d0] sm:$0xff]
        %v876 = vld [vmem:[%s598 + $0x3d8] sm:$0xff]
        %v877 = vld [vmem:[%s598 + $0x3e0] sm:$0xff]
        %v878 = vld [vmem:[%s598 + $0x3e8] sm:$0xff]
        %v879 = vld [vmem:[%s598 + $0x3f0] sm:$0xff]
        %v880 = vld [vmem:[%s598 + $0x3f8] sm:$0xff]
        %v881 = vld [vmem:[%s598 + $0x400] sm:$0xff]
        %v882 = vld [vmem:[%s598 + $0x408] sm:$0xff]
        %v883 = vld [vmem:[%s598 + $0x410] sm:$0xff]
        %v884 = vld [vmem:[%s598 + $0x418] sm:$0xff]
        %v885 = vld [vmem:[%s598 + $0x420] sm:$0xff]
        %v886 = vld [vmem:[%s598 + $0x428] sm:$0xff]
        %v887 = vld [vmem:[%s598 + $0x430] sm:$0xff]
        %v888 = vld [vmem:[%s598 + $0x438] sm:$0xff]
        %v889 = vld [vmem:[%s598 + $0x440] sm:$0xff]
        %v890 = vld [vmem:[%s598 + $0x448] sm:$0xff]
        %v891 = vld [vmem:[%s598 + $0x450] sm:$0xff]
        %v892 = vld [vmem:[%s598 + $0x458] sm:$0xff]
        %v893 = vld [vmem:[%s598 + $0x460] sm:$0xff]
        %v894 = vld [vmem:[%s598 + $0x468] sm:$0xff]
        %v895 = vld [vmem:[%s598 + $0x470] sm:$0xff]
        %v896 = vld [vmem:[%s598 + $0x478] sm:$0xff]
        %v897 = vld [vmem:[%s598 + $0x480] sm:$0xff]
        %v898 = vld [vmem:[%s598 + $0x488] sm:$0xff]
        %v899 = vld [vmem:[%s598 + $0x490] sm:$0xff]
        %v900 = vld [vmem:[%s598 + $0x498] sm:$0xff]
        %v901 = vld [vmem:[%s598 + $0x4a0] sm:$0xff]
        %v902 = vld [vmem:[%s598 + $0x4a8] sm:$0xff]
        %v903 = vld [vmem:[%s598 + $0x4b0] sm:$0xff]
        %v904 = vld [vmem:[%s598 + $0x4b8] sm:$0xff]
        %v905 = vld [vmem:[%s598 + $0x4c0] sm:$0xff]
        %v906 = vld [vmem:[%s598 + $0x4c8] sm:$0xff]
        %v907 = vld [vmem:[%s598 + $0x4d0] sm:$0xff]
        %v908 = vld [vmem:[%s598 + $0x4d8] sm:$0xff]
        %v909 = vld [vmem:[%s598 + $0x4e0] sm:$0xff]
        %v910 = vld [vmem:[%s598 + $0x4e8] sm:$0xff]
        %v911 = vld [vmem:[%s598 + $0x4f0] sm:$0xff]
        %v912 = vld [vmem:[%s598 + $0x4f8] sm:$0xff]
        %v913 = vld [vmem:[%s598 + $0x500] sm:$0xff]
        %v914 = vld [vmem:[%s598 + $0x508] sm:$0xff]
        %v915 = vld [vmem:[%s598 + $0x510] sm:$0xff]
        %v916 = vld [vmem:[%s598 + $0x518] sm:$0xff]
        %v917 = vld [vmem:[%s598 + $0x520] sm:$0xff]
        %v918 = vld [vmem:[%s598 + $0x528] sm:$0xff]
        %v919 = vld [vmem:[%s598 + $0x530] sm:$0xff]
        %v920 = vld [vmem:[%s598 + $0x538] sm:$0xff]
        %v921 = vld [vmem:[%s598 + $0x540] sm:$0xff]
        %v922 = vld [vmem:[%s598 + $0x548] sm:$0xff]
        %v923 = vld [vmem:[%s598 + $0x550] sm:$0xff]
        %v924 = vld [vmem:[%s598 + $0x558] sm:$0xff]
        %v925 = vld [vmem:[%s598 + $0x560] sm:$0xff]
        %v926 = vld [vmem:[%s598 + $0x568] sm:$0xff]
        %v927 = vld [vmem:[%s598 + $0x570] sm:$0xff]
        %v928 = vld [vmem:[%s598 + $0x578] sm:$0xff]
        %v929 = vld [vmem:[%s598 + $0x580] sm:$0xff]
        %v930 = vld [vmem:[%s598 + $0x588] sm:$0xff]
        %v931 = vld [vmem:[%s598 + $0x590] sm:$0xff]
        %v932 = vld [vmem:[%s598 + $0x598] sm:$0xff]
        %v933 = vld [vmem:[%s598 + $0x5a0] sm:$0xff]
        %v934 = vld [vmem:[%s598 + $0x5a8] sm:$0xff]
        %v935 = vld [vmem:[%s598 + $0x5b0] sm:$0xff]
        %v936 = vld [vmem:[%s598 + $0x5b8] sm:$0xff]
        %v937 = vld [vmem:[%s598 + $0x5c0] sm:$0xff]
        %v938 = vld [vmem:[%s598 + $0x5c8] sm:$0xff]
        %v939 = vld [vmem:[%s598 + $0x5d0] sm:$0xff]
        %v940 = vld [vmem:[%s598 + $0x5d8] sm:$0xff]
        %v941 = vld [vmem:[%s598 + $0x5e0] sm:$0xff]
        %v942 = vld [vmem:[%s598 + $0x5e8] sm:$0xff]
        %v943 = vld [vmem:[%s598 + $0x5f0] sm:$0xff]
        %v944 = vld [vmem:[%s598 + $0x5f8] sm:$0xff]
        %v945 = vld [vmem:[%s598 + $0x600] sm:$0xff]
        %v946 = vld [vmem:[%s598 + $0x608] sm:$0xff]
        %v947 = vld [vmem:[%s598 + $0x610] sm:$0xff]
        %v948 = vld [vmem:[%s598 + $0x618] sm:$0xff]
        %v949 = vld [vmem:[%s598 + $0x620] sm:$0xff]
        %v950 = vld [vmem:[%s598 + $0x628] sm:$0xff]
        %v951 = vld [vmem:[%s598 + $0x630] sm:$0xff]
        %v952 = vld [vmem:[%s598 + $0x638] sm:$0xff]
        %v953 = vld [vmem:[%s598 + $0x640] sm:$0xff]
        %v954 = vld [vmem:[%s598 + $0x648] sm:$0xff]
        %v955 = vld [vmem:[%s598 + $0x650] sm:$0xff]
        %v956 = vld [vmem:[%s598 + $0x658] sm:$0xff]
        %v957 = vld [vmem:[%s598 + $0x660] sm:$0xff]
        %v958 = vld [vmem:[%s598 + $0x668] sm:$0xff]
        %v959 = vld [vmem:[%s598 + $0x670] sm:$0xff]
        %v960 = vld [vmem:[%s598 + $0x678] sm:$0xff]
        %v961 = vld [vmem:[%s598 + $0x680] sm:$0xff]
        %v962 = vld [vmem:[%s598 + $0x688] sm:$0xff]
        %v963 = vld [vmem:[%s598 + $0x690] sm:$0xff]
        %v964 = vld [vmem:[%s598 + $0x698] sm:$0xff]
        %v965 = vld [vmem:[%s598 + $0x6a0] sm:$0xff]
        %v966 = vld [vmem:[%s598 + $0x6a8] sm:$0xff]
        %v967 = vld [vmem:[%s598 + $0x6b0] sm:$0xff]
        %v968 = vld [vmem:[%s598 + $0x6b8] sm:$0xff]
        %v969 = vld [vmem:[%s598 + $0x6c0] sm:$0xff]
        %v970 = vld [vmem:[%s598 + $0x6c8] sm:$0xff]
        %v971 = vld [vmem:[%s598 + $0x6d0] sm:$0xff]
        %v972 = vld [vmem:[%s598 + $0x6d8] sm:$0xff]
        %v973 = vld [vmem:[%s598 + $0x6e0] sm:$0xff]
        %v974 = vld [vmem:[%s598 + $0x6e8] sm:$0xff]
        %v975 = vld [vmem:[%s598 + $0x6f0] sm:$0xff]
        %v976 = vld [vmem:[%s598 + $0x6f8] sm:$0xff]
        %v977 = vunpack.c.l.s8.bf16 %v753
        %v978 = vunpack.c.l.s8.bf16 %v754
        %v979 = vunpack.c.l.s8.bf16 %v755
        %v980 = vunpack.c.l.s8.bf16 %v756
        %v981 = vunpack.c.l.s8.bf16 %v757
        %v982 = vunpack.c.l.s8.bf16 %v758
        %v983 = vunpack.c.l.s8.bf16 %v759
        %v984 = vunpack.c.h.s8.bf16 %v753
        %v985 = vunpack.c.h.s8.bf16 %v754
        %v986 = vunpack.c.h.s8.bf16 %v755
        %v987 = vunpack.c.h.s8.bf16 %v756
        %v988 = vunpack.c.h.s8.bf16 %v757
        %v989 = vunpack.c.h.s8.bf16 %v758
        %v990 = vunpack.c.h.s8.bf16 %v759
        %v991 = vunpack.c.l.s8.bf16 %v760
        %v992 = vunpack.c.l.s8.bf16 %v761
        %v993 = vunpack.c.l.s8.bf16 %v762
        %v994 = vunpack.c.l.s8.bf16 %v763
        %v995 = vunpack.c.l.s8.bf16 %v764
        %v996 = vunpack.c.l.s8.bf16 %v765
        %v997 = vunpack.c.l.s8.bf16 %v766
        %v998 = vunpack.c.h.s8.bf16 %v760
        %v999 = vunpack.c.h.s8.bf16 %v761
        %v1000 = vunpack.c.h.s8.bf16 %v762
        %v1001 = vunpack.c.h.s8.bf16 %v763
        %v1002 = vunpack.c.h.s8.bf16 %v764
        %v1003 = vunpack.c.h.s8.bf16 %v765
        %v1004 = vunpack.c.h.s8.bf16 %v766
        %v1005 = vunpack.c.l.s8.bf16 %v767
        %v1006 = vunpack.c.l.s8.bf16 %v768
        %v1007 = vunpack.c.l.s8.bf16 %v769
        %v1008 = vunpack.c.l.s8.bf16 %v770
        %v1009 = vunpack.c.l.s8.bf16 %v771
        %v1010 = vunpack.c.l.s8.bf16 %v772
        %v1011 = vunpack.c.l.s8.bf16 %v773
        %v1012 = vunpack.c.h.s8.bf16 %v767
        %v1013 = vunpack.c.h.s8.bf16 %v768
        %v1014 = vunpack.c.h.s8.bf16 %v769
        %v1015 = vunpack.c.h.s8.bf16 %v770
        %v1016 = vunpack.c.h.s8.bf16 %v771
        %v1017 = vunpack.c.h.s8.bf16 %v772
        %v1018 = vunpack.c.h.s8.bf16 %v773
        %v1019 = vunpack.c.l.s8.bf16 %v774
        %v1020 = vunpack.c.l.s8.bf16 %v775
        %v1021 = vunpack.c.l.s8.bf16 %v776
        %v1022 = vunpack.c.l.s8.bf16 %v777
        %v1023 = vunpack.c.l.s8.bf16 %v778
        %v1024 = vunpack.c.l.s8.bf16 %v779
        %v1025 = vunpack.c.l.s8.bf16 %v780
        %v1026 = vunpack.c.h.s8.bf16 %v774
        %v1027 = vunpack.c.h.s8.bf16 %v775
        %v1028 = vunpack.c.h.s8.bf16 %v776
        %v1029 = vunpack.c.h.s8.bf16 %v777
        %v1030 = vunpack.c.h.s8.bf16 %v778
        %v1031 = vunpack.c.h.s8.bf16 %v779
        %v1032 = vunpack.c.h.s8.bf16 %v780
        %v1033 = vunpack.c.l.s8.bf16 %v781
        %v1034 = vunpack.c.l.s8.bf16 %v782
        %v1035 = vunpack.c.l.s8.bf16 %v783
        %v1036 = vunpack.c.l.s8.bf16 %v784
        %v1037 = vunpack.c.l.s8.bf16 %v785
        %v1038 = vunpack.c.l.s8.bf16 %v786
        %v1039 = vunpack.c.l.s8.bf16 %v787
        %v1040 = vunpack.c.h.s8.bf16 %v781
        %v1041 = vunpack.c.h.s8.bf16 %v782
        %v1042 = vunpack.c.h.s8.bf16 %v783
        %v1043 = vunpack.c.h.s8.bf16 %v784
        %v1044 = vunpack.c.h.s8.bf16 %v785
        %v1045 = vunpack.c.h.s8.bf16 %v786
        %v1046 = vunpack.c.h.s8.bf16 %v787
        %v1047 = vunpack.c.l.s8.bf16 %v788
        %v1048 = vunpack.c.l.s8.bf16 %v789
        %v1049 = vunpack.c.l.s8.bf16 %v790
        %v1050 = vunpack.c.l.s8.bf16 %v791
        %v1051 = vunpack.c.l.s8.bf16 %v792
        %v1052 = vunpack.c.l.s8.bf16 %v793
        %v1053 = vunpack.c.l.s8.bf16 %v794
        %v1054 = vunpack.c.h.s8.bf16 %v788
        %v1055 = vunpack.c.h.s8.bf16 %v789
        %v1056 = vunpack.c.h.s8.bf16 %v790
        %v1057 = vunpack.c.h.s8.bf16 %v791
        %v1058 = vunpack.c.h.s8.bf16 %v792
        %v1059 = vunpack.c.h.s8.bf16 %v793
        %v1060 = vunpack.c.h.s8.bf16 %v794
        %v1061 = vunpack.c.l.s8.bf16 %v795
        %v1062 = vunpack.c.l.s8.bf16 %v796
        %v1063 = vunpack.c.l.s8.bf16 %v797
        %v1064 = vunpack.c.l.s8.bf16 %v798
        %v1065 = vunpack.c.l.s8.bf16 %v799
        %v1066 = vunpack.c.l.s8.bf16 %v800
        %v1067 = vunpack.c.l.s8.bf16 %v801
        %v1068 = vunpack.c.h.s8.bf16 %v795
        %v1069 = vunpack.c.h.s8.bf16 %v796
        %v1070 = vunpack.c.h.s8.bf16 %v797
        %v1071 = vunpack.c.h.s8.bf16 %v798
        %v1072 = vunpack.c.h.s8.bf16 %v799
        %v1073 = vunpack.c.h.s8.bf16 %v800
        %v1074 = vunpack.c.h.s8.bf16 %v801
        %v1075 = vunpack.c.l.s8.bf16 %v802
        %v1076 = vunpack.c.l.s8.bf16 %v803
        %v1077 = vunpack.c.l.s8.bf16 %v804
        %v1078 = vunpack.c.l.s8.bf16 %v805
        %v1079 = vunpack.c.l.s8.bf16 %v806
        %v1080 = vunpack.c.l.s8.bf16 %v807
        %v1081 = vunpack.c.l.s8.bf16 %v808
        %v1082 = vunpack.c.h.s8.bf16 %v802
        %v1083 = vunpack.c.h.s8.bf16 %v803
        %v1084 = vunpack.c.h.s8.bf16 %v804
        %v1085 = vunpack.c.h.s8.bf16 %v805
        %v1086 = vunpack.c.h.s8.bf16 %v806
        %v1087 = vunpack.c.h.s8.bf16 %v807
        %v1088 = vunpack.c.h.s8.bf16 %v808
        %v1089 = vunpack.c.l.s8.bf16 %v809
        %v1090 = vunpack.c.l.s8.bf16 %v810
        %v1091 = vunpack.c.l.s8.bf16 %v811
        %v1092 = vunpack.c.l.s8.bf16 %v812
        %v1093 = vunpack.c.l.s8.bf16 %v813
        %v1094 = vunpack.c.l.s8.bf16 %v814
        %v1095 = vunpack.c.l.s8.bf16 %v815
        %v1096 = vunpack.c.h.s8.bf16 %v809
        %v1097 = vunpack.c.h.s8.bf16 %v810
        %v1098 = vunpack.c.h.s8.bf16 %v811
        %v1099 = vunpack.c.h.s8.bf16 %v812
        %v1100 = vunpack.c.h.s8.bf16 %v813
        %v1101 = vunpack.c.h.s8.bf16 %v814
        %v1102 = vunpack.c.h.s8.bf16 %v815
        %v1103 = vunpack.c.l.s8.bf16 %v816
        %v1104 = vunpack.c.l.s8.bf16 %v817
        %v1105 = vunpack.c.l.s8.bf16 %v818
        %v1106 = vunpack.c.l.s8.bf16 %v819
        %v1107 = vunpack.c.l.s8.bf16 %v820
        %v1108 = vunpack.c.l.s8.bf16 %v821
        %v1109 = vunpack.c.l.s8.bf16 %v822
        %v1110 = vunpack.c.h.s8.bf16 %v816
        %v1111 = vunpack.c.h.s8.bf16 %v817
        %v1112 = vunpack.c.h.s8.bf16 %v818
        %v1113 = vunpack.c.h.s8.bf16 %v819
        %v1114 = vunpack.c.h.s8.bf16 %v820
        %v1115 = vunpack.c.h.s8.bf16 %v821
        %v1116 = vunpack.c.h.s8.bf16 %v822
        %v1117 = vunpack.c.l.s8.bf16 %v823
        %v1118 = vunpack.c.l.s8.bf16 %v824
        %v1119 = vunpack.c.l.s8.bf16 %v825
        %v1120 = vunpack.c.l.s8.bf16 %v826
        %v1121 = vunpack.c.l.s8.bf16 %v827
        %v1122 = vunpack.c.l.s8.bf16 %v828
        %v1123 = vunpack.c.l.s8.bf16 %v829
        %v1124 = vunpack.c.h.s8.bf16 %v823
        %v1125 = vunpack.c.h.s8.bf16 %v824
        %v1126 = vunpack.c.h.s8.bf16 %v825
        %v1127 = vunpack.c.h.s8.bf16 %v826
        %v1128 = vunpack.c.h.s8.bf16 %v827
        %v1129 = vunpack.c.h.s8.bf16 %v828
        %v1130 = vunpack.c.h.s8.bf16 %v829
        %v1131 = vunpack.c.l.s8.bf16 %v830
        %v1132 = vunpack.c.l.s8.bf16 %v831
        %v1133 = vunpack.c.l.s8.bf16 %v832
        %v1134 = vunpack.c.l.s8.bf16 %v833
        %v1135 = vunpack.c.l.s8.bf16 %v834
        %v1136 = vunpack.c.l.s8.bf16 %v835
        %v1137 = vunpack.c.l.s8.bf16 %v836
        %v1138 = vunpack.c.h.s8.bf16 %v830
        %v1139 = vunpack.c.h.s8.bf16 %v831
        %v1140 = vunpack.c.h.s8.bf16 %v832
        %v1141 = vunpack.c.h.s8.bf16 %v833
        %v1142 = vunpack.c.h.s8.bf16 %v834
        %v1143 = vunpack.c.h.s8.bf16 %v835
        %v1144 = vunpack.c.h.s8.bf16 %v836
        %v1145 = vunpack.c.l.s8.bf16 %v837
        %v1146 = vunpack.c.l.s8.bf16 %v838
        %v1147 = vunpack.c.l.s8.bf16 %v839
        %v1148 = vunpack.c.l.s8.bf16 %v840
        %v1149 = vunpack.c.l.s8.bf16 %v841
        %v1150 = vunpack.c.l.s8.bf16 %v842
        %v1151 = vunpack.c.l.s8.bf16 %v843
        %v1152 = vunpack.c.h.s8.bf16 %v837
        %v1153 = vunpack.c.h.s8.bf16 %v838
        %v1154 = vunpack.c.h.s8.bf16 %v839
        %v1155 = vunpack.c.h.s8.bf16 %v840
        %v1156 = vunpack.c.h.s8.bf16 %v841
        %v1157 = vunpack.c.h.s8.bf16 %v842
        %v1158 = vunpack.c.h.s8.bf16 %v843
        %v1159 = vunpack.c.l.s8.bf16 %v844
        %v1160 = vunpack.c.l.s8.bf16 %v845
        %v1161 = vunpack.c.l.s8.bf16 %v846
        %v1162 = vunpack.c.l.s8.bf16 %v847
        %v1163 = vunpack.c.l.s8.bf16 %v848
        %v1164 = vunpack.c.l.s8.bf16 %v849
        %v1165 = vunpack.c.l.s8.bf16 %v850
        %v1166 = vunpack.c.h.s8.bf16 %v844
        %v1167 = vunpack.c.h.s8.bf16 %v845
        %v1168 = vunpack.c.h.s8.bf16 %v846
        %v1169 = vunpack.c.h.s8.bf16 %v847
        %v1170 = vunpack.c.h.s8.bf16 %v848
        %v1171 = vunpack.c.h.s8.bf16 %v849
        %v1172 = vunpack.c.h.s8.bf16 %v850
        %v1173 = vunpack.c.l.s8.bf16 %v851
        %v1174 = vunpack.c.l.s8.bf16 %v852
        %v1175 = vunpack.c.l.s8.bf16 %v853
        %v1176 = vunpack.c.l.s8.bf16 %v854
        %v1177 = vunpack.c.l.s8.bf16 %v855
        %v1178 = vunpack.c.l.s8.bf16 %v856
        %v1179 = vunpack.c.l.s8.bf16 %v857
        %v1180 = vunpack.c.h.s8.bf16 %v851
        %v1181 = vunpack.c.h.s8.bf16 %v852
        %v1182 = vunpack.c.h.s8.bf16 %v853
        %v1183 = vunpack.c.h.s8.bf16 %v854
        %v1184 = vunpack.c.h.s8.bf16 %v855
        %v1185 = vunpack.c.h.s8.bf16 %v856
        %v1186 = vunpack.c.h.s8.bf16 %v857
        %v1187 = vunpack.c.l.s8.bf16 %v858
        %v1188 = vunpack.c.l.s8.bf16 %v859
        %v1189 = vunpack.c.l.s8.bf16 %v860
        %v1190 = vunpack.c.l.s8.bf16 %v861
        %v1191 = vunpack.c.l.s8.bf16 %v862
        %v1192 = vunpack.c.l.s8.bf16 %v863
        %v1193 = vunpack.c.l.s8.bf16 %v864
        %v1194 = vunpack.c.h.s8.bf16 %v858
        %v1195 = vunpack.c.h.s8.bf16 %v859
        %v1196 = vunpack.c.h.s8.bf16 %v860
        %v1197 = vunpack.c.h.s8.bf16 %v861
        %v1198 = vunpack.c.h.s8.bf16 %v862
        %v1199 = vunpack.c.h.s8.bf16 %v863
        %v1200 = vunpack.c.h.s8.bf16 %v864
        %v1201 = vunpack.c.l.s8.bf16 %v865
        %v1202 = vunpack.c.l.s8.bf16 %v866
        %v1203 = vunpack.c.l.s8.bf16 %v867
        %v1204 = vunpack.c.l.s8.bf16 %v868
        %v1205 = vunpack.c.l.s8.bf16 %v869
        %v1206 = vunpack.c.l.s8.bf16 %v870
        %v1207 = vunpack.c.l.s8.bf16 %v871
        %v1208 = vunpack.c.h.s8.bf16 %v865
        %v1209 = vunpack.c.h.s8.bf16 %v866
        %v1210 = vunpack.c.h.s8.bf16 %v867
        %v1211 = vunpack.c.h.s8.bf16 %v868
        %v1212 = vunpack.c.h.s8.bf16 %v869
        %v1213 = vunpack.c.h.s8.bf16 %v870
        %v1214 = vunpack.c.h.s8.bf16 %v871
        %v1215 = vunpack.c.l.s8.bf16 %v872
        %v1216 = vunpack.c.l.s8.bf16 %v873
        %v1217 = vunpack.c.l.s8.bf16 %v874
        %v1218 = vunpack.c.l.s8.bf16 %v875
        %v1219 = vunpack.c.l.s8.bf16 %v876
        %v1220 = vunpack.c.l.s8.bf16 %v877
        %v1221 = vunpack.c.l.s8.bf16 %v878
        %v1222 = vunpack.c.h.s8.bf16 %v872
        %v1223 = vunpack.c.h.s8.bf16 %v873
        %v1224 = vunpack.c.h.s8.bf16 %v874
        %v1225 = vunpack.c.h.s8.bf16 %v875
        %v1226 = vunpack.c.h.s8.bf16 %v876
        %v1227 = vunpack.c.h.s8.bf16 %v877
        %v1228 = vunpack.c.h.s8.bf16 %v878
        %v1229 = vunpack.c.l.s8.bf16 %v879
        %v1230 = vunpack.c.l.s8.bf16 %v880
        %v1231 = vunpack.c.l.s8.bf16 %v881
        %v1232 = vunpack.c.l.s8.bf16 %v882
        %v1233 = vunpack.c.l.s8.bf16 %v883
        %v1234 = vunpack.c.l.s8.bf16 %v884
        %v1235 = vunpack.c.l.s8.bf16 %v885
        %v1236 = vunpack.c.h.s8.bf16 %v879
        %v1237 = vunpack.c.h.s8.bf16 %v880
        %v1238 = vunpack.c.h.s8.bf16 %v881
        %v1239 = vunpack.c.h.s8.bf16 %v882
        %v1240 = vunpack.c.h.s8.bf16 %v883
        %v1241 = vunpack.c.h.s8.bf16 %v884
        %v1242 = vunpack.c.h.s8.bf16 %v885
        %v1243 = vunpack.c.l.s8.bf16 %v886
        %v1244 = vunpack.c.l.s8.bf16 %v887
        %v1245 = vunpack.c.l.s8.bf16 %v888
        %v1246 = vunpack.c.l.s8.bf16 %v889
        %v1247 = vunpack.c.l.s8.bf16 %v890
        %v1248 = vunpack.c.l.s8.bf16 %v891
        %v1249 = vunpack.c.l.s8.bf16 %v892
        %v1250 = vunpack.c.h.s8.bf16 %v886
        %v1251 = vunpack.c.h.s8.bf16 %v887
        %v1252 = vunpack.c.h.s8.bf16 %v888
        %v1253 = vunpack.c.h.s8.bf16 %v889
        %v1254 = vunpack.c.h.s8.bf16 %v890
        %v1255 = vunpack.c.h.s8.bf16 %v891
        %v1256 = vunpack.c.h.s8.bf16 %v892
        %v1257 = vunpack.c.l.s8.bf16 %v893
        %v1258 = vunpack.c.l.s8.bf16 %v894
        %v1259 = vunpack.c.l.s8.bf16 %v895
        %v1260 = vunpack.c.l.s8.bf16 %v896
        %v1261 = vunpack.c.l.s8.bf16 %v897
        %v1262 = vunpack.c.l.s8.bf16 %v898
        %v1263 = vunpack.c.l.s8.bf16 %v899
        %v1264 = vunpack.c.h.s8.bf16 %v893
        %v1265 = vunpack.c.h.s8.bf16 %v894
        %v1266 = vunpack.c.h.s8.bf16 %v895
        %v1267 = vunpack.c.h.s8.bf16 %v896
        %v1268 = vunpack.c.h.s8.bf16 %v897
        %v1269 = vunpack.c.h.s8.bf16 %v898
        %v1270 = vunpack.c.h.s8.bf16 %v899
        %v1271 = vunpack.c.l.s8.bf16 %v900
        %v1272 = vunpack.c.l.s8.bf16 %v901
        %v1273 = vunpack.c.l.s8.bf16 %v902
        %v1274 = vunpack.c.l.s8.bf16 %v903
        %v1275 = vunpack.c.l.s8.bf16 %v904
        %v1276 = vunpack.c.l.s8.bf16 %v905
        %v1277 = vunpack.c.l.s8.bf16 %v906
        %v1278 = vunpack.c.h.s8.bf16 %v900
        %v1279 = vunpack.c.h.s8.bf16 %v901
        %v1280 = vunpack.c.h.s8.bf16 %v902
        %v1281 = vunpack.c.h.s8.bf16 %v903
        %v1282 = vunpack.c.h.s8.bf16 %v904
        %v1283 = vunpack.c.h.s8.bf16 %v905
        %v1284 = vunpack.c.h.s8.bf16 %v906
        %v1285 = vunpack.c.l.s8.bf16 %v907
        %v1286 = vunpack.c.l.s8.bf16 %v908
        %v1287 = vunpack.c.l.s8.bf16 %v909
        %v1288 = vunpack.c.l.s8.bf16 %v910
        %v1289 = vunpack.c.l.s8.bf16 %v911
        %v1290 = vunpack.c.l.s8.bf16 %v912
        %v1291 = vunpack.c.l.s8.bf16 %v913
        %v1292 = vunpack.c.h.s8.bf16 %v907
        %v1293 = vunpack.c.h.s8.bf16 %v908
        %v1294 = vunpack.c.h.s8.bf16 %v909
        %v1295 = vunpack.c.h.s8.bf16 %v910
        %v1296 = vunpack.c.h.s8.bf16 %v911
        %v1297 = vunpack.c.h.s8.bf16 %v912
        %v1298 = vunpack.c.h.s8.bf16 %v913
        %v1299 = vunpack.c.l.s8.bf16 %v914
        %v1300 = vunpack.c.l.s8.bf16 %v915
        %v1301 = vunpack.c.l.s8.bf16 %v916
        %v1302 = vunpack.c.l.s8.bf16 %v917
        %v1303 = vunpack.c.l.s8.bf16 %v918
        %v1304 = vunpack.c.l.s8.bf16 %v919
        %v1305 = vunpack.c.l.s8.bf16 %v920
        %v1306 = vunpack.c.h.s8.bf16 %v914
        %v1307 = vunpack.c.h.s8.bf16 %v915
        %v1308 = vunpack.c.h.s8.bf16 %v916
        %v1309 = vunpack.c.h.s8.bf16 %v917
        %v1310 = vunpack.c.h.s8.bf16 %v918
        %v1311 = vunpack.c.h.s8.bf16 %v919
        %v1312 = vunpack.c.h.s8.bf16 %v920
        %v1313 = vunpack.c.l.s8.bf16 %v921
        %v1314 = vunpack.c.l.s8.bf16 %v922
        %v1315 = vunpack.c.l.s8.bf16 %v923
        %v1316 = vunpack.c.l.s8.bf16 %v924
        %v1317 = vunpack.c.l.s8.bf16 %v925
        %v1318 = vunpack.c.l.s8.bf16 %v926
        %v1319 = vunpack.c.l.s8.bf16 %v927
        %v1320 = vunpack.c.h.s8.bf16 %v921
        %v1321 = vunpack.c.h.s8.bf16 %v922
        %v1322 = vunpack.c.h.s8.bf16 %v923
        %v1323 = vunpack.c.h.s8.bf16 %v924
        %v1324 = vunpack.c.h.s8.bf16 %v925
        %v1325 = vunpack.c.h.s8.bf16 %v926
        %v1326 = vunpack.c.h.s8.bf16 %v927
        %v1327 = vunpack.c.l.s8.bf16 %v928
        %v1328 = vunpack.c.l.s8.bf16 %v929
        %v1329 = vunpack.c.l.s8.bf16 %v930
        %v1330 = vunpack.c.l.s8.bf16 %v931
        %v1331 = vunpack.c.l.s8.bf16 %v932
        %v1332 = vunpack.c.l.s8.bf16 %v933
        %v1333 = vunpack.c.l.s8.bf16 %v934
        %v1334 = vunpack.c.h.s8.bf16 %v928
        %v1335 = vunpack.c.h.s8.bf16 %v929
        %v1336 = vunpack.c.h.s8.bf16 %v930
        %v1337 = vunpack.c.h.s8.bf16 %v931
        %v1338 = vunpack.c.h.s8.bf16 %v932
        %v1339 = vunpack.c.h.s8.bf16 %v933
        %v1340 = vunpack.c.h.s8.bf16 %v934
        %v1341 = vunpack.c.l.s8.bf16 %v935
        %v1342 = vunpack.c.l.s8.bf16 %v936
        %v1343 = vunpack.c.l.s8.bf16 %v937
        %v1344 = vunpack.c.l.s8.bf16 %v938
        %v1345 = vunpack.c.l.s8.bf16 %v939
        %v1346 = vunpack.c.l.s8.bf16 %v940
        %v1347 = vunpack.c.l.s8.bf16 %v941
        %v1348 = vunpack.c.h.s8.bf16 %v935
        %v1349 = vunpack.c.h.s8.bf16 %v936
        %v1350 = vunpack.c.h.s8.bf16 %v937
        %v1351 = vunpack.c.h.s8.bf16 %v938
        %v1352 = vunpack.c.h.s8.bf16 %v939
        %v1353 = vunpack.c.h.s8.bf16 %v940
        %v1354 = vunpack.c.h.s8.bf16 %v941
        %v1355 = vunpack.c.l.s8.bf16 %v942
        %v1356 = vunpack.c.l.s8.bf16 %v943
        %v1357 = vunpack.c.l.s8.bf16 %v944
        %v1358 = vunpack.c.l.s8.bf16 %v945
        %v1359 = vunpack.c.l.s8.bf16 %v946
        %v1360 = vunpack.c.l.s8.bf16 %v947
        %v1361 = vunpack.c.l.s8.bf16 %v948
        %v1362 = vunpack.c.h.s8.bf16 %v942
        %v1363 = vunpack.c.h.s8.bf16 %v943
        %v1364 = vunpack.c.h.s8.bf16 %v944
        %v1365 = vunpack.c.h.s8.bf16 %v945
        %v1366 = vunpack.c.h.s8.bf16 %v946
        %v1367 = vunpack.c.h.s8.bf16 %v947
        %v1368 = vunpack.c.h.s8.bf16 %v948
        %v1369 = vunpack.c.l.s8.bf16 %v949
        %v1370 = vunpack.c.l.s8.bf16 %v950
        %v1371 = vunpack.c.l.s8.bf16 %v951
        %v1372 = vunpack.c.l.s8.bf16 %v952
        %v1373 = vunpack.c.l.s8.bf16 %v953
        %v1374 = vunpack.c.l.s8.bf16 %v954
        %v1375 = vunpack.c.l.s8.bf16 %v955
        %v1376 = vunpack.c.h.s8.bf16 %v949
        %v1377 = vunpack.c.h.s8.bf16 %v950
        %v1378 = vunpack.c.h.s8.bf16 %v951
        %v1379 = vunpack.c.h.s8.bf16 %v952
        %v1380 = vunpack.c.h.s8.bf16 %v953
        %v1381 = vunpack.c.h.s8.bf16 %v954
        %v1382 = vunpack.c.h.s8.bf16 %v955
        %v1383 = vunpack.c.l.s8.bf16 %v956
        %v1384 = vunpack.c.l.s8.bf16 %v957
        %v1385 = vunpack.c.l.s8.bf16 %v958
        %v1386 = vunpack.c.l.s8.bf16 %v959
        %v1387 = vunpack.c.l.s8.bf16 %v960
        %v1388 = vunpack.c.l.s8.bf16 %v961
        %v1389 = vunpack.c.l.s8.bf16 %v962
        %v1390 = vunpack.c.h.s8.bf16 %v956
        %v1391 = vunpack.c.h.s8.bf16 %v957
        %v1392 = vunpack.c.h.s8.bf16 %v958
        %v1393 = vunpack.c.h.s8.bf16 %v959
        %v1394 = vunpack.c.h.s8.bf16 %v960
        %v1395 = vunpack.c.h.s8.bf16 %v961
        %v1396 = vunpack.c.h.s8.bf16 %v962
        %v1397 = vunpack.c.l.s8.bf16 %v963
        %v1398 = vunpack.c.l.s8.bf16 %v964
        %v1399 = vunpack.c.l.s8.bf16 %v965
        %v1400 = vunpack.c.l.s8.bf16 %v966
        %v1401 = vunpack.c.l.s8.bf16 %v967
        %v1402 = vunpack.c.l.s8.bf16 %v968
        %v1403 = vunpack.c.l.s8.bf16 %v969
        %v1404 = vunpack.c.h.s8.bf16 %v963
        %v1405 = vunpack.c.h.s8.bf16 %v964
        %v1406 = vunpack.c.h.s8.bf16 %v965
        %v1407 = vunpack.c.h.s8.bf16 %v966
        %v1408 = vunpack.c.h.s8.bf16 %v967
        %v1409 = vunpack.c.h.s8.bf16 %v968
        %v1410 = vunpack.c.h.s8.bf16 %v969
        %v1411 = vunpack.c.l.s8.bf16 %v970
        %v1412 = vunpack.c.l.s8.bf16 %v971
        %v1413 = vunpack.c.l.s8.bf16 %v972
        %v1414 = vunpack.c.l.s8.bf16 %v973
        %v1415 = vunpack.c.l.s8.bf16 %v974
        %v1416 = vunpack.c.l.s8.bf16 %v975
        %v1417 = vunpack.c.l.s8.bf16 %v976
        %v1418 = vunpack.c.h.s8.bf16 %v970
        %v1419 = vunpack.c.h.s8.bf16 %v971
        %v1420 = vunpack.c.h.s8.bf16 %v972
        %v1421 = vunpack.c.h.s8.bf16 %v973
        %v1422 = vunpack.c.h.s8.bf16 %v974
        %v1423 = vunpack.c.h.s8.bf16 %v975
        %v1424 = vunpack.c.h.s8.bf16 %v976
        %1425 = vmatprep.subr.bf16.mxu0 %v978
        %1426 = vmatpush1.bf16.msra.mxu0 %v977
        %1427 = vmatprep.subr.bf16.mxu0 %v985
        %1428 = vmatpush1.bf16.msra.mxu0 %v984
        %1429 = vmatprep.subr.bf16.mxu0 %v992
        %1430 = vmatpush1.bf16.msra.mxu0 %v991
        %1431 = vmatprep.subr.bf16.mxu0 %v999
        %1432 = vmatpush1.bf16.msra.mxu0 %v998
        %1433 = vmatprep.subr.bf16.mxu0 %v1006
        %1434 = vmatpush1.bf16.msra.mxu0 %v1005
        %1435 = vmatprep.subr.bf16.mxu0 %v1013
        %1436 = vmatpush1.bf16.msra.mxu0 %v1012
        %1437 = vmatprep.subr.bf16.mxu0 %v1020
        %1438 = vmatpush1.bf16.msra.mxu0 %v1019
        %1439 = vmatprep.subr.bf16.mxu0 %v1027
        %1440 = vmatpush1.bf16.msra.mxu0 %v1026
        %1441 = vmatprep.subr.bf16.mxu0 %v1034
        %1442 = vmatpush1.bf16.msra.mxu0 %v1033
        %1443 = vmatprep.subr.bf16.mxu0 %v1041
        %1444 = vmatpush1.bf16.msra.mxu0 %v1040
        %1445 = vmatprep.subr.bf16.mxu0 %v1048
        %1446 = vmatpush1.bf16.msra.mxu0 %v1047
        %1447 = vmatprep.subr.bf16.mxu0 %v1055
        %1448 = vmatpush1.bf16.msra.mxu0 %v1054
        %1449 = vmatprep.subr.bf16.mxu0 %v1062
        %1450 = vmatpush1.bf16.msra.mxu0 %v1061
        %1451 = vmatprep.subr.bf16.mxu0 %v1069
        %1452 = vmatpush1.bf16.msra.mxu0 %v1068
        %1453 = vmatprep.subr.bf16.mxu0 %v1076
        %1454 = vmatpush1.bf16.msra.mxu0 %v1075
        %1455 = vmatprep.subr.bf16.mxu0 %v1083
        %1456 = vmatpush1.bf16.msra.mxu0 %v1082
        %1457 = vmatprep.mubr.bf16.mxu0 %v732
        %1458 = vmatmul.mubr.bf16.gmra.mrb[0].mxu0 %v731
        %v1459 = vpop.f32.mrb[0].mxu0
        %v1460 = vadd.f32 0.0, %v1459
        %v1461 = vpop.f32.mrb[0].mxu0
        %v1462 = vadd.f32 0.0, %v1461
        %v1463 = vpop.f32.mrb[0].mxu0
        %v1464 = vadd.f32 0.0, %v1463
        %v1465 = vpop.f32.mrb[0].mxu0
        %v1466 = vadd.f32 0.0, %v1465
        %1467 = vdwg.mxu0
        %1468 = vmatprep.subr.bf16.mxu0 %v1090
        %1469 = vmatpush1.bf16.msra.mxu0 %v1089
        %1470 = vmatprep.subr.bf16.mxu0 %v1097
        %1471 = vmatpush1.bf16.msra.mxu0 %v1096
        %1472 = vmatprep.subr.bf16.mxu0 %v1104
        %1473 = vmatpush1.bf16.msra.mxu0 %v1103
        %1474 = vmatprep.subr.bf16.mxu0 %v1111
        %1475 = vmatpush1.bf16.msra.mxu0 %v1110
        %1476 = vmatprep.subr.bf16.mxu0 %v1118
        %1477 = vmatpush1.bf16.msra.mxu0 %v1117
        %1478 = vmatprep.subr.bf16.mxu0 %v1125
        %1479 = vmatpush1.bf16.msra.mxu0 %v1124
        %1480 = vmatprep.subr.bf16.mxu0 %v1132
        %1481 = vmatpush1.bf16.msra.mxu0 %v1131
        %1482 = vmatprep.subr.bf16.mxu0 %v1139
        %1483 = vmatpush1.bf16.msra.mxu0 %v1138
        %1484 = vmatprep.subr.bf16.mxu0 %v1146
        %1485 = vmatpush1.bf16.msra.mxu0 %v1145
        %1486 = vmatprep.subr.bf16.mxu0 %v1153
        %1487 = vmatpush1.bf16.msra.mxu0 %v1152
        %1488 = vmatprep.subr.bf16.mxu0 %v1160
        %1489 = vmatpush1.bf16.msra.mxu0 %v1159
        %1490 = vmatprep.subr.bf16.mxu0 %v1167
        %1491 = vmatpush1.bf16.msra.mxu0 %v1166
        %1492 = vmatprep.subr.bf16.mxu0 %v1174
        %1493 = vmatpush1.bf16.msra.mxu0 %v1173
        %1494 = vmatprep.subr.bf16.mxu0 %v1181
        %1495 = vmatpush1.bf16.msra.mxu0 %v1180
        %1496 = vmatprep.subr.bf16.mxu0 %v1188
        %1497 = vmatpush1.bf16.msra.mxu0 %v1187
        %1498 = vmatprep.subr.bf16.mxu0 %v1195
        %1499 = vmatpush1.bf16.msra.mxu0 %v1194
        %1500 = vmatprep.mubr.bf16.mxu0 %v734
        %1501 = vmatmul.mubr.bf16.gmra.mrb[0].mxu0 %v733
        %v1502 = vpop.f32.mrb[0].mxu0
        %v1503 = vadd.f32 %v1460, %v1502
        %v1504 = vpop.f32.mrb[0].mxu0
        %v1505 = vadd.f32 %v1462, %v1504
        %v1506 = vpop.f32.mrb[0].mxu0
        %v1507 = vadd.f32 %v1464, %v1506
        %v1508 = vpop.f32.mrb[0].mxu0
        %v1509 = vadd.f32 %v1466, %v1508
        %1510 = vdwg.mxu0
        %1511 = vmatprep.subr.bf16.mxu0 %v1202
        %1512 = vmatpush1.bf16.msra.mxu0 %v1201
        %1513 = vmatprep.subr.bf16.mxu0 %v1209
        %1514 = vmatpush1.bf16.msra.mxu0 %v1208
        %1515 = vmatprep.subr.bf16.mxu0 %v1216
        %1516 = vmatpush1.bf16.msra.mxu0 %v1215
        %1517 = vmatprep.subr.bf16.mxu0 %v1223
        %1518 = vmatpush1.bf16.msra.mxu0 %v1222
        %1519 = vmatprep.subr.bf16.mxu0 %v1230
        %1520 = vmatpush1.bf16.msra.mxu0 %v1229
        %1521 = vmatprep.subr.bf16.mxu0 %v1237
        %1522 = vmatpush1.bf16.msra.mxu0 %v1236
        %1523 = vmatprep.subr.bf16.mxu0 %v1244
        %1524 = vmatpush1.bf16.msra.mxu0 %v1243
        %1525 = vmatprep.subr.bf16.mxu0 %v1251
        %1526 = vmatpush1.bf16.msra.mxu0 %v1250
        %1527 = vmatprep.subr.bf16.mxu0 %v1258
        %1528 = vmatpush1.bf16.msra.mxu0 %v1257
        %1529 = vmatprep.subr.bf16.mxu0 %v1265
        %1530 = vmatpush1.bf16.msra.mxu0 %v1264
        %1531 = vmatprep.subr.bf16.mxu0 %v1272
        %1532 = vmatpush1.bf16.msra.mxu0 %v1271
        %1533 = vmatprep.subr.bf16.mxu0 %v1279
        %1534 = vmatpush1.bf16.msra.mxu0 %v1278
        %1535 = vmatprep.subr.bf16.mxu0 %v1286
        %1536 = vmatpush1.bf16.msra.mxu0 %v1285
        %1537 = vmatprep.subr.bf16.mxu0 %v1293
        %1538 = vmatpush1.bf16.msra.mxu0 %v1292
        %1539 = vmatprep.subr.bf16.mxu0 %v1300
        %1540 = vmatpush1.bf16.msra.mxu0 %v1299
        %1541 = vmatprep.subr.bf16.mxu0 %v1307
        %1542 = vmatpush1.bf16.msra.mxu0 %v1306
        %1543 = vmatprep.mubr.bf16.mxu0 %v736
        %1544 = vmatmul.mubr.bf16.gmra.mrb[0].mxu0 %v735
        %v1545 = vpop.f32.mrb[0].mxu0
        %v1546 = vadd.f32 %v1503, %v1545
        %v1547 = vpop.f32.mrb[0].mxu0
        %v1548 = vadd.f32 %v1505, %v1547
        %v1549 = vpop.f32.mrb[0].mxu0
        %v1550 = vadd.f32 %v1507, %v1549
        %v1551 = vpop.f32.mrb[0].mxu0
        %v1552 = vadd.f32 %v1509, %v1551
        %1553 = vdwg.mxu0
        %1554 = vmatprep.subr.bf16.mxu0 %v1314
        %1555 = vmatpush1.bf16.msra.mxu0 %v1313
        %1556 = vmatprep.subr.bf16.mxu0 %v1321
        %1557 = vmatpush1.bf16.msra.mxu0 %v1320
        %1558 = vmatprep.subr.bf16.mxu0 %v1328
        %1559 = vmatpush1.bf16.msra.mxu0 %v1327
        %1560 = vmatprep.subr.bf16.mxu0 %v1335
        %1561 = vmatpush1.bf16.msra.mxu0 %v1334
        %1562 = vmatprep.subr.bf16.mxu0 %v1342
        %1563 = vmatpush1.bf16.msra.mxu0 %v1341
        %1564 = vmatprep.subr.bf16.mxu0 %v1349
        %1565 = vmatpush1.bf16.msra.mxu0 %v1348
        %1566 = vmatprep.subr.bf16.mxu0 %v1356
        %1567 = vmatpush1.bf16.msra.mxu0 %v1355
        %1568 = vmatprep.subr.bf16.mxu0 %v1363
        %1569 = vmatpush1.bf16.msra.mxu0 %v1362
        %1570 = vmatprep.subr.bf16.mxu0 %v1370
        %1571 = vmatpush1.bf16.msra.mxu0 %v1369
        %1572 = vmatprep.subr.bf16.mxu0 %v1377
        %1573 = vmatpush1.bf16.msra.mxu0 %v1376
        %1574 = vmatprep.subr.bf16.mxu0 %v1384
        %1575 = vmatpush1.bf16.msra.mxu0 %v1383
        %1576 = vmatprep.subr.bf16.mxu0 %v1391
        %1577 = vmatpush1.bf16.msra.mxu0 %v1390
        %1578 = vmatprep.subr.bf16.mxu0 %v1398
        %1579 = vmatpush1.bf16.msra.mxu0 %v1397
        %1580 = vmatprep.subr.bf16.mxu0 %v1405
        %1581 = vmatpush1.bf16.msra.mxu0 %v1404
        %1582 = vmatprep.subr.bf16.mxu0 %v1412
        %1583 = vmatpush1.bf16.msra.mxu0 %v1411
        %1584 = vmatprep.subr.bf16.mxu0 %v1419
        %1585 = vmatpush1.bf16.msra.mxu0 %v1418
        %1586 = vmatprep.mubr.bf16.mxu0 %v738
        %1587 = vmatmul.mubr.bf16.gmra.mrb[0].mxu0 %v737
        %v1588 = vpop.f32.mrb[0].mxu0
        %v1589 = vadd.f32 %v1546, %v1588
        %v1590 = vpop.f32.mrb[0].mxu0
        %v1591 = vadd.f32 %v1548, %v1590
        %v1592 = vpop.f32.mrb[0].mxu0
        %v1593 = vadd.f32 %v1550, %v1592
        %v1594 = vpop.f32.mrb[0].mxu0
        %v1595 = vadd.f32 %v1552, %v1594
        %1596 = vdwg.mxu0
        %1597 = vmatprep.subr.bf16.mxu0 %v980
        %1598 = vmatpush1.bf16.msra.mxu0 %v979
        %1599 = vmatprep.subr.bf16.mxu0 %v987
        %1600 = vmatpush1.bf16.msra.mxu0 %v986
        %1601 = vmatprep.subr.bf16.mxu0 %v994
        %1602 = vmatpush1.bf16.msra.mxu0 %v993
        %1603 = vmatprep.subr.bf16.mxu0 %v1001
        %1604 = vmatpush1.bf16.msra.mxu0 %v1000
        %1605 = vmatprep.subr.bf16.mxu0 %v1008
        %1606 = vmatpush1.bf16.msra.mxu0 %v1007
        %1607 = vmatprep.subr.bf16.mxu0 %v1015
        %1608 = vmatpush1.bf16.msra.mxu0 %v1014
        %1609 = vmatprep.subr.bf16.mxu0 %v1022
        %1610 = vmatpush1.bf16.msra.mxu0 %v1021
        %1611 = vmatprep.subr.bf16.mxu0 %v1029
        %1612 = vmatpush1.bf16.msra.mxu0 %v1028
        %1613 = vmatprep.subr.bf16.mxu0 %v1036
        %1614 = vmatpush1.bf16.msra.mxu0 %v1035
        %1615 = vmatprep.subr.bf16.mxu0 %v1043
        %1616 = vmatpush1.bf16.msra.mxu0 %v1042
        %1617 = vmatprep.subr.bf16.mxu0 %v1050
        %1618 = vmatpush1.bf16.msra.mxu0 %v1049
        %1619 = vmatprep.subr.bf16.mxu0 %v1057
        %1620 = vmatpush1.bf16.msra.mxu0 %v1056
        %1621 = vmatprep.subr.bf16.mxu0 %v1064
        %1622 = vmatpush1.bf16.msra.mxu0 %v1063
        %1623 = vmatprep.subr.bf16.mxu0 %v1071
        %1624 = vmatpush1.bf16.msra.mxu0 %v1070
        %1625 = vmatprep.subr.bf16.mxu0 %v1078
        %1626 = vmatpush1.bf16.msra.mxu0 %v1077
        %1627 = vmatprep.subr.bf16.mxu0 %v1085
        %1628 = vmatpush1.bf16.msra.mxu0 %v1084
        %1629 = vmatprep.mubr.bf16.mxu0 %v732
        %1630 = vmatmul.mubr.bf16.gmra.mrb[0].mxu0 %v731
        %v1631 = vpop.f32.mrb[0].mxu0
        %v1632 = vadd.f32 0.0, %v1631
        %v1633 = vpop.f32.mrb[0].mxu0
        %v1634 = vadd.f32 0.0, %v1633
        %v1635 = vpop.f32.mrb[0].mxu0
        %v1636 = vadd.f32 0.0, %v1635
        %v1637 = vpop.f32.mrb[0].mxu0
        %v1638 = vadd.f32 0.0, %v1637
        %1639 = vdwg.mxu0
        %1640 = vmatprep.subr.bf16.mxu0 %v1092
        %1641 = vmatpush1.bf16.msra.mxu0 %v1091
        %1642 = vmatprep.subr.bf16.mxu0 %v1099
        %1643 = vmatpush1.bf16.msra.mxu0 %v1098
        %1644 = vmatprep.subr.bf16.mxu0 %v1106
        %1645 = vmatpush1.bf16.msra.mxu0 %v1105
        %1646 = vmatprep.subr.bf16.mxu0 %v1113
        %1647 = vmatpush1.bf16.msra.mxu0 %v1112
        %1648 = vmatprep.subr.bf16.mxu0 %v1120
        %1649 = vmatpush1.bf16.msra.mxu0 %v1119
        %1650 = vmatprep.subr.bf16.mxu0 %v1127
        %1651 = vmatpush1.bf16.msra.mxu0 %v1126
        %1652 = vmatprep.subr.bf16.mxu0 %v1134
        %1653 = vmatpush1.bf16.msra.mxu0 %v1133
        %1654 = vmatprep.subr.bf16.mxu0 %v1141
        %1655 = vmatpush1.bf16.msra.mxu0 %v1140
        %1656 = vmatprep.subr.bf16.mxu0 %v1148
        %1657 = vmatpush1.bf16.msra.mxu0 %v1147
        %1658 = vmatprep.subr.bf16.mxu0 %v1155
        %1659 = vmatpush1.bf16.msra.mxu0 %v1154
        %1660 = vmatprep.subr.bf16.mxu0 %v1162
        %1661 = vmatpush1.bf16.msra.mxu0 %v1161
        %1662 = vmatprep.subr.bf16.mxu0 %v1169
        %1663 = vmatpush1.bf16.msra.mxu0 %v1168
        %1664 = vmatprep.subr.bf16.mxu0 %v1176
        %1665 = vmatpush1.bf16.msra.mxu0 %v1175
        %1666 = vmatprep.subr.bf16.mxu0 %v1183
        %1667 = vmatpush1.bf16.msra.mxu0 %v1182
        %1668 = vmatprep.subr.bf16.mxu0 %v1190
        %1669 = vmatpush1.bf16.msra.mxu0 %v1189
        %1670 = vmatprep.subr.bf16.mxu0 %v1197
        %1671 = vmatpush1.bf16.msra.mxu0 %v1196
        %1672 = vmatprep.mubr.bf16.mxu0 %v734
        %1673 = vmatmul.mubr.bf16.gmra.mrb[0].mxu0 %v733
        %v1674 = vpop.f32.mrb[0].mxu0
        %v1675 = vadd.f32 %v1632, %v1674
        %v1676 = vpop.f32.mrb[0].mxu0
        %v1677 = vadd.f32 %v1634, %v1676
        %v1678 = vpop.f32.mrb[0].mxu0
        %v1679 = vadd.f32 %v1636, %v1678
        %v1680 = vpop.f32.mrb[0].mxu0
        %v1681 = vadd.f32 %v1638, %v1680
        %1682 = vdwg.mxu0
        %1683 = vmatprep.subr.bf16.mxu0 %v1204
        %1684 = vmatpush1.bf16.msra.mxu0 %v1203
        %1685 = vmatprep.subr.bf16.mxu0 %v1211
        %1686 = vmatpush1.bf16.msra.mxu0 %v1210
        %1687 = vmatprep.subr.bf16.mxu0 %v1218
        %1688 = vmatpush1.bf16.msra.mxu0 %v1217
        %1689 = vmatprep.subr.bf16.mxu0 %v1225
        %1690 = vmatpush1.bf16.msra.mxu0 %v1224
        %1691 = vmatprep.subr.bf16.mxu0 %v1232
        %1692 = vmatpush1.bf16.msra.mxu0 %v1231
        %1693 = vmatprep.subr.bf16.mxu0 %v1239
        %1694 = vmatpush1.bf16.msra.mxu0 %v1238
        %1695 = vmatprep.subr.bf16.mxu0 %v1246
        %1696 = vmatpush1.bf16.msra.mxu0 %v1245
        %1697 = vmatprep.subr.bf16.mxu0 %v1253
        %1698 = vmatpush1.bf16.msra.mxu0 %v1252
        %1699 = vmatprep.subr.bf16.mxu0 %v1260
        %1700 = vmatpush1.bf16.msra.mxu0 %v1259
        %1701 = vmatprep.subr.bf16.mxu0 %v1267
        %1702 = vmatpush1.bf16.msra.mxu0 %v1266
        %1703 = vmatprep.subr.bf16.mxu0 %v1274
        %1704 = vmatpush1.bf16.msra.mxu0 %v1273
        %1705 = vmatprep.subr.bf16.mxu0 %v1281
        %1706 = vmatpush1.bf16.msra.mxu0 %v1280
        %1707 = vmatprep.subr.bf16.mxu0 %v1288
        %1708 = vmatpush1.bf16.msra.mxu0 %v1287
        %1709 = vmatprep.subr.bf16.mxu0 %v1295
        %1710 = vmatpush1.bf16.msra.mxu0 %v1294
        %1711 = vmatprep.subr.bf16.mxu0 %v1302
        %1712 = vmatpush1.bf16.msra.mxu0 %v1301
        %1713 = vmatprep.subr.bf16.mxu0 %v1309
        %1714 = vmatpush1.bf16.msra.mxu0 %v1308
        %1715 = vmatprep.mubr.bf16.mxu0 %v736
        %1716 = vmatmul.mubr.bf16.gmra.mrb[0].mxu0 %v735
        %v1717 = vpop.f32.mrb[0].mxu0
        %v1718 = vadd.f32 %v1675, %v1717
        %v1719 = vpop.f32.mrb[0].mxu0
        %v1720 = vadd.f32 %v1677, %v1719
        %v1721 = vpop.f32.mrb[0].mxu0
        %v1722 = vadd.f32 %v1679, %v1721
        %v1723 = vpop.f32.mrb[0].mxu0
        %v1724 = vadd.f32 %v1681, %v1723
        %1725 = vdwg.mxu0
        %1726 = vmatprep.subr.bf16.mxu0 %v1316
        %1727 = vmatpush1.bf16.msra.mxu0 %v1315
        %1728 = vmatprep.subr.bf16.mxu0 %v1323
        %1729 = vmatpush1.bf16.msra.mxu0 %v1322
        %1730 = vmatprep.subr.bf16.mxu0 %v1330
        %1731 = vmatpush1.bf16.msra.mxu0 %v1329
        %1732 = vmatprep.subr.bf16.mxu0 %v1337
        %1733 = vmatpush1.bf16.msra.mxu0 %v1336
        %1734 = vmatprep.subr.bf16.mxu0 %v1344
        %1735 = vmatpush1.bf16.msra.mxu0 %v1343
        %1736 = vmatprep.subr.bf16.mxu0 %v1351
        %1737 = vmatpush1.bf16.msra.mxu0 %v1350
        %1738 = vmatprep.subr.bf16.mxu0 %v1358
        %1739 = vmatpush1.bf16.msra.mxu0 %v1357
        %1740 = vmatprep.subr.bf16.mxu0 %v1365
        %1741 = vmatpush1.bf16.msra.mxu0 %v1364
        %1742 = vmatprep.subr.bf16.mxu0 %v1372
        %1743 = vmatpush1.bf16.msra.mxu0 %v1371
        %1744 = vmatprep.subr.bf16.mxu0 %v1379
        %1745 = vmatpush1.bf16.msra.mxu0 %v1378
        %1746 = vmatprep.subr.bf16.mxu0 %v1386
        %1747 = vmatpush1.bf16.msra.mxu0 %v1385
        %1748 = vmatprep.subr.bf16.mxu0 %v1393
        %1749 = vmatpush1.bf16.msra.mxu0 %v1392
        %1750 = vmatprep.subr.bf16.mxu0 %v1400
        %1751 = vmatpush1.bf16.msra.mxu0 %v1399
        %1752 = vmatprep.subr.bf16.mxu0 %v1407
        %1753 = vmatpush1.bf16.msra.mxu0 %v1406
        %1754 = vmatprep.subr.bf16.mxu0 %v1414
        %1755 = vmatpush1.bf16.msra.mxu0 %v1413
        %1756 = vmatprep.subr.bf16.mxu0 %v1421
        %1757 = vmatpush1.bf16.msra.mxu0 %v1420
        %1758 = vmatprep.mubr.bf16.mxu0 %v738
        %1759 = vmatmul.mubr.bf16.gmra.mrb[0].mxu0 %v737
        %v1760 = vpop.f32.mrb[0].mxu0
        %v1761 = vadd.f32 %v1718, %v1760
        %v1762 = vpop.f32.mrb[0].mxu0
        %v1763 = vadd.f32 %v1720, %v1762
        %v1764 = vpop.f32.mrb[0].mxu0
        %v1765 = vadd.f32 %v1722, %v1764
        %v1766 = vpop.f32.mrb[0].mxu0
        %v1767 = vadd.f32 %v1724, %v1766
        %1768 = vdwg.mxu0
        %1769 = vmatprep.subr.bf16.mxu0 %v982
        %1770 = vmatpush1.bf16.msra.mxu0 %v981
        %1771 = vmatprep.subr.bf16.mxu0 %v989
        %1772 = vmatpush1.bf16.msra.mxu0 %v988
        %1773 = vmatprep.subr.bf16.mxu0 %v996
        %1774 = vmatpush1.bf16.msra.mxu0 %v995
        %1775 = vmatprep.subr.bf16.mxu0 %v1003
        %1776 = vmatpush1.bf16.msra.mxu0 %v1002
        %1777 = vmatprep.subr.bf16.mxu0 %v1010
        %1778 = vmatpush1.bf16.msra.mxu0 %v1009
        %1779 = vmatprep.subr.bf16.mxu0 %v1017
        %1780 = vmatpush1.bf16.msra.mxu0 %v1016
        %1781 = vmatprep.subr.bf16.mxu0 %v1024
        %1782 = vmatpush1.bf16.msra.mxu0 %v1023
        %1783 = vmatprep.subr.bf16.mxu0 %v1031
        %1784 = vmatpush1.bf16.msra.mxu0 %v1030
        %1785 = vmatprep.subr.bf16.mxu0 %v1038
        %1786 = vmatpush1.bf16.msra.mxu0 %v1037
        %1787 = vmatprep.subr.bf16.mxu0 %v1045
        %1788 = vmatpush1.bf16.msra.mxu0 %v1044
        %1789 = vmatprep.subr.bf16.mxu0 %v1052
        %1790 = vmatpush1.bf16.msra.mxu0 %v1051
        %1791 = vmatprep.subr.bf16.mxu0 %v1059
        %1792 = vmatpush1.bf16.msra.mxu0 %v1058
        %1793 = vmatprep.subr.bf16.mxu0 %v1066
        %1794 = vmatpush1.bf16.msra.mxu0 %v1065
        %1795 = vmatprep.subr.bf16.mxu0 %v1073
        %1796 = vmatpush1.bf16.msra.mxu0 %v1072
        %1797 = vmatprep.subr.bf16.mxu0 %v1080
        %1798 = vmatpush1.bf16.msra.mxu0 %v1079
        %1799 = vmatprep.subr.bf16.mxu0 %v1087
        %1800 = vmatpush1.bf16.msra.mxu0 %v1086
        %1801 = vmatprep.mubr.bf16.mxu0 %v732
        %1802 = vmatmul.mubr.bf16.gmra.mrb[0].mxu0 %v731
        %v1803 = vpop.f32.mrb[0].mxu0
        %v1804 = vadd.f32 0.0, %v1803
        %v1805 = vpop.f32.mrb[0].mxu0
        %v1806 = vadd.f32 0.0, %v1805
        %v1807 = vpop.f32.mrb[0].mxu0
        %v1808 = vadd.f32 0.0, %v1807
        %v1809 = vpop.f32.mrb[0].mxu0
        %v1810 = vadd.f32 0.0, %v1809
        %1811 = vdwg.mxu0
        %1812 = vmatprep.subr.bf16.mxu0 %v1094
        %1813 = vmatpush1.bf16.msra.mxu0 %v1093
        %1814 = vmatprep.subr.bf16.mxu0 %v1101
        %1815 = vmatpush1.bf16.msra.mxu0 %v1100
        %1816 = vmatprep.subr.bf16.mxu0 %v1108
        %1817 = vmatpush1.bf16.msra.mxu0 %v1107
        %1818 = vmatprep.subr.bf16.mxu0 %v1115
        %1819 = vmatpush1.bf16.msra.mxu0 %v1114
        %1820 = vmatprep.subr.bf16.mxu0 %v1122
        %1821 = vmatpush1.bf16.msra.mxu0 %v1121
        %1822 = vmatprep.subr.bf16.mxu0 %v1129
        %1823 = vmatpush1.bf16.msra.mxu0 %v1128
        %1824 = vmatprep.subr.bf16.mxu0 %v1136
        %1825 = vmatpush1.bf16.msra.mxu0 %v1135
        %1826 = vmatprep.subr.bf16.mxu0 %v1143
        %1827 = vmatpush1.bf16.msra.mxu0 %v1142
        %1828 = vmatprep.subr.bf16.mxu0 %v1150
        %1829 = vmatpush1.bf16.msra.mxu0 %v1149
        %1830 = vmatprep.subr.bf16.mxu0 %v1157
        %1831 = vmatpush1.bf16.msra.mxu0 %v1156
        %1832 = vmatprep.subr.bf16.mxu0 %v1164
        %1833 = vmatpush1.bf16.msra.mxu0 %v1163
        %1834 = vmatprep.subr.bf16.mxu0 %v1171
        %1835 = vmatpush1.bf16.msra.mxu0 %v1170
        %1836 = vmatprep.subr.bf16.mxu0 %v1178
        %1837 = vmatpush1.bf16.msra.mxu0 %v1177
        %1838 = vmatprep.subr.bf16.mxu0 %v1185
        %1839 = vmatpush1.bf16.msra.mxu0 %v1184
        %1840 = vmatprep.subr.bf16.mxu0 %v1192
        %1841 = vmatpush1.bf16.msra.mxu0 %v1191
        %1842 = vmatprep.subr.bf16.mxu0 %v1199
        %1843 = vmatpush1.bf16.msra.mxu0 %v1198
        %1844 = vmatprep.mubr.bf16.mxu0 %v734
        %1845 = vmatmul.mubr.bf16.gmra.mrb[0].mxu0 %v733
        %v1846 = vpop.f32.mrb[0].mxu0
        %v1847 = vadd.f32 %v1804, %v1846
        %v1848 = vpop.f32.mrb[0].mxu0
        %v1849 = vadd.f32 %v1806, %v1848
        %v1850 = vpop.f32.mrb[0].mxu0
        %v1851 = vadd.f32 %v1808, %v1850
        %v1852 = vpop.f32.mrb[0].mxu0
        %v1853 = vadd.f32 %v1810, %v1852
        %1854 = vdwg.mxu0
        %1855 = vmatprep.subr.bf16.mxu0 %v1206
        %1856 = vmatpush1.bf16.msra.mxu0 %v1205
        %1857 = vmatprep.subr.bf16.mxu0 %v1213
        %1858 = vmatpush1.bf16.msra.mxu0 %v1212
        %1859 = vmatprep.subr.bf16.mxu0 %v1220
        %1860 = vmatpush1.bf16.msra.mxu0 %v1219
        %1861 = vmatprep.subr.bf16.mxu0 %v1227
        %1862 = vmatpush1.bf16.msra.mxu0 %v1226
        %1863 = vmatprep.subr.bf16.mxu0 %v1234
        %1864 = vmatpush1.bf16.msra.mxu0 %v1233
        %1865 = vmatprep.subr.bf16.mxu0 %v1241
        %1866 = vmatpush1.bf16.msra.mxu0 %v1240
        %1867 = vmatprep.subr.bf16.mxu0 %v1248
        %1868 = vmatpush1.bf16.msra.mxu0 %v1247
        %1869 = vmatprep.subr.bf16.mxu0 %v1255
        %1870 = vmatpush1.bf16.msra.mxu0 %v1254
        %1871 = vmatprep.subr.bf16.mxu0 %v1262
        %1872 = vmatpush1.bf16.msra.mxu0 %v1261
        %1873 = vmatprep.subr.bf16.mxu0 %v1269
        %1874 = vmatpush1.bf16.msra.mxu0 %v1268
        %1875 = vmatprep.subr.bf16.mxu0 %v1276
        %1876 = vmatpush1.bf16.msra.mxu0 %v1275
        %1877 = vmatprep.subr.bf16.mxu0 %v1283
        %1878 = vmatpush1.bf16.msra.mxu0 %v1282
        %1879 = vmatprep.subr.bf16.mxu0 %v1290
        %1880 = vmatpush1.bf16.msra.mxu0 %v1289
        %1881 = vmatprep.subr.bf16.mxu0 %v1297
        %1882 = vmatpush1.bf16.msra.mxu0 %v1296
        %1883 = vmatprep.subr.bf16.mxu0 %v1304
        %1884 = vmatpush1.bf16.msra.mxu0 %v1303
        %1885 = vmatprep.subr.bf16.mxu0 %v1311
        %1886 = vmatpush1.bf16.msra.mxu0 %v1310
        %1887 = vmatprep.mubr.bf16.mxu0 %v736
        %1888 = vmatmul.mubr.bf16.gmra.mrb[0].mxu0 %v735
        %v1889 = vpop.f32.mrb[0].mxu0
        %v1890 = vadd.f32 %v1847, %v1889
        %v1891 = vpop.f32.mrb[0].mxu0
        %v1892 = vadd.f32 %v1849, %v1891
        %v1893 = vpop.f32.mrb[0].mxu0
        %v1894 = vadd.f32 %v1851, %v1893
        %v1895 = vpop.f32.mrb[0].mxu0
        %v1896 = vadd.f32 %v1853, %v1895
        %1897 = vdwg.mxu0
        %1898 = vmatprep.subr.bf16.mxu0 %v1318
        %1899 = vmatpush1.bf16.msra.mxu0 %v1317
        %1900 = vmatprep.subr.bf16.mxu0 %v1325
        %1901 = vmatpush1.bf16.msra.mxu0 %v1324
        %1902 = vmatprep.subr.bf16.mxu0 %v1332
        %1903 = vmatpush1.bf16.msra.mxu0 %v1331
        %1904 = vmatprep.subr.bf16.mxu0 %v1339
        %1905 = vmatpush1.bf16.msra.mxu0 %v1338
        %1906 = vmatprep.subr.bf16.mxu0 %v1346
        %1907 = vmatpush1.bf16.msra.mxu0 %v1345
        %1908 = vmatprep.subr.bf16.mxu0 %v1353
        %1909 = vmatpush1.bf16.msra.mxu0 %v1352
        %1910 = vmatprep.subr.bf16.mxu0 %v1360
        %1911 = vmatpush1.bf16.msra.mxu0 %v1359
        %1912 = vmatprep.subr.bf16.mxu0 %v1367
        %1913 = vmatpush1.bf16.msra.mxu0 %v1366
        %1914 = vmatprep.subr.bf16.mxu0 %v1374
        %1915 = vmatpush1.bf16.msra.mxu0 %v1373
        %1916 = vmatprep.subr.bf16.mxu0 %v1381
        %1917 = vmatpush1.bf16.msra.mxu0 %v1380
        %1918 = vmatprep.subr.bf16.mxu0 %v1388
        %1919 = vmatpush1.bf16.msra.mxu0 %v1387
        %1920 = vmatprep.subr.bf16.mxu0 %v1395
        %1921 = vmatpush1.bf16.msra.mxu0 %v1394
        %1922 = vmatprep.subr.bf16.mxu0 %v1402
        %1923 = vmatpush1.bf16.msra.mxu0 %v1401
        %1924 = vmatprep.subr.bf16.mxu0 %v1409
        %1925 = vmatpush1.bf16.msra.mxu0 %v1408
        %1926 = vmatprep.subr.bf16.mxu0 %v1416
        %1927 = vmatpush1.bf16.msra.mxu0 %v1415
        %1928 = vmatprep.subr.bf16.mxu0 %v1423
        %1929 = vmatpush1.bf16.msra.mxu0 %v1422
        %1930 = vmatprep.mubr.bf16.mxu0 %v738
        %1931 = vmatmul.mubr.bf16.gmra.mrb[0].mxu0 %v737
        %v1932 = vpop.f32.mrb[0].mxu0
        %v1933 = vadd.f32 %v1890, %v1932
        %v1934 = vpop.f32.mrb[0].mxu0
        %v1935 = vadd.f32 %v1892, %v1934
        %v1936 = vpop.f32.mrb[0].mxu0
        %v1937 = vadd.f32 %v1894, %v1936
        %v1938 = vpop.f32.mrb[0].mxu0
        %v1939 = vadd.f32 %v1896, %v1938
        %1940 = vdwg.mxu0
        %1941 = vmatprep.subr.bf16.mxu0 0
        %1942 = vmatpush1.bf16.msra.mxu0 %v983
        %1943 = vmatprep.subr.bf16.mxu0 0
        %1944 = vmatpush1.bf16.msra.mxu0 %v990
        %1945 = vmatprep.subr.bf16.mxu0 0
        %1946 = vmatpush1.bf16.msra.mxu0 %v997
        %1947 = vmatprep.subr.bf16.mxu0 0
        %1948 = vmatpush1.bf16.msra.mxu0 %v1004
        %1949 = vmatprep.subr.bf16.mxu0 0
        %1950 = vmatpush1.bf16.msra.mxu0 %v1011
        %1951 = vmatprep.subr.bf16.mxu0 0
        %1952 = vmatpush1.bf16.msra.mxu0 %v1018
        %1953 = vmatprep.subr.bf16.mxu0 0
        %1954 = vmatpush1.bf16.msra.mxu0 %v1025
        %1955 = vmatprep.subr.bf16.mxu0 0
        %1956 = vmatpush1.bf16.msra.mxu0 %v1032
        %1957 = vmatprep.subr.bf16.mxu0 0
        %1958 = vmatpush1.bf16.msra.mxu0 %v1039
        %1959 = vmatprep.subr.bf16.mxu0 0
        %1960 = vmatpush1.bf16.msra.mxu0 %v1046
        %1961 = vmatprep.subr.bf16.mxu0 0
        %1962 = vmatpush1.bf16.msra.mxu0 %v1053
        %1963 = vmatprep.subr.bf16.mxu0 0
        %1964 = vmatpush1.bf16.msra.mxu0 %v1060
        %1965 = vmatprep.subr.bf16.mxu0 0
        %1966 = vmatpush1.bf16.msra.mxu0 %v1067
        %1967 = vmatprep.subr.bf16.mxu0 0
        %1968 = vmatpush1.bf16.msra.mxu0 %v1074
        %1969 = vmatprep.subr.bf16.mxu0 0
        %1970 = vmatpush1.bf16.msra.mxu0 %v1081
        %1971 = vmatprep.subr.bf16.mxu0 0
        %1972 = vmatpush1.bf16.msra.mxu0 %v1088
        %1973 = vmatprep.mubr.bf16.mxu0 %v732
        %1974 = vmatmul.mubr.bf16.gmra.mrb[0].mxu0 %v731
        %v1975 = vpop.f32.mrb[0].mxu0
        %v1976 = vadd.f32 0.0, %v1975
        %v1977 = vpop.f32.mrb[0].mxu0
        %v1978 = vpop.f32.mrb[0].mxu0
        %v1979 = vadd.f32 0.0, %v1978
        %v1980 = vpop.f32.mrb[0].mxu0
        %1981 = vdwg.mxu0
        %1982 = vmatprep.subr.bf16.mxu0 0
        %1983 = vmatpush1.bf16.msra.mxu0 %v1095
        %1984 = vmatprep.subr.bf16.mxu0 0
        %1985 = vmatpush1.bf16.msra.mxu0 %v1102
        %1986 = vmatprep.subr.bf16.mxu0 0
        %1987 = vmatpush1.bf16.msra.mxu0 %v1109
        %1988 = vmatprep.subr.bf16.mxu0 0
        %1989 = vmatpush1.bf16.msra.mxu0 %v1116
        %1990 = vmatprep.subr.bf16.mxu0 0
        %1991 = vmatpush1.bf16.msra.mxu0 %v1123
        %1992 = vmatprep.subr.bf16.mxu0 0
        %1993 = vmatpush1.bf16.msra.mxu0 %v1130
        %1994 = vmatprep.subr.bf16.mxu0 0
        %1995 = vmatpush1.bf16.msra.mxu0 %v1137
        %1996 = vmatprep.subr.bf16.mxu0 0
        %1997 = vmatpush1.bf16.msra.mxu0 %v1144
        %1998 = vmatprep.subr.bf16.mxu0 0
        %1999 = vmatpush1.bf16.msra.mxu0 %v1151
        %2000 = vmatprep.subr.bf16.mxu0 0
        %2001 = vmatpush1.bf16.msra.mxu0 %v1158
        %2002 = vmatprep.subr.bf16.mxu0 0
        %2003 = vmatpush1.bf16.msra.mxu0 %v1165
        %2004 = vmatprep.subr.bf16.mxu0 0
        %2005 = vmatpush1.bf16.msra.mxu0 %v1172
        %2006 = vmatprep.subr.bf16.mxu0 0
        %2007 = vmatpush1.bf16.msra.mxu0 %v1179
        %2008 = vmatprep.subr.bf16.mxu0 0
        %2009 = vmatpush1.bf16.msra.mxu0 %v1186
        %2010 = vmatprep.subr.bf16.mxu0 0
        %2011 = vmatpush1.bf16.msra.mxu0 %v1193
        %2012 = vmatprep.subr.bf16.mxu0 0
        %2013 = vmatpush1.bf16.msra.mxu0 %v1200
        %2014 = vmatprep.mubr.bf16.mxu0 %v734
        %2015 = vmatmul.mubr.bf16.gmra.mrb[0].mxu0 %v733
        %v2016 = vpop.f32.mrb[0].mxu0
        %v2017 = vadd.f32 %v1976, %v2016
        %v2018 = vpop.f32.mrb[0].mxu0
        %v2019 = vpop.f32.mrb[0].mxu0
        %v2020 = vadd.f32 %v1979, %v2019
        %v2021 = vpop.f32.mrb[0].mxu0
        %2022 = vdwg.mxu0
        %2023 = vmatprep.subr.bf16.mxu0 0
        %2024 = vmatpush1.bf16.msra.mxu0 %v1207
        %2025 = vmatprep.subr.bf16.mxu0 0
        %2026 = vmatpush1.bf16.msra.mxu0 %v1214
        %2027 = vmatprep.subr.bf16.mxu0 0
        %2028 = vmatpush1.bf16.msra.mxu0 %v1221
        %2029 = vmatprep.subr.bf16.mxu0 0
        %2030 = vmatpush1.bf16.msra.mxu0 %v1228
        %2031 = vmatprep.subr.bf16.mxu0 0
        %2032 = vmatpush1.bf16.msra.mxu0 %v1235
        %2033 = vmatprep.subr.bf16.mxu0 0
        %2034 = vmatpush1.bf16.msra.mxu0 %v1242
        %2035 = vmatprep.subr.bf16.mxu0 0
        %2036 = vmatpush1.bf16.msra.mxu0 %v1249
        %2037 = vmatprep.subr.bf16.mxu0 0
        %2038 = vmatpush1.bf16.msra.mxu0 %v1256
        %2039 = vmatprep.subr.bf16.mxu0 0
        %2040 = vmatpush1.bf16.msra.mxu0 %v1263
        %2041 = vmatprep.subr.bf16.mxu0 0
        %2042 = vmatpush1.bf16.msra.mxu0 %v1270
        %2043 = vmatprep.subr.bf16.mxu0 0
        %2044 = vmatpush1.bf16.msra.mxu0 %v1277
        %2045 = vmatprep.subr.bf16.mxu0 0
        %2046 = vmatpush1.bf16.msra.mxu0 %v1284
        %2047 = vmatprep.subr.bf16.mxu0 0
        %2048 = vmatpush1.bf16.msra.mxu0 %v1291
        %2049 = vmatprep.subr.bf16.mxu0 0
        %2050 = vmatpush1.bf16.msra.mxu0 %v1298
        %2051 = vmatprep.subr.bf16.mxu0 0
        %2052 = vmatpush1.bf16.msra.mxu0 %v1305
        %2053 = vmatprep.subr.bf16.mxu0 0
        %2054 = vmatpush1.bf16.msra.mxu0 %v1312
        %2055 = vmatprep.mubr.bf16.mxu0 %v736
        %2056 = vmatmul.mubr.bf16.gmra.mrb[0].mxu0 %v735
        %v2057 = vpop.f32.mrb[0].mxu0
        %v2058 = vadd.f32 %v2017, %v2057
        %v2059 = vpop.f32.mrb[0].mxu0
        %v2060 = vpop.f32.mrb[0].mxu0
        %v2061 = vadd.f32 %v2020, %v2060
        %v2062 = vpop.f32.mrb[0].mxu0
        %2063 = vdwg.mxu0
        %2064 = vmatprep.subr.bf16.mxu0 0
        %2065 = vmatpush1.bf16.msra.mxu0 %v1319
        %2066 = vmatprep.subr.bf16.mxu0 0
        %2067 = vmatpush1.bf16.msra.mxu0 %v1326
        %2068 = vmatprep.subr.bf16.mxu0 0
        %2069 = vmatpush1.bf16.msra.mxu0 %v1333
        %2070 = vmatprep.subr.bf16.mxu0 0
        %2071 = vmatpush1.bf16.msra.mxu0 %v1340
        %2072 = vmatprep.subr.bf16.mxu0 0
        %2073 = vmatpush1.bf16.msra.mxu0 %v1347
        %2074 = vmatprep.subr.bf16.mxu0 0
        %2075 = vmatpush1.bf16.msra.mxu0 %v1354
        %2076 = vmatprep.subr.bf16.mxu0 0
        %2077 = vmatpush1.bf16.msra.mxu0 %v1361
        %2078 = vmatprep.subr.bf16.mxu0 0
        %2079 = vmatpush1.bf16.msra.mxu0 %v1368
        %2080 = vmatprep.subr.bf16.mxu0 0
        %2081 = vmatpush1.bf16.msra.mxu0 %v1375
        %2082 = vmatprep.subr.bf16.mxu0 0
        %2083 = vmatpush1.bf16.msra.mxu0 %v1382
        %2084 = vmatprep.subr.bf16.mxu0 0
        %2085 = vmatpush1.bf16.msra.mxu0 %v1389
        %2086 = vmatprep.subr.bf16.mxu0 0
        %2087 = vmatpush1.bf16.msra.mxu0 %v1396
        %2088 = vmatprep.subr.bf16.mxu0 0
        %2089 = vmatpush1.bf16.msra.mxu0 %v1403
        %2090 = vmatprep.subr.bf16.mxu0 0
        %2091 = vmatpush1.bf16.msra.mxu0 %v1410
        %2092 = vmatprep.subr.bf16.mxu0 0
        %2093 = vmatpush1.bf16.msra.mxu0 %v1417
        %2094 = vmatprep.subr.bf16.mxu0 0
        %2095 = vmatpush1.bf16.msra.mxu0 %v1424
        %2096 = vmatprep.mubr.bf16.mxu0 %v738
        %2097 = vmatmul.mubr.bf16.gmra.mrb[0].mxu0 %v737
        %v2098 = vpop.f32.mrb[0].mxu0
        %v2099 = vadd.f32 %v2058, %v2098
        %v2100 = vpop.f32.mrb[0].mxu0
        %v2101 = vpop.f32.mrb[0].mxu0
        %v2102 = vadd.f32 %v2061, %v2101
        %v2103 = vpop.f32.mrb[0].mxu0
        %2104 = vdwg.mxu0
        %v2105 = vadd.f32 %v739, %v1589
        %v2106 = vadd.f32 %v740, %v1591
        %v2107 = vadd.f32 %v741, %v1761
        %v2108 = vadd.f32 %v742, %v1763
        %v2109 = vadd.f32 %v743, %v1933
        %v2110 = vadd.f32 %v744, %v1935
        %v2111 = vadd.f32 %v745, %v2099
        %v2112 = vadd.f32 %v746, %v1593
        %v2113 = vadd.f32 %v747, %v1595
        %v2114 = vadd.f32 %v748, %v1765
        %v2115 = vadd.f32 %v749, %v1767
        %v2116 = vadd.f32 %v750, %v1937
        %v2117 = vadd.f32 %v751, %v1939
        %v2118 = vadd.f32 %v752, %v2102
        %2119 = vst [vmem:[#allocation2] sm:$0xff] %v2105
        %2120 = vst [vmem:[#allocation2 + $0x8] sm:$0xff] %v2106
        %2121 = vst [vmem:[#allocation2 + $0x10] sm:$0xff] %v2107
        %2122 = vst [vmem:[#allocation2 + $0x18] sm:$0xff] %v2108
        %2123 = vst [vmem:[#allocation2 + $0x20] sm:$0xff] %v2109
        %2124 = vst [vmem:[#allocation2 + $0x28] sm:$0xff] %v2110
        %2125 = vst [vmem:[#allocation2 + $0x30] sm:$0xff] %v2111
        %2126 = vst [vmem:[#allocation2 + $0x38] sm:$0xff] %v2112
        %2127 = vst [vmem:[#allocation2 + $0x40] sm:$0xff] %v2113
        %2128 = vst [vmem:[#allocation2 + $0x48] sm:$0xff] %v2114
        %2129 = vst [vmem:[#allocation2 + $0x50] sm:$0xff] %v2115
        %2130 = vst [vmem:[#allocation2 + $0x58] sm:$0xff] %v2116
        %2131 = vst [vmem:[#allocation2 + $0x60] sm:$0xff] %v2117
        %2132 = vst [vmem:[#allocation2 + $0x68] sm:$0xff] %v2118
        %p2133 = scmp.eq.s32.totalorder %s43, 1
        // Predicated region
        $region137: #{tpu_custom_call.1} parent=75 // pred_check
          %p2134 = pneg %p2133
        $region138: #{tpu_custom_call.1} parent=75 // pred_check_branch
          %2136 = sbr.rel (%p2134) target = $region140
        $region139: #{tpu_custom_call.1} parent=75 // pred_region
          %v2137 = vld [vmem:[#allocation2] sm:$0xff]
          %v2138 = vld [vmem:[#allocation2 + $0x8] sm:$0xff]
          %v2139 = vld [vmem:[#allocation2 + $0x10] sm:$0xff]
          %v2140 = vld [vmem:[#allocation2 + $0x18] sm:$0xff]
          %v2141 = vld [vmem:[#allocation2 + $0x20] sm:$0xff]
          %v2142 = vld [vmem:[#allocation2 + $0x28] sm:$0xff]
          %v2143 = vld [vmem:[#allocation2 + $0x30] sm:$0xff]
          %v2144 = vld [vmem:[#allocation2 + $0x38] sm:$0xff]
          %v2145 = vld [vmem:[#allocation2 + $0x40] sm:$0xff]
          %v2146 = vld [vmem:[#allocation2 + $0x48] sm:$0xff]
          %v2147 = vld [vmem:[#allocation2 + $0x50] sm:$0xff]
          %v2148 = vld [vmem:[#allocation2 + $0x58] sm:$0xff]
          %v2149 = vld [vmem:[#allocation2 + $0x60] sm:$0xff]
          %v2150 = vld [vmem:[#allocation2 + $0x68] sm:$0xff]
          %v2151 = vld [vmem:[#allocation9] sm:$0xff]
          %v2153 = vlaneseq
          %v2154 = vshrl.u32 %v2153, 7
          %v2155 = vsub.s32 0, %v2154
          %v2156 = vrot.slane %v2151, %v2155
          %v2157 = vlaneseq
          %v2158 = vshrl.u32 %v2157, 7
          %v2159 = vsub.s32 1, %v2158
          %v2160 = vrot.slane %v2151, %v2159
          %v2161 = vlaneseq
          %v2162 = vshrl.u32 %v2161, 7
          %v2163 = vsub.s32 2, %v2162
          %v2164 = vrot.slane %v2151, %v2163
          %v2165 = vlaneseq
          %v2166 = vshrl.u32 %v2165, 7
          %v2167 = vsub.s32 3, %v2166
          %v2168 = vrot.slane %v2151, %v2167
          %v2169 = vlaneseq
          %v2170 = vshrl.u32 %v2169, 7
          %v2171 = vsub.s32 4, %v2170
          %v2172 = vrot.slane %v2151, %v2171
          %v2173 = vlaneseq
          %v2174 = vshrl.u32 %v2173, 7
          %v2175 = vsub.s32 5, %v2174
          %v2176 = vrot.slane %v2151, %v2175
          %v2177 = vlaneseq
          %v2178 = vshrl.u32 %v2177, 7
          %v2179 = vsub.s32 6, %v2178
          %v2180 = vrot.slane %v2151, %v2179
          %v2188 = vmul.f32 %v2137, %v2156
          %v2189 = vmul.f32 %v2138, %v2160
          %v2190 = vmul.f32 %v2139, %v2164
          %v2191 = vmul.f32 %v2140, %v2168
          %v2192 = vmul.f32 %v2141, %v2172
          %v2193 = vmul.f32 %v2142, %v2176
          %v2194 = vmul.f32 %v2143, %v2180
          %v2195 = vmul.f32 %v2144, %v2156
          %v2196 = vmul.f32 %v2145, %v2160
          %v2197 = vmul.f32 %v2146, %v2164
          %v2198 = vmul.f32 %v2147, %v2168
          %v2199 = vmul.f32 %v2148, %v2172
          %v2200 = vmul.f32 %v2149, %v2176
          %v2201 = vmul.f32 %v2150, %v2180
          %v2202 = vld [vmem:[#allocation10] sm:$0xff]
          %v2204 = vlaneseq
          %v2205 = vshrl.u32 %v2204, 7
          %v2206 = vsub.s32 0, %v2205
          %v2207 = vrot.slane %v2202, %v2206
          %v2208 = vlaneseq
          %v2209 = vshrl.u32 %v2208, 7
          %v2210 = vsub.s32 1, %v2209
          %v2211 = vrot.slane %v2202, %v2210
          %v2212 = vlaneseq
          %v2213 = vshrl.u32 %v2212, 7
          %v2214 = vsub.s32 2, %v2213
          %v2215 = vrot.slane %v2202, %v2214
          %v2216 = vlaneseq
          %v2217 = vshrl.u32 %v2216, 7
          %v2218 = vsub.s32 3, %v2217
          %v2219 = vrot.slane %v2202, %v2218
          %v2220 = vlaneseq
          %v2221 = vshrl.u32 %v2220, 7
          %v2222 = vsub.s32 4, %v2221
          %v2223 = vrot.slane %v2202, %v2222
          %v2224 = vlaneseq
          %v2225 = vshrl.u32 %v2224, 7
          %v2226 = vsub.s32 5, %v2225
          %v2227 = vrot.slane %v2202, %v2226
          %v2228 = vlaneseq
          %v2229 = vshrl.u32 %v2228, 7
          %v2230 = vsub.s32 6, %v2229
          %v2231 = vrot.slane %v2202, %v2230
          %v2239 = vadd.f32 %v2188, %v2207
          %v2240 = vadd.f32 %v2189, %v2211
          %v2241 = vadd.f32 %v2190, %v2215
          %v2242 = vadd.f32 %v2191, %v2219
          %v2243 = vadd.f32 %v2192, %v2223
          %v2244 = vadd.f32 %v2193, %v2227
          %v2245 = vadd.f32 %v2194, %v2231
          %v2246 = vadd.f32 %v2195, %v2207
          %v2247 = vadd.f32 %v2196, %v2211
          %v2248 = vadd.f32 %v2197, %v2215
          %v2249 = vadd.f32 %v2198, %v2219
          %v2250 = vadd.f32 %v2199, %v2223
          %v2251 = vadd.f32 %v2200, %v2227
          %v2252 = vadd.f32 %v2201, %v2231
          %s2253 = sld [smem:[#allocation25]]
          %vm2254 = vcmp.gt.f32.partialorder %v2239, 0.0
          %vm2255 = vcmp.gt.f32.partialorder %v2240, 0.0
          %vm2256 = vcmp.gt.f32.partialorder %v2241, 0.0
          %vm2257 = vcmp.gt.f32.partialorder %v2242, 0.0
          %vm2258 = vcmp.gt.f32.partialorder %v2243, 0.0
          %vm2259 = vcmp.gt.f32.partialorder %v2244, 0.0
          %vm2260 = vcmp.gt.f32.partialorder %v2245, 0.0
          %vm2261 = vcmp.gt.f32.partialorder %v2246, 0.0
          %vm2262 = vcmp.gt.f32.partialorder %v2247, 0.0
          %vm2263 = vcmp.gt.f32.partialorder %v2248, 0.0
          %vm2264 = vcmp.gt.f32.partialorder %v2249, 0.0
          %vm2265 = vcmp.gt.f32.partialorder %v2250, 0.0
          %vm2266 = vcmp.gt.f32.partialorder %v2251, 0.0
          %vm2267 = vcmp.gt.f32.partialorder %v2252, 0.0
          %v2268 = vstv %s2253
          %v2269 = vmul.f32 %v2268, %v2239
          %v2270 = vmul.f32 %v2268, %v2240
          %v2271 = vmul.f32 %v2268, %v2241
          %v2272 = vmul.f32 %v2268, %v2242
          %v2273 = vmul.f32 %v2268, %v2243
          %v2274 = vmul.f32 %v2268, %v2244
          %v2275 = vmul.f32 %v2268, %v2245
          %v2276 = vmul.f32 %v2268, %v2246
          %v2277 = vmul.f32 %v2268, %v2247
          %v2278 = vmul.f32 %v2268, %v2248
          %v2279 = vmul.f32 %v2268, %v2249
          %v2280 = vmul.f32 %v2268, %v2250
          %v2281 = vmul.f32 %v2268, %v2251
          %v2282 = vmul.f32 %v2268, %v2252
          %v2283 = vsel %vm2254, %v2239, %v2269
          %v2284 = vsel %vm2255, %v2240, %v2270
          %v2285 = vsel %vm2256, %v2241, %v2271
          %v2286 = vsel %vm2257, %v2242, %v2272
          %v2287 = vsel %vm2258, %v2243, %v2273
          %v2288 = vsel %vm2259, %v2244, %v2274
          %v2289 = vsel %vm2260, %v2245, %v2275
          %v2290 = vsel %vm2261, %v2246, %v2276
          %v2291 = vsel %vm2262, %v2247, %v2277
          %v2292 = vsel %vm2263, %v2248, %v2278
          %v2293 = vsel %vm2264, %v2249, %v2279
          %v2294 = vsel %vm2265, %v2250, %v2280
          %v2295 = vsel %vm2266, %v2251, %v2281
          %v2296 = vsel %vm2267, %v2252, %v2282
          %v2297 = vpack.c.bf16 %v2290, %v2283
          %v2298 = vpack.c.bf16 %v2291, %v2284
          %v2299 = vpack.c.bf16 %v2292, %v2285
          %v2300 = vpack.c.bf16 %v2293, %v2286
          %v2301 = vpack.c.bf16 %v2294, %v2287
          %v2302 = vpack.c.bf16 %v2295, %v2288
          %v2303 = vpack.c.bf16 %v2296, %v2289
          %v2304 = vld [vmem:[#allocation12] sm:$0xff]
          %v2305 = vld [vmem:[#allocation12 + $0x8] sm:$0xff]
          %v2306 = vld [vmem:[#allocation12 + $0x10] sm:$0xff]
          %v2307 = vld [vmem:[#allocation12 + $0x18] sm:$0xff]
          %v2308 = vld [vmem:[#allocation12 + $0x20] sm:$0xff]
          %v2309 = vld [vmem:[#allocation12 + $0x28] sm:$0xff]
          %v2310 = vld [vmem:[#allocation12 + $0x30] sm:$0xff]
          %v2311 = vld [vmem:[#allocation12 + $0x38] sm:$0xff]
          %v2312 = vld [vmem:[#allocation12 + $0x40] sm:$0xff]
          %v2313 = vld [vmem:[#allocation12 + $0x48] sm:$0xff]
          %v2314 = vld [vmem:[#allocation12 + $0x50] sm:$0xff]
          %v2315 = vld [vmem:[#allocation12 + $0x58] sm:$0xff]
          %v2316 = vld [vmem:[#allocation12 + $0x60] sm:$0xff]
          %v2317 = vld [vmem:[#allocation12 + $0x68] sm:$0xff]
          %v2318 = vld [vmem:[#allocation12 + $0x70] sm:$0xff]
          %v2319 = vld [vmem:[#allocation12 + $0x78] sm:$0xff]
          %v2320 = vld [vmem:[#allocation12 + $0x80] sm:$0xff]
          %v2321 = vld [vmem:[#allocation12 + $0x88] sm:$0xff]
          %v2322 = vld [vmem:[#allocation12 + $0x90] sm:$0xff]
          %v2323 = vld [vmem:[#allocation12 + $0x98] sm:$0xff]
          %v2324 = vld [vmem:[#allocation12 + $0xa0] sm:$0xff]
          %v2325 = vld [vmem:[#allocation12 + $0xa8] sm:$0xff]
          %v2326 = vld [vmem:[#allocation12 + $0xb0] sm:$0xff]
          %v2327 = vld [vmem:[#allocation12 + $0xb8] sm:$0xff]
          %v2328 = vld [vmem:[#allocation12 + $0xc0] sm:$0xff]
          %v2329 = vld [vmem:[#allocation12 + $0xc8] sm:$0xff]
          %v2330 = vld [vmem:[#allocation12 + $0xd0] sm:$0xff]
          %v2331 = vld [vmem:[#allocation12 + $0xd8] sm:$0xff]
          %v2332 = vld [vmem:[#allocation12 + $0xe0] sm:$0xff]
          %v2333 = vld [vmem:[#allocation12 + $0xe8] sm:$0xff]
          %v2334 = vld [vmem:[#allocation12 + $0xf0] sm:$0xff]
          %v2335 = vld [vmem:[#allocation12 + $0xf8] sm:$0xff]
          %v2336 = vld [vmem:[#allocation12 + $0x100] sm:$0xff]
          %v2337 = vld [vmem:[#allocation12 + $0x108] sm:$0xff]
          %v2338 = vld [vmem:[#allocation12 + $0x110] sm:$0xff]
          %v2339 = vld [vmem:[#allocation12 + $0x118] sm:$0xff]
          %v2340 = vld [vmem:[#allocation12 + $0x120] sm:$0xff]
          %v2341 = vld [vmem:[#allocation12 + $0x128] sm:$0xff]
          %v2342 = vld [vmem:[#allocation12 + $0x130] sm:$0xff]
          %v2343 = vld [vmem:[#allocation12 + $0x138] sm:$0xff]
          %v2344 = vld [vmem:[#allocation12 + $0x140] sm:$0xff]
          %v2345 = vld [vmem:[#allocation12 + $0x148] sm:$0xff]
          %v2346 = vld [vmem:[#allocation12 + $0x150] sm:$0xff]
          %v2347 = vld [vmem:[#allocation12 + $0x158] sm:$0xff]
          %v2348 = vld [vmem:[#allocation12 + $0x160] sm:$0xff]
          %v2349 = vld [vmem:[#allocation12 + $0x168] sm:$0xff]
          %v2350 = vld [vmem:[#allocation12 + $0x170] sm:$0xff]
          %v2351 = vld [vmem:[#allocation12 + $0x178] sm:$0xff]
          %v2352 = vld [vmem:[#allocation12 + $0x180] sm:$0xff]
          %v2353 = vld [vmem:[#allocation12 + $0x188] sm:$0xff]
          %v2354 = vld [vmem:[#allocation12 + $0x190] sm:$0xff]
          %v2355 = vld [vmem:[#allocation12 + $0x198] sm:$0xff]
          %v2356 = vld [vmem:[#allocation12 + $0x1a0] sm:$0xff]
          %v2357 = vld [vmem:[#allocation12 + $0x1a8] sm:$0xff]
          %v2358 = vld [vmem:[#allocation12 + $0x1b0] sm:$0xff]
          %v2359 = vld [vmem:[#allocation12 + $0x1b8] sm:$0xff]
          %v2360 = vld [vmem:[#allocation12 + $0x1c0] sm:$0xff]
          %v2361 = vld [vmem:[#allocation12 + $0x1c8] sm:$0xff]
          %v2362 = vld [vmem:[#allocation12 + $0x1d0] sm:$0xff]
          %v2363 = vld [vmem:[#allocation12 + $0x1d8] sm:$0xff]
          %v2364 = vld [vmem:[#allocation12 + $0x1e0] sm:$0xff]
          %v2365 = vld [vmem:[#allocation12 + $0x1e8] sm:$0xff]
          %v2366 = vld [vmem:[#allocation12 + $0x1f0] sm:$0xff]
          %v2367 = vld [vmem:[#allocation12 + $0x1f8] sm:$0xff]
          %v2368 = vld [vmem:[#allocation12 + $0x200] sm:$0xff]
          %v2369 = vld [vmem:[#allocation12 + $0x208] sm:$0xff]
          %v2370 = vld [vmem:[#allocation12 + $0x210] sm:$0xff]
          %v2371 = vld [vmem:[#allocation12 + $0x218] sm:$0xff]
          %v2372 = vld [vmem:[#allocation12 + $0x220] sm:$0xff]
          %v2373 = vld [vmem:[#allocation12 + $0x228] sm:$0xff]
          %v2374 = vld [vmem:[#allocation12 + $0x230] sm:$0xff]
          %v2375 = vld [vmem:[#allocation12 + $0x238] sm:$0xff]
          %v2376 = vld [vmem:[#allocation12 + $0x240] sm:$0xff]
          %v2377 = vld [vmem:[#allocation12 + $0x248] sm:$0xff]
          %v2378 = vld [vmem:[#allocation12 + $0x250] sm:$0xff]
          %v2379 = vld [vmem:[#allocation12 + $0x258] sm:$0xff]
          %v2380 = vld [vmem:[#allocation12 + $0x260] sm:$0xff]
          %v2381 = vld [vmem:[#allocation12 + $0x268] sm:$0xff]
          %v2382 = vld [vmem:[#allocation12 + $0x270] sm:$0xff]
          %v2383 = vld [vmem:[#allocation12 + $0x278] sm:$0xff]
          %v2384 = vld [vmem:[#allocation12 + $0x280] sm:$0xff]
          %v2385 = vld [vmem:[#allocation12 + $0x288] sm:$0xff]
          %v2386 = vld [vmem:[#allocation12 + $0x290] sm:$0xff]
          %v2387 = vld [vmem:[#allocation12 + $0x298] sm:$0xff]
          %v2388 = vld [vmem:[#allocation12 + $0x2a0] sm:$0xff]
          %v2389 = vld [vmem:[#allocation12 + $0x2a8] sm:$0xff]
          %v2390 = vld [vmem:[#allocation12 + $0x2b0] sm:$0xff]
          %v2391 = vld [vmem:[#allocation12 + $0x2b8] sm:$0xff]
          %v2392 = vld [vmem:[#allocation12 + $0x2c0] sm:$0xff]
          %v2393 = vld [vmem:[#allocation12 + $0x2c8] sm:$0xff]
          %v2394 = vld [vmem:[#allocation12 + $0x2d0] sm:$0xff]
          %v2395 = vld [vmem:[#allocation12 + $0x2d8] sm:$0xff]
          %v2396 = vld [vmem:[#allocation12 + $0x2e0] sm:$0xff]
          %v2397 = vld [vmem:[#allocation12 + $0x2e8] sm:$0xff]
          %v2398 = vld [vmem:[#allocation12 + $0x2f0] sm:$0xff]
          %v2399 = vld [vmem:[#allocation12 + $0x2f8] sm:$0xff]
          %v2400 = vld [vmem:[#allocation12 + $0x300] sm:$0xff]
          %v2401 = vld [vmem:[#allocation12 + $0x308] sm:$0xff]
          %v2402 = vld [vmem:[#allocation12 + $0x310] sm:$0xff]
          %v2403 = vld [vmem:[#allocation12 + $0x318] sm:$0xff]
          %v2404 = vld [vmem:[#allocation12 + $0x320] sm:$0xff]
          %v2405 = vld [vmem:[#allocation12 + $0x328] sm:$0xff]
          %v2406 = vld [vmem:[#allocation12 + $0x330] sm:$0xff]
          %v2407 = vld [vmem:[#allocation12 + $0x338] sm:$0xff]
          %v2408 = vld [vmem:[#allocation12 + $0x340] sm:$0xff]
          %v2409 = vld [vmem:[#allocation12 + $0x348] sm:$0xff]
          %v2410 = vld [vmem:[#allocation12 + $0x350] sm:$0xff]
          %v2411 = vld [vmem:[#allocation12 + $0x358] sm:$0xff]
          %v2412 = vld [vmem:[#allocation12 + $0x360] sm:$0xff]
          %v2413 = vld [vmem:[#allocation12 + $0x368] sm:$0xff]
          %v2414 = vld [vmem:[#allocation12 + $0x370] sm:$0xff]
          %v2415 = vld [vmem:[#allocation12 + $0x378] sm:$0xff]
          %v2416 = vunpack.c.l.s8.bf16 %v2304
          %v2417 = vunpack.c.l.s8.bf16 %v2305
          %v2418 = vunpack.c.l.s8.bf16 %v2306
          %v2419 = vunpack.c.l.s8.bf16 %v2307
          %v2420 = vunpack.c.h.s8.bf16 %v2304
          %v2421 = vunpack.c.h.s8.bf16 %v2305
          %v2422 = vunpack.c.h.s8.bf16 %v2306
          %v2423 = vunpack.c.h.s8.bf16 %v2307
          %v2424 = vunpack.c.l.s8.bf16 %v2308
          %v2425 = vunpack.c.l.s8.bf16 %v2309
          %v2426 = vunpack.c.l.s8.bf16 %v2310
          %v2427 = vunpack.c.l.s8.bf16 %v2311
          %v2428 = vunpack.c.h.s8.bf16 %v2308
          %v2429 = vunpack.c.h.s8.bf16 %v2309
          %v2430 = vunpack.c.h.s8.bf16 %v2310
          %v2431 = vunpack.c.h.s8.bf16 %v2311
          %v2432 = vunpack.c.l.s8.bf16 %v2312
          %v2433 = vunpack.c.l.s8.bf16 %v2313
          %v2434 = vunpack.c.l.s8.bf16 %v2314
          %v2435 = vunpack.c.l.s8.bf16 %v2315
          %v2436 = vunpack.c.h.s8.bf16 %v2312
          %v2437 = vunpack.c.h.s8.bf16 %v2313
          %v2438 = vunpack.c.h.s8.bf16 %v2314
          %v2439 = vunpack.c.h.s8.bf16 %v2315
          %v2440 = vunpack.c.l.s8.bf16 %v2316
          %v2441 = vunpack.c.l.s8.bf16 %v2317
          %v2442 = vunpack.c.l.s8.bf16 %v2318
          %v2443 = vunpack.c.l.s8.bf16 %v2319
          %v2444 = vunpack.c.h.s8.bf16 %v2316
          %v2445 = vunpack.c.h.s8.bf16 %v2317
          %v2446 = vunpack.c.h.s8.bf16 %v2318
          %v2447 = vunpack.c.h.s8.bf16 %v2319
          %v2448 = vunpack.c.l.s8.bf16 %v2320
          %v2449 = vunpack.c.l.s8.bf16 %v2321
          %v2450 = vunpack.c.l.s8.bf16 %v2322
          %v2451 = vunpack.c.l.s8.bf16 %v2323
          %v2452 = vunpack.c.h.s8.bf16 %v2320
          %v2453 = vunpack.c.h.s8.bf16 %v2321
          %v2454 = vunpack.c.h.s8.bf16 %v2322
          %v2455 = vunpack.c.h.s8.bf16 %v2323
          %v2456 = vunpack.c.l.s8.bf16 %v2324
          %v2457 = vunpack.c.l.s8.bf16 %v2325
          %v2458 = vunpack.c.l.s8.bf16 %v2326
          %v2459 = vunpack.c.l.s8.bf16 %v2327
          %v2460 = vunpack.c.h.s8.bf16 %v2324
          %v2461 = vunpack.c.h.s8.bf16 %v2325
          %v2462 = vunpack.c.h.s8.bf16 %v2326
          %v2463 = vunpack.c.h.s8.bf16 %v2327
          %v2464 = vunpack.c.l.s8.bf16 %v2328
          %v2465 = vunpack.c.l.s8.bf16 %v2329
          %v2466 = vunpack.c.l.s8.bf16 %v2330
          %v2467 = vunpack.c.l.s8.bf16 %v2331
          %v2468 = vunpack.c.h.s8.bf16 %v2328
          %v2469 = vunpack.c.h.s8.bf16 %v2329
          %v2470 = vunpack.c.h.s8.bf16 %v2330
          %v2471 = vunpack.c.h.s8.bf16 %v2331
          %v2472 = vunpack.c.l.s8.bf16 %v2332
          %v2473 = vunpack.c.l.s8.bf16 %v2333
          %v2474 = vunpack.c.l.s8.bf16 %v2334
          %v2475 = vunpack.c.l.s8.bf16 %v2335
          %v2476 = vunpack.c.h.s8.bf16 %v2332
          %v2477 = vunpack.c.h.s8.bf16 %v2333
          %v2478 = vunpack.c.h.s8.bf16 %v2334
          %v2479 = vunpack.c.h.s8.bf16 %v2335
          %v2480 = vunpack.c.l.s8.bf16 %v2336
          %v2481 = vunpack.c.l.s8.bf16 %v2337
          %v2482 = vunpack.c.l.s8.bf16 %v2338
          %v2483 = vunpack.c.l.s8.bf16 %v2339
          %v2484 = vunpack.c.h.s8.bf16 %v2336
          %v2485 = vunpack.c.h.s8.bf16 %v2337
          %v2486 = vunpack.c.h.s8.bf16 %v2338
          %v2487 = vunpack.c.h.s8.bf16 %v2339
          %v2488 = vunpack.c.l.s8.bf16 %v2340
          %v2489 = vunpack.c.l.s8.bf16 %v2341
          %v2490 = vunpack.c.l.s8.bf16 %v2342
          %v2491 = vunpack.c.l.s8.bf16 %v2343
          %v2492 = vunpack.c.h.s8.bf16 %v2340
          %v2493 = vunpack.c.h.s8.bf16 %v2341
          %v2494 = vunpack.c.h.s8.bf16 %v2342
          %v2495 = vunpack.c.h.s8.bf16 %v2343
          %v2496 = vunpack.c.l.s8.bf16 %v2344
          %v2497 = vunpack.c.l.s8.bf16 %v2345
          %v2498 = vunpack.c.l.s8.bf16 %v2346
          %v2499 = vunpack.c.l.s8.bf16 %v2347
          %v2500 = vunpack.c.h.s8.bf16 %v2344
          %v2501 = vunpack.c.h.s8.bf16 %v2345
          %v2502 = vunpack.c.h.s8.bf16 %v2346
          %v2503 = vunpack.c.h.s8.bf16 %v2347
          %v2504 = vunpack.c.l.s8.bf16 %v2348
          %v2505 = vunpack.c.l.s8.bf16 %v2349
          %v2506 = vunpack.c.l.s8.bf16 %v2350
          %v2507 = vunpack.c.l.s8.bf16 %v2351
          %v2508 = vunpack.c.h.s8.bf16 %v2348
          %v2509 = vunpack.c.h.s8.bf16 %v2349
          %v2510 = vunpack.c.h.s8.bf16 %v2350
          %v2511 = vunpack.c.h.s8.bf16 %v2351
          %v2512 = vunpack.c.l.s8.bf16 %v2352
          %v2513 = vunpack.c.l.s8.bf16 %v2353
          %v2514 = vunpack.c.l.s8.bf16 %v2354
          %v2515 = vunpack.c.l.s8.bf16 %v2355
          %v2516 = vunpack.c.h.s8.bf16 %v2352
          %v2517 = vunpack.c.h.s8.bf16 %v2353
          %v2518 = vunpack.c.h.s8.bf16 %v2354
          %v2519 = vunpack.c.h.s8.bf16 %v2355
          %v2520 = vunpack.c.l.s8.bf16 %v2356
          %v2521 = vunpack.c.l.s8.bf16 %v2357
          %v2522 = vunpack.c.l.s8.bf16 %v2358
          %v2523 = vunpack.c.l.s8.bf16 %v2359
          %v2524 = vunpack.c.h.s8.bf16 %v2356
          %v2525 = vunpack.c.h.s8.bf16 %v2357
          %v2526 = vunpack.c.h.s8.bf16 %v2358
          %v2527 = vunpack.c.h.s8.bf16 %v2359
          %v2528 = vunpack.c.l.s8.bf16 %v2360
          %v2529 = vunpack.c.l.s8.bf16 %v2361
          %v2530 = vunpack.c.l.s8.bf16 %v2362
          %v2531 = vunpack.c.l.s8.bf16 %v2363
          %v2532 = vunpack.c.h.s8.bf16 %v2360
          %v2533 = vunpack.c.h.s8.bf16 %v2361
          %v2534 = vunpack.c.h.s8.bf16 %v2362
          %v2535 = vunpack.c.h.s8.bf16 %v2363
          %v2536 = vunpack.c.l.s8.bf16 %v2364
          %v2537 = vunpack.c.l.s8.bf16 %v2365
          %v2538 = vunpack.c.l.s8.bf16 %v2366
          %v2539 = vunpack.c.l.s8.bf16 %v2367
          %v2540 = vunpack.c.h.s8.bf16 %v2364
          %v2541 = vunpack.c.h.s8.bf16 %v2365
          %v2542 = vunpack.c.h.s8.bf16 %v2366
          %v2543 = vunpack.c.h.s8.bf16 %v2367
          %v2544 = vunpack.c.l.s8.bf16 %v2368
          %v2545 = vunpack.c.l.s8.bf16 %v2369
          %v2546 = vunpack.c.l.s8.bf16 %v2370
          %v2547 = vunpack.c.l.s8.bf16 %v2371
          %v2548 = vunpack.c.h.s8.bf16 %v2368
          %v2549 = vunpack.c.h.s8.bf16 %v2369
          %v2550 = vunpack.c.h.s8.bf16 %v2370
          %v2551 = vunpack.c.h.s8.bf16 %v2371
          %v2552 = vunpack.c.l.s8.bf16 %v2372
          %v2553 = vunpack.c.l.s8.bf16 %v2373
          %v2554 = vunpack.c.l.s8.bf16 %v2374
          %v2555 = vunpack.c.l.s8.bf16 %v2375
          %v2556 = vunpack.c.h.s8.bf16 %v2372
          %v2557 = vunpack.c.h.s8.bf16 %v2373
          %v2558 = vunpack.c.h.s8.bf16 %v2374
          %v2559 = vunpack.c.h.s8.bf16 %v2375
          %v2560 = vunpack.c.l.s8.bf16 %v2376
          %v2561 = vunpack.c.l.s8.bf16 %v2377
          %v2562 = vunpack.c.l.s8.bf16 %v2378
          %v2563 = vunpack.c.l.s8.bf16 %v2379
          %v2564 = vunpack.c.h.s8.bf16 %v2376
          %v2565 = vunpack.c.h.s8.bf16 %v2377
          %v2566 = vunpack.c.h.s8.bf16 %v2378
          %v2567 = vunpack.c.h.s8.bf16 %v2379
          %v2568 = vunpack.c.l.s8.bf16 %v2380
          %v2569 = vunpack.c.l.s8.bf16 %v2381
          %v2570 = vunpack.c.l.s8.bf16 %v2382
          %v2571 = vunpack.c.l.s8.bf16 %v2383
          %v2572 = vunpack.c.h.s8.bf16 %v2380
          %v2573 = vunpack.c.h.s8.bf16 %v2381
          %v2574 = vunpack.c.h.s8.bf16 %v2382
          %v2575 = vunpack.c.h.s8.bf16 %v2383
          %v2576 = vunpack.c.l.s8.bf16 %v2384
          %v2577 = vunpack.c.l.s8.bf16 %v2385
          %v2578 = vunpack.c.l.s8.bf16 %v2386
          %v2579 = vunpack.c.l.s8.bf16 %v2387
          %v2580 = vunpack.c.h.s8.bf16 %v2384
          %v2581 = vunpack.c.h.s8.bf16 %v2385
          %v2582 = vunpack.c.h.s8.bf16 %v2386
          %v2583 = vunpack.c.h.s8.bf16 %v2387
          %v2584 = vunpack.c.l.s8.bf16 %v2388
          %v2585 = vunpack.c.l.s8.bf16 %v2389
          %v2586 = vunpack.c.l.s8.bf16 %v2390
          %v2587 = vunpack.c.l.s8.bf16 %v2391
          %v2588 = vunpack.c.h.s8.bf16 %v2388
          %v2589 = vunpack.c.h.s8.bf16 %v2389
          %v2590 = vunpack.c.h.s8.bf16 %v2390
          %v2591 = vunpack.c.h.s8.bf16 %v2391
          %v2592 = vunpack.c.l.s8.bf16 %v2392
          %v2593 = vunpack.c.l.s8.bf16 %v2393
          %v2594 = vunpack.c.l.s8.bf16 %v2394
          %v2595 = vunpack.c.l.s8.bf16 %v2395
          %v2596 = vunpack.c.h.s8.bf16 %v2392
          %v2597 = vunpack.c.h.s8.bf16 %v2393
          %v2598 = vunpack.c.h.s8.bf16 %v2394
          %v2599 = vunpack.c.h.s8.bf16 %v2395
          %v2600 = vunpack.c.l.s8.bf16 %v2396
          %v2601 = vunpack.c.l.s8.bf16 %v2397
          %v2602 = vunpack.c.l.s8.bf16 %v2398
          %v2603 = vunpack.c.l.s8.bf16 %v2399
          %v2604 = vunpack.c.h.s8.bf16 %v2396
          %v2605 = vunpack.c.h.s8.bf16 %v2397
          %v2606 = vunpack.c.h.s8.bf16 %v2398
          %v2607 = vunpack.c.h.s8.bf16 %v2399
          %v2608 = vunpack.c.l.s8.bf16 %v2400
          %v2609 = vunpack.c.l.s8.bf16 %v2401
          %v2610 = vunpack.c.l.s8.bf16 %v2402
          %v2611 = vunpack.c.l.s8.bf16 %v2403
          %v2612 = vunpack.c.h.s8.bf16 %v2400
          %v2613 = vunpack.c.h.s8.bf16 %v2401
          %v2614 = vunpack.c.h.s8.bf16 %v2402
          %v2615 = vunpack.c.h.s8.bf16 %v2403
          %v2616 = vunpack.c.l.s8.bf16 %v2404
          %v2617 = vunpack.c.l.s8.bf16 %v2405
          %v2618 = vunpack.c.l.s8.bf16 %v2406
          %v2619 = vunpack.c.l.s8.bf16 %v2407
          %v2620 = vunpack.c.h.s8.bf16 %v2404
          %v2621 = vunpack.c.h.s8.bf16 %v2405
          %v2622 = vunpack.c.h.s8.bf16 %v2406
          %v2623 = vunpack.c.h.s8.bf16 %v2407
          %v2624 = vunpack.c.l.s8.bf16 %v2408
          %v2625 = vunpack.c.l.s8.bf16 %v2409
          %v2626 = vunpack.c.l.s8.bf16 %v2410
          %v2627 = vunpack.c.l.s8.bf16 %v2411
          %v2628 = vunpack.c.h.s8.bf16 %v2408
          %v2629 = vunpack.c.h.s8.bf16 %v2409
          %v2630 = vunpack.c.h.s8.bf16 %v2410
          %v2631 = vunpack.c.h.s8.bf16 %v2411
          %v2632 = vunpack.c.l.s8.bf16 %v2412
          %v2633 = vunpack.c.l.s8.bf16 %v2413
          %v2634 = vunpack.c.l.s8.bf16 %v2414
          %v2635 = vunpack.c.l.s8.bf16 %v2415
          %v2636 = vunpack.c.h.s8.bf16 %v2412
          %v2637 = vunpack.c.h.s8.bf16 %v2413
          %v2638 = vunpack.c.h.s8.bf16 %v2414
          %v2639 = vunpack.c.h.s8.bf16 %v2415
          %2640 = vmatprep.subr.bf16.mxu0 %v2417
          %2641 = vmatpush1.bf16.msra.mxu0 %v2416
          %2642 = vmatprep.subr.bf16.mxu0 %v2421
          %2643 = vmatpush1.bf16.msra.mxu0 %v2420
          %2644 = vmatprep.subr.bf16.mxu0 %v2425
          %2645 = vmatpush1.bf16.msra.mxu0 %v2424
          %2646 = vmatprep.subr.bf16.mxu0 %v2429
          %2647 = vmatpush1.bf16.msra.mxu0 %v2428
          %2648 = vmatprep.subr.bf16.mxu0 %v2433
          %2649 = vmatpush1.bf16.msra.mxu0 %v2432
          %2650 = vmatprep.subr.bf16.mxu0 %v2437
          %2651 = vmatpush1.bf16.msra.mxu0 %v2436
          %2652 = vmatprep.subr.bf16.mxu0 %v2441
          %2653 = vmatpush1.bf16.msra.mxu0 %v2440
          %2654 = vmatprep.subr.bf16.mxu0 %v2445
          %2655 = vmatpush1.bf16.msra.mxu0 %v2444
          %2656 = vmatprep.subr.bf16.mxu0 %v2449
          %2657 = vmatpush1.bf16.msra.mxu0 %v2448
          %2658 = vmatprep.subr.bf16.mxu0 %v2453
          %2659 = vmatpush1.bf16.msra.mxu0 %v2452
          %2660 = vmatprep.subr.bf16.mxu0 %v2457
          %2661 = vmatpush1.bf16.msra.mxu0 %v2456
          %2662 = vmatprep.subr.bf16.mxu0 %v2461
          %2663 = vmatpush1.bf16.msra.mxu0 %v2460
          %2664 = vmatprep.subr.bf16.mxu0 %v2465
          %2665 = vmatpush1.bf16.msra.mxu0 %v2464
          %2666 = vmatprep.subr.bf16.mxu0 %v2469
          %2667 = vmatpush1.bf16.msra.mxu0 %v2468
          %2668 = vmatprep.subr.bf16.mxu0 %v2473
          %2669 = vmatpush1.bf16.msra.mxu0 %v2472
          %2670 = vmatprep.subr.bf16.mxu0 %v2477
          %2671 = vmatpush1.bf16.msra.mxu0 %v2476
          %2672 = vmatprep.mubr.bf16.mxu0 %v2298
          %2673 = vmatmul.mubr.bf16.gmra.mrb[0].mxu0 %v2297
          %v2674 = vpop.f32.mrb[0].mxu0
          %v2675 = vadd.f32 0.0, %v2674
          %v2676 = vpop.f32.mrb[0].mxu0
          %v2677 = vadd.f32 0.0, %v2676
          %v2678 = vpop.f32.mrb[0].mxu0
          %v2679 = vadd.f32 0.0, %v2678
          %v2680 = vpop.f32.mrb[0].mxu0
          %v2681 = vadd.f32 0.0, %v2680
          %2682 = vdwg.mxu0
          %2683 = vmatprep.subr.bf16.mxu0 %v2481
          %2684 = vmatpush1.bf16.msra.mxu0 %v2480
          %2685 = vmatprep.subr.bf16.mxu0 %v2485
          %2686 = vmatpush1.bf16.msra.mxu0 %v2484
          %2687 = vmatprep.subr.bf16.mxu0 %v2489
          %2688 = vmatpush1.bf16.msra.mxu0 %v2488
          %2689 = vmatprep.subr.bf16.mxu0 %v2493
          %2690 = vmatpush1.bf16.msra.mxu0 %v2492
          %2691 = vmatprep.subr.bf16.mxu0 %v2497
          %2692 = vmatpush1.bf16.msra.mxu0 %v2496
          %2693 = vmatprep.subr.bf16.mxu0 %v2501
          %2694 = vmatpush1.bf16.msra.mxu0 %v2500
          %2695 = vmatprep.subr.bf16.mxu0 %v2505
          %2696 = vmatpush1.bf16.msra.mxu0 %v2504
          %2697 = vmatprep.subr.bf16.mxu0 %v2509
          %2698 = vmatpush1.bf16.msra.mxu0 %v2508
          %2699 = vmatprep.subr.bf16.mxu0 %v2513
          %2700 = vmatpush1.bf16.msra.mxu0 %v2512
          %2701 = vmatprep.subr.bf16.mxu0 %v2517
          %2702 = vmatpush1.bf16.msra.mxu0 %v2516
          %2703 = vmatprep.subr.bf16.mxu0 %v2521
          %2704 = vmatpush1.bf16.msra.mxu0 %v2520
          %2705 = vmatprep.subr.bf16.mxu0 %v2525
          %2706 = vmatpush1.bf16.msra.mxu0 %v2524
          %2707 = vmatprep.subr.bf16.mxu0 %v2529
          %2708 = vmatpush1.bf16.msra.mxu0 %v2528
          %2709 = vmatprep.subr.bf16.mxu0 %v2533
          %2710 = vmatpush1.bf16.msra.mxu0 %v2532
          %2711 = vmatprep.subr.bf16.mxu0 %v2537
          %2712 = vmatpush1.bf16.msra.mxu0 %v2536
          %2713 = vmatprep.subr.bf16.mxu0 %v2541
          %2714 = vmatpush1.bf16.msra.mxu0 %v2540
          %2715 = vmatprep.mubr.bf16.mxu0 %v2300
          %2716 = vmatmul.mubr.bf16.gmra.mrb[0].mxu0 %v2299
          %v2717 = vpop.f32.mrb[0].mxu0
          %v2718 = vadd.f32 %v2675, %v2717
          %v2719 = vpop.f32.mrb[0].mxu0
          %v2720 = vadd.f32 %v2677, %v2719
          %v2721 = vpop.f32.mrb[0].mxu0
          %v2722 = vadd.f32 %v2679, %v2721
          %v2723 = vpop.f32.mrb[0].mxu0
          %v2724 = vadd.f32 %v2681, %v2723
          %2725 = vdwg.mxu0
          %2726 = vmatprep.subr.bf16.mxu0 %v2545
          %2727 = vmatpush1.bf16.msra.mxu0 %v2544
          %2728 = vmatprep.subr.bf16.mxu0 %v2549
          %2729 = vmatpush1.bf16.msra.mxu0 %v2548
          %2730 = vmatprep.subr.bf16.mxu0 %v2553
          %2731 = vmatpush1.bf16.msra.mxu0 %v2552
          %2732 = vmatprep.subr.bf16.mxu0 %v2557
          %2733 = vmatpush1.bf16.msra.mxu0 %v2556
          %2734 = vmatprep.subr.bf16.mxu0 %v2561
          %2735 = vmatpush1.bf16.msra.mxu0 %v2560
          %2736 = vmatprep.subr.bf16.mxu0 %v2565
          %2737 = vmatpush1.bf16.msra.mxu0 %v2564
          %2738 = vmatprep.subr.bf16.mxu0 %v2569
          %2739 = vmatpush1.bf16.msra.mxu0 %v2568
          %2740 = vmatprep.subr.bf16.mxu0 %v2573
          %2741 = vmatpush1.bf16.msra.mxu0 %v2572
          %2742 = vmatprep.subr.bf16.mxu0 %v2577
          %2743 = vmatpush1.bf16.msra.mxu0 %v2576
          %2744 = vmatprep.subr.bf16.mxu0 %v2581
          %2745 = vmatpush1.bf16.msra.mxu0 %v2580
          %2746 = vmatprep.subr.bf16.mxu0 %v2585
          %2747 = vmatpush1.bf16.msra.mxu0 %v2584
          %2748 = vmatprep.subr.bf16.mxu0 %v2589
          %2749 = vmatpush1.bf16.msra.mxu0 %v2588
          %2750 = vmatprep.subr.bf16.mxu0 %v2593
          %2751 = vmatpush1.bf16.msra.mxu0 %v2592
          %2752 = vmatprep.subr.bf16.mxu0 %v2597
          %2753 = vmatpush1.bf16.msra.mxu0 %v2596
          %2754 = vmatprep.subr.bf16.mxu0 %v2601
          %2755 = vmatpush1.bf16.msra.mxu0 %v2600
          %2756 = vmatprep.subr.bf16.mxu0 %v2605
          %2757 = vmatpush1.bf16.msra.mxu0 %v2604
          %2758 = vmatprep.mubr.bf16.mxu0 %v2302
          %2759 = vmatmul.mubr.bf16.gmra.mrb[0].mxu0 %v2301
          %v2760 = vpop.f32.mrb[0].mxu0
          %v2761 = vadd.f32 %v2718, %v2760
          %v2762 = vpop.f32.mrb[0].mxu0
          %v2763 = vadd.f32 %v2720, %v2762
          %v2764 = vpop.f32.mrb[0].mxu0
          %v2765 = vadd.f32 %v2722, %v2764
          %v2766 = vpop.f32.mrb[0].mxu0
          %v2767 = vadd.f32 %v2724, %v2766
          %2768 = vdwg.mxu0
          %2769 = vmatprep.subr.bf16.mxu0 %v2609
          %2770 = vmatpush1.bf16.msra.mxu0 %v2608
          %2771 = vmatprep.subr.bf16.mxu0 %v2613
          %2772 = vmatpush1.bf16.msra.mxu0 %v2612
          %2773 = vmatprep.subr.bf16.mxu0 %v2617
          %2774 = vmatpush1.bf16.msra.mxu0 %v2616
          %2775 = vmatprep.subr.bf16.mxu0 %v2621
          %2776 = vmatpush1.bf16.msra.mxu0 %v2620
          %2777 = vmatprep.subr.bf16.mxu0 %v2625
          %2778 = vmatpush1.bf16.msra.mxu0 %v2624
          %2779 = vmatprep.subr.bf16.mxu0 %v2629
          %2780 = vmatpush1.bf16.msra.mxu0 %v2628
          %2781 = vmatprep.subr.bf16.mxu0 %v2633
          %2782 = vmatpush1.bf16.msra.mxu0 %v2632
          %2783 = vmatprep.subr.bf16.mxu0 %v2637
          %2784 = vmatpush1.bf16.msra.mxu0 %v2636
          %2785 = vmatprep.subr.bf16.mxu0 0
          %2786 = vmatpush1.bf16.msra.mxu0 0
          %2787 = vmatprep.subr.bf16.mxu0 0
          %2788 = vmatpush1.bf16.msra.mxu0 0
          %2789 = vmatprep.subr.bf16.mxu0 0
          %2790 = vmatpush1.bf16.msra.mxu0 0
          %2791 = vmatprep.subr.bf16.mxu0 0
          %2792 = vmatpush1.bf16.msra.mxu0 0
          %2793 = vmatprep.subr.bf16.mxu0 0
          %2794 = vmatpush1.bf16.msra.mxu0 0
          %2795 = vmatprep.subr.bf16.mxu0 0
          %2796 = vmatpush1.bf16.msra.mxu0 0
          %2797 = vmatprep.subr.bf16.mxu0 0
          %2798 = vmatpush1.bf16.msra.mxu0 0
          %2799 = vmatprep.subr.bf16.mxu0 0
          %2800 = vmatpush1.bf16.msra.mxu0 0
          %2801 = vmatprep.mubr.bf16.mxu0 0
          %2802 = vmatmul.mubr.bf16.gmra.mrb[0].mxu0 %v2303
          %v2803 = vpop.f32.mrb[0].mxu0
          %v2804 = vadd.f32 %v2761, %v2803
          %v2805 = vpop.f32.mrb[0].mxu0
          %v2806 = vadd.f32 %v2763, %v2805
          %v2807 = vpop.f32.mrb[0].mxu0
          %v2808 = vadd.f32 %v2765, %v2807
          %v2809 = vpop.f32.mrb[0].mxu0
          %v2810 = vadd.f32 %v2767, %v2809
          %2811 = vdwg.mxu0
          %2812 = vmatprep.subr.bf16.mxu0 %v2419
          %2813 = vmatpush1.bf16.msra.mxu0 %v2418
          %2814 = vmatprep.subr.bf16.mxu0 %v2423
          %2815 = vmatpush1.bf16.msra.mxu0 %v2422
          %2816 = vmatprep.subr.bf16.mxu0 %v2427
          %2817 = vmatpush1.bf16.msra.mxu0 %v2426
          %2818 = vmatprep.subr.bf16.mxu0 %v2431
          %2819 = vmatpush1.bf16.msra.mxu0 %v2430
          %2820 = vmatprep.subr.bf16.mxu0 %v2435
          %2821 = vmatpush1.bf16.msra.mxu0 %v2434
          %2822 = vmatprep.subr.bf16.mxu0 %v2439
          %2823 = vmatpush1.bf16.msra.mxu0 %v2438
          %2824 = vmatprep.subr.bf16.mxu0 %v2443
          %2825 = vmatpush1.bf16.msra.mxu0 %v2442
          %2826 = vmatprep.subr.bf16.mxu0 %v2447
          %2827 = vmatpush1.bf16.msra.mxu0 %v2446
          %2828 = vmatprep.subr.bf16.mxu0 %v2451
          %2829 = vmatpush1.bf16.msra.mxu0 %v2450
          %2830 = vmatprep.subr.bf16.mxu0 %v2455
          %2831 = vmatpush1.bf16.msra.mxu0 %v2454
          %2832 = vmatprep.subr.bf16.mxu0 %v2459
          %2833 = vmatpush1.bf16.msra.mxu0 %v2458
          %2834 = vmatprep.subr.bf16.mxu0 %v2463
          %2835 = vmatpush1.bf16.msra.mxu0 %v2462
          %2836 = vmatprep.subr.bf16.mxu0 %v2467
          %2837 = vmatpush1.bf16.msra.mxu0 %v2466
          %2838 = vmatprep.subr.bf16.mxu0 %v2471
          %2839 = vmatpush1.bf16.msra.mxu0 %v2470
          %2840 = vmatprep.subr.bf16.mxu0 %v2475
          %2841 = vmatpush1.bf16.msra.mxu0 %v2474
          %2842 = vmatprep.subr.bf16.mxu0 %v2479
          %2843 = vmatpush1.bf16.msra.mxu0 %v2478
          %2844 = vmatprep.mubr.bf16.mxu0 %v2298
          %2845 = vmatmul.mubr.bf16.gmra.mrb[0].mxu0 %v2297
          %v2846 = vpop.f32.mrb[0].mxu0
          %v2847 = vadd.f32 0.0, %v2846
          %v2848 = vpop.f32.mrb[0].mxu0
          %v2849 = vadd.f32 0.0, %v2848
          %v2850 = vpop.f32.mrb[0].mxu0
          %v2851 = vadd.f32 0.0, %v2850
          %v2852 = vpop.f32.mrb[0].mxu0
          %v2853 = vadd.f32 0.0, %v2852
          %2854 = vdwg.mxu0
          %2855 = vmatprep.subr.bf16.mxu0 %v2483
          %2856 = vmatpush1.bf16.msra.mxu0 %v2482
          %2857 = vmatprep.subr.bf16.mxu0 %v2487
          %2858 = vmatpush1.bf16.msra.mxu0 %v2486
          %2859 = vmatprep.subr.bf16.mxu0 %v2491
          %2860 = vmatpush1.bf16.msra.mxu0 %v2490
          %2861 = vmatprep.subr.bf16.mxu0 %v2495
          %2862 = vmatpush1.bf16.msra.mxu0 %v2494
          %2863 = vmatprep.subr.bf16.mxu0 %v2499
          %2864 = vmatpush1.bf16.msra.mxu0 %v2498
          %2865 = vmatprep.subr.bf16.mxu0 %v2503
          %2866 = vmatpush1.bf16.msra.mxu0 %v2502
          %2867 = vmatprep.subr.bf16.mxu0 %v2507
          %2868 = vmatpush1.bf16.msra.mxu0 %v2506
          %2869 = vmatprep.subr.bf16.mxu0 %v2511
          %2870 = vmatpush1.bf16.msra.mxu0 %v2510
          %2871 = vmatprep.subr.bf16.mxu0 %v2515
          %2872 = vmatpush1.bf16.msra.mxu0 %v2514
          %2873 = vmatprep.subr.bf16.mxu0 %v2519
          %2874 = vmatpush1.bf16.msra.mxu0 %v2518
          %2875 = vmatprep.subr.bf16.mxu0 %v2523
          %2876 = vmatpush1.bf16.msra.mxu0 %v2522
          %2877 = vmatprep.subr.bf16.mxu0 %v2527
          %2878 = vmatpush1.bf16.msra.mxu0 %v2526
          %2879 = vmatprep.subr.bf16.mxu0 %v2531
          %2880 = vmatpush1.bf16.msra.mxu0 %v2530
          %2881 = vmatprep.subr.bf16.mxu0 %v2535
          %2882 = vmatpush1.bf16.msra.mxu0 %v2534
          %2883 = vmatprep.subr.bf16.mxu0 %v2539
          %2884 = vmatpush1.bf16.msra.mxu0 %v2538
          %2885 = vmatprep.subr.bf16.mxu0 %v2543
          %2886 = vmatpush1.bf16.msra.mxu0 %v2542
          %2887 = vmatprep.mubr.bf16.mxu0 %v2300
          %2888 = vmatmul.mubr.bf16.gmra.mrb[0].mxu0 %v2299
          %v2889 = vpop.f32.mrb[0].mxu0
          %v2890 = vadd.f32 %v2847, %v2889
          %v2891 = vpop.f32.mrb[0].mxu0
          %v2892 = vadd.f32 %v2849, %v2891
          %v2893 = vpop.f32.mrb[0].mxu0
          %v2894 = vadd.f32 %v2851, %v2893
          %v2895 = vpop.f32.mrb[0].mxu0
          %v2896 = vadd.f32 %v2853, %v2895
          %2897 = vdwg.mxu0
          %2898 = vmatprep.subr.bf16.mxu0 %v2547
          %2899 = vmatpush1.bf16.msra.mxu0 %v2546
          %2900 = vmatprep.subr.bf16.mxu0 %v2551
          %2901 = vmatpush1.bf16.msra.mxu0 %v2550
          %2902 = vmatprep.subr.bf16.mxu0 %v2555
          %2903 = vmatpush1.bf16.msra.mxu0 %v2554
          %2904 = vmatprep.subr.bf16.mxu0 %v2559
          %2905 = vmatpush1.bf16.msra.mxu0 %v2558
          %2906 = vmatprep.subr.bf16.mxu0 %v2563
          %2907 = vmatpush1.bf16.msra.mxu0 %v2562
          %2908 = vmatprep.subr.bf16.mxu0 %v2567
          %2909 = vmatpush1.bf16.msra.mxu0 %v2566
          %2910 = vmatprep.subr.bf16.mxu0 %v2571
          %2911 = vmatpush1.bf16.msra.mxu0 %v2570
          %2912 = vmatprep.subr.bf16.mxu0 %v2575
          %2913 = vmatpush1.bf16.msra.mxu0 %v2574
          %2914 = vmatprep.subr.bf16.mxu0 %v2579
          %2915 = vmatpush1.bf16.msra.mxu0 %v2578
          %2916 = vmatprep.subr.bf16.mxu0 %v2583
          %2917 = vmatpush1.bf16.msra.mxu0 %v2582
          %2918 = vmatprep.subr.bf16.mxu0 %v2587
          %2919 = vmatpush1.bf16.msra.mxu0 %v2586
          %2920 = vmatprep.subr.bf16.mxu0 %v2591
          %2921 = vmatpush1.bf16.msra.mxu0 %v2590
          %2922 = vmatprep.subr.bf16.mxu0 %v2595
          %2923 = vmatpush1.bf16.msra.mxu0 %v2594
          %2924 = vmatprep.subr.bf16.mxu0 %v2599
          %2925 = vmatpush1.bf16.msra.mxu0 %v2598
          %2926 = vmatprep.subr.bf16.mxu0 %v2603
          %2927 = vmatpush1.bf16.msra.mxu0 %v2602
          %2928 = vmatprep.subr.bf16.mxu0 %v2607
          %2929 = vmatpush1.bf16.msra.mxu0 %v2606
          %2930 = vmatprep.mubr.bf16.mxu0 %v2302
          %2931 = vmatmul.mubr.bf16.gmra.mrb[0].mxu0 %v2301
          %v2932 = vpop.f32.mrb[0].mxu0
          %v2933 = vadd.f32 %v2890, %v2932
          %v2934 = vpop.f32.mrb[0].mxu0
          %v2935 = vadd.f32 %v2892, %v2934
          %v2936 = vpop.f32.mrb[0].mxu0
          %v2937 = vadd.f32 %v2894, %v2936
          %v2938 = vpop.f32.mrb[0].mxu0
          %v2939 = vadd.f32 %v2896, %v2938
          %2940 = vdwg.mxu0
          %2941 = vmatprep.subr.bf16.mxu0 %v2611
          %2942 = vmatpush1.bf16.msra.mxu0 %v2610
          %2943 = vmatprep.subr.bf16.mxu0 %v2615
          %2944 = vmatpush1.bf16.msra.mxu0 %v2614
          %2945 = vmatprep.subr.bf16.mxu0 %v2619
          %2946 = vmatpush1.bf16.msra.mxu0 %v2618
          %2947 = vmatprep.subr.bf16.mxu0 %v2623
          %2948 = vmatpush1.bf16.msra.mxu0 %v2622
          %2949 = vmatprep.subr.bf16.mxu0 %v2627
          %2950 = vmatpush1.bf16.msra.mxu0 %v2626
          %2951 = vmatprep.subr.bf16.mxu0 %v2631
          %2952 = vmatpush1.bf16.msra.mxu0 %v2630
          %2953 = vmatprep.subr.bf16.mxu0 %v2635
          %2954 = vmatpush1.bf16.msra.mxu0 %v2634
          %2955 = vmatprep.subr.bf16.mxu0 %v2639
          %2956 = vmatpush1.bf16.msra.mxu0 %v2638
          %2957 = vmatprep.subr.bf16.mxu0 0
          %2958 = vmatpush1.bf16.msra.mxu0 0
          %2959 = vmatprep.subr.bf16.mxu0 0
          %2960 = vmatpush1.bf16.msra.mxu0 0
          %2961 = vmatprep.subr.bf16.mxu0 0
          %2962 = vmatpush1.bf16.msra.mxu0 0
          %2963 = vmatprep.subr.bf16.mxu0 0
          %2964 = vmatpush1.bf16.msra.mxu0 0
          %2965 = vmatprep.subr.bf16.mxu0 0
          %2966 = vmatpush1.bf16.msra.mxu0 0
          %2967 = vmatprep.subr.bf16.mxu0 0
          %2968 = vmatpush1.bf16.msra.mxu0 0
          %2969 = vmatprep.subr.bf16.mxu0 0
          %2970 = vmatpush1.bf16.msra.mxu0 0
          %2971 = vmatprep.subr.bf16.mxu0 0
          %2972 = vmatpush1.bf16.msra.mxu0 0
          %2973 = vmatprep.mubr.bf16.mxu0 0
          %2974 = vmatmul.mubr.bf16.gmra.mrb[0].mxu0 %v2303
          %v2975 = vpop.f32.mrb[0].mxu0
          %v2976 = vadd.f32 %v2933, %v2975
          %v2977 = vpop.f32.mrb[0].mxu0
          %v2978 = vadd.f32 %v2935, %v2977
          %v2979 = vpop.f32.mrb[0].mxu0
          %v2980 = vadd.f32 %v2937, %v2979
          %v2981 = vpop.f32.mrb[0].mxu0
          %v2982 = vadd.f32 %v2939, %v2981
          %2983 = vdwg.mxu0
          %v2984 = vld [vmem:[#allocation13] sm:$0xf]
          %v2986 = vlaneseq
          %v2987 = vshrl.u32 %v2986, 7
          %v2988 = vsub.s32 0, %v2987
          %v2989 = vrot.slane %v2984, %v2988
          %v2990 = vlaneseq
          %v2991 = vshrl.u32 %v2990, 7
          %v2992 = vsub.s32 1, %v2991
          %v2993 = vrot.slane %v2984, %v2992
          %v2994 = vlaneseq
          %v2995 = vshrl.u32 %v2994, 7
          %v2996 = vsub.s32 2, %v2995
          %v2997 = vrot.slane %v2984, %v2996
          %v2998 = vlaneseq
          %v2999 = vshrl.u32 %v2998, 7
          %v3000 = vsub.s32 3, %v2999
          %v3001 = vrot.slane %v2984, %v3000
          %v3006 = vmul.f32 %v2804, %v2989
          %v3007 = vmul.f32 %v2806, %v2993
          %v3008 = vmul.f32 %v2976, %v2997
          %v3009 = vmul.f32 %v2978, %v3001
          %v3010 = vmul.f32 %v2808, %v2989
          %v3011 = vmul.f32 %v2810, %v2993
          %v3012 = vmul.f32 %v2980, %v2997
          %v3013 = vmul.f32 %v2982, %v3001
          %v3014 = vld [vmem:[#allocation15] sm:$0xf]
          %v3016 = vlaneseq
          %v3017 = vshrl.u32 %v3016, 7
          %v3018 = vsub.s32 0, %v3017
          %v3019 = vrot.slane %v3014, %v3018
          %v3020 = vlaneseq
          %v3021 = vshrl.u32 %v3020, 7
          %v3022 = vsub.s32 1, %v3021
          %v3023 = vrot.slane %v3014, %v3022
          %v3024 = vlaneseq
          %v3025 = vshrl.u32 %v3024, 7
          %v3026 = vsub.s32 2, %v3025
          %v3027 = vrot.slane %v3014, %v3026
          %v3028 = vlaneseq
          %v3029 = vshrl.u32 %v3028, 7
          %v3030 = vsub.s32 3, %v3029
          %v3031 = vrot.slane %v3014, %v3030
          %v3036 = vadd.f32 %v3006, %v3019
          %v3037 = vadd.f32 %v3007, %v3023
          %v3038 = vadd.f32 %v3008, %v3027
          %v3039 = vadd.f32 %v3009, %v3031
          %v3040 = vadd.f32 %v3010, %v3019
          %v3041 = vadd.f32 %v3011, %v3023
          %v3042 = vadd.f32 %v3012, %v3027
          %v3043 = vadd.f32 %v3013, %v3031
          %s3044 = sld [smem:[#allocation25 + $0x1]]
          %vm3045 = vcmp.gt.f32.partialorder %v3036, 0.0
          %vm3046 = vcmp.gt.f32.partialorder %v3037, 0.0
          %vm3047 = vcmp.gt.f32.partialorder %v3038, 0.0
          %vm3048 = vcmp.gt.f32.partialorder %v3039, 0.0
          %vm3049 = vcmp.gt.f32.partialorder %v3040, 0.0
          %vm3050 = vcmp.gt.f32.partialorder %v3041, 0.0
          %vm3051 = vcmp.gt.f32.partialorder %v3042, 0.0
          %vm3052 = vcmp.gt.f32.partialorder %v3043, 0.0
          %v3053 = vstv %s3044
          %v3054 = vmul.f32 %v3053, %v3036
          %v3055 = vmul.f32 %v3053, %v3037
          %v3056 = vmul.f32 %v3053, %v3038
          %v3057 = vmul.f32 %v3053, %v3039
          %v3058 = vmul.f32 %v3053, %v3040
          %v3059 = vmul.f32 %v3053, %v3041
          %v3060 = vmul.f32 %v3053, %v3042
          %v3061 = vmul.f32 %v3053, %v3043
          %v3062 = vsel %vm3045, %v3036, %v3054
          %v3063 = vsel %vm3046, %v3037, %v3055
          %v3064 = vsel %vm3047, %v3038, %v3056
          %v3065 = vsel %vm3048, %v3039, %v3057
          %v3066 = vsel %vm3049, %v3040, %v3058
          %v3067 = vsel %vm3050, %v3041, %v3059
          %v3068 = vsel %vm3051, %v3042, %v3060
          %v3069 = vsel %vm3052, %v3043, %v3061
          %v3070 = vpack.c.bf16 %v3066, %v3062
          %v3071 = vpack.c.bf16 %v3067, %v3063
          %v3072 = vpack.c.bf16 %v3068, %v3064
          %v3073 = vpack.c.bf16 %v3069, %v3065
          %v3074 = vld [vmem:[#allocation16] sm:$0xff]
          %v3075 = vld [vmem:[#allocation16 + $0x8] sm:$0xff]
          %v3076 = vld [vmem:[#allocation16 + $0x10] sm:$0xff]
          %v3077 = vld [vmem:[#allocation16 + $0x18] sm:$0xff]
          %v3078 = vld [vmem:[#allocation16 + $0x20] sm:$0xff]
          %v3079 = vld [vmem:[#allocation16 + $0x28] sm:$0xff]
          %v3080 = vld [vmem:[#allocation16 + $0x30] sm:$0xff]
          %v3081 = vld [vmem:[#allocation16 + $0x38] sm:$0xff]
          %v3082 = vld [vmem:[#allocation16 + $0x40] sm:$0xff]
          %v3083 = vld [vmem:[#allocation16 + $0x48] sm:$0xff]
          %v3084 = vld [vmem:[#allocation16 + $0x50] sm:$0xff]
          %v3085 = vld [vmem:[#allocation16 + $0x58] sm:$0xff]
          %v3086 = vld [vmem:[#allocation16 + $0x60] sm:$0xff]
          %v3087 = vld [vmem:[#allocation16 + $0x68] sm:$0xff]
          %v3088 = vld [vmem:[#allocation16 + $0x70] sm:$0xff]
          %v3089 = vld [vmem:[#allocation16 + $0x78] sm:$0xff]
          %v3090 = vld [vmem:[#allocation16 + $0x80] sm:$0xff]
          %v3091 = vld [vmem:[#allocation16 + $0x88] sm:$0xff]
          %v3092 = vld [vmem:[#allocation16 + $0x90] sm:$0xff]
          %v3093 = vld [vmem:[#allocation16 + $0x98] sm:$0xff]
          %v3094 = vld [vmem:[#allocation16 + $0xa0] sm:$0xff]
          %v3095 = vld [vmem:[#allocation16 + $0xa8] sm:$0xff]
          %v3096 = vld [vmem:[#allocation16 + $0xb0] sm:$0xff]
          %v3097 = vld [vmem:[#allocation16 + $0xb8] sm:$0xff]
          %v3098 = vld [vmem:[#allocation16 + $0xc0] sm:$0xff]
          %v3099 = vld [vmem:[#allocation16 + $0xc8] sm:$0xff]
          %v3100 = vld [vmem:[#allocation16 + $0xd0] sm:$0xff]
          %v3101 = vld [vmem:[#allocation16 + $0xd8] sm:$0xff]
          %v3102 = vld [vmem:[#allocation16 + $0xe0] sm:$0xff]
          %v3103 = vld [vmem:[#allocation16 + $0xe8] sm:$0xff]
          %v3104 = vld [vmem:[#allocation16 + $0xf0] sm:$0xff]
          %v3105 = vld [vmem:[#allocation16 + $0xf8] sm:$0xff]
          %v3106 = vunpack.c.l.s8.bf16 %v3074
          %v3107 = vunpack.c.l.s8.bf16 %v3075
          %v3108 = vunpack.c.h.s8.bf16 %v3074
          %v3109 = vunpack.c.h.s8.bf16 %v3075
          %v3110 = vunpack.c.l.s8.bf16 %v3076
          %v3111 = vunpack.c.l.s8.bf16 %v3077
          %v3112 = vunpack.c.h.s8.bf16 %v3076
          %v3113 = vunpack.c.h.s8.bf16 %v3077
          %v3114 = vunpack.c.l.s8.bf16 %v3078
          %v3115 = vunpack.c.l.s8.bf16 %v3079
          %v3116 = vunpack.c.h.s8.bf16 %v3078
          %v3117 = vunpack.c.h.s8.bf16 %v3079
          %v3118 = vunpack.c.l.s8.bf16 %v3080
          %v3119 = vunpack.c.l.s8.bf16 %v3081
          %v3120 = vunpack.c.h.s8.bf16 %v3080
          %v3121 = vunpack.c.h.s8.bf16 %v3081
          %v3122 = vunpack.c.l.s8.bf16 %v3082
          %v3123 = vunpack.c.l.s8.bf16 %v3083
          %v3124 = vunpack.c.h.s8.bf16 %v3082
          %v3125 = vunpack.c.h.s8.bf16 %v3083
          %v3126 = vunpack.c.l.s8.bf16 %v3084
          %v3127 = vunpack.c.l.s8.bf16 %v3085
          %v3128 = vunpack.c.h.s8.bf16 %v3084
          %v3129 = vunpack.c.h.s8.bf16 %v3085
          %v3130 = vunpack.c.l.s8.bf16 %v3086
          %v3131 = vunpack.c.l.s8.bf16 %v3087
          %v3132 = vunpack.c.h.s8.bf16 %v3086
          %v3133 = vunpack.c.h.s8.bf16 %v3087
          %v3134 = vunpack.c.l.s8.bf16 %v3088
          %v3135 = vunpack.c.l.s8.bf16 %v3089
          %v3136 = vunpack.c.h.s8.bf16 %v3088
          %v3137 = vunpack.c.h.s8.bf16 %v3089
          %v3138 = vunpack.c.l.s8.bf16 %v3090
          %v3139 = vunpack.c.l.s8.bf16 %v3091
          %v3140 = vunpack.c.h.s8.bf16 %v3090
          %v3141 = vunpack.c.h.s8.bf16 %v3091
          %v3142 = vunpack.c.l.s8.bf16 %v3092
          %v3143 = vunpack.c.l.s8.bf16 %v3093
          %v3144 = vunpack.c.h.s8.bf16 %v3092
          %v3145 = vunpack.c.h.s8.bf16 %v3093
          %v3146 = vunpack.c.l.s8.bf16 %v3094
          %v3147 = vunpack.c.l.s8.bf16 %v3095
          %v3148 = vunpack.c.h.s8.bf16 %v3094
          %v3149 = vunpack.c.h.s8.bf16 %v3095
          %v3150 = vunpack.c.l.s8.bf16 %v3096
          %v3151 = vunpack.c.l.s8.bf16 %v3097
          %v3152 = vunpack.c.h.s8.bf16 %v3096
          %v3153 = vunpack.c.h.s8.bf16 %v3097
          %v3154 = vunpack.c.l.s8.bf16 %v3098
          %v3155 = vunpack.c.l.s8.bf16 %v3099
          %v3156 = vunpack.c.h.s8.bf16 %v3098
          %v3157 = vunpack.c.h.s8.bf16 %v3099
          %v3158 = vunpack.c.l.s8.bf16 %v3100
          %v3159 = vunpack.c.l.s8.bf16 %v3101
          %v3160 = vunpack.c.h.s8.bf16 %v3100
          %v3161 = vunpack.c.h.s8.bf16 %v3101
          %v3162 = vunpack.c.l.s8.bf16 %v3102
          %v3163 = vunpack.c.l.s8.bf16 %v3103
          %v3164 = vunpack.c.h.s8.bf16 %v3102
          %v3165 = vunpack.c.h.s8.bf16 %v3103
          %v3166 = vunpack.c.l.s8.bf16 %v3104
          %v3167 = vunpack.c.l.s8.bf16 %v3105
          %v3168 = vunpack.c.h.s8.bf16 %v3104
          %v3169 = vunpack.c.h.s8.bf16 %v3105
          %3170 = vmatprep.subr.bf16.mxu0 %v3107
          %3171 = vmatpush1.bf16.msra.mxu0 %v3106
          %3172 = vmatprep.subr.bf16.mxu0 %v3109
          %3173 = vmatpush1.bf16.msra.mxu0 %v3108
          %3174 = vmatprep.subr.bf16.mxu0 %v3111
          %3175 = vmatpush1.bf16.msra.mxu0 %v3110
          %3176 = vmatprep.subr.bf16.mxu0 %v3113
          %3177 = vmatpush1.bf16.msra.mxu0 %v3112
          %3178 = vmatprep.subr.bf16.mxu0 %v3115
          %3179 = vmatpush1.bf16.msra.mxu0 %v3114
          %3180 = vmatprep.subr.bf16.mxu0 %v3117
          %3181 = vmatpush1.bf16.msra.mxu0 %v3116
          %3182 = vmatprep.subr.bf16.mxu0 %v3119
          %3183 = vmatpush1.bf16.msra.mxu0 %v3118
          %3184 = vmatprep.subr.bf16.mxu0 %v3121
          %3185 = vmatpush1.bf16.msra.mxu0 %v3120
          %3186 = vmatprep.subr.bf16.mxu0 %v3123
          %3187 = vmatpush1.bf16.msra.mxu0 %v3122
          %3188 = vmatprep.subr.bf16.mxu0 %v3125
          %3189 = vmatpush1.bf16.msra.mxu0 %v3124
          %3190 = vmatprep.subr.bf16.mxu0 %v3127
          %3191 = vmatpush1.bf16.msra.mxu0 %v3126
          %3192 = vmatprep.subr.bf16.mxu0 %v3129
          %3193 = vmatpush1.bf16.msra.mxu0 %v3128
          %3194 = vmatprep.subr.bf16.mxu0 %v3131
          %3195 = vmatpush1.bf16.msra.mxu0 %v3130
          %3196 = vmatprep.subr.bf16.mxu0 %v3133
          %3197 = vmatpush1.bf16.msra.mxu0 %v3132
          %3198 = vmatprep.subr.bf16.mxu0 %v3135
          %3199 = vmatpush1.bf16.msra.mxu0 %v3134
          %3200 = vmatprep.subr.bf16.mxu0 %v3137
          %3201 = vmatpush1.bf16.msra.mxu0 %v3136
          %3202 = vmatprep.mubr.bf16.mxu0 %v3071
          %3203 = vmatmul.mubr.bf16.gmra.mrb[0].mxu0 %v3070
          %v3204 = vpop.f32.mrb[0].mxu0
          %v3205 = vadd.f32 0.0, %v3204
          %v3206 = vpop.f32.mrb[0].mxu0
          %v3207 = vadd.f32 0.0, %v3206
          %v3208 = vpop.f32.mrb[0].mxu0
          %v3209 = vadd.f32 0.0, %v3208
          %v3210 = vpop.f32.mrb[0].mxu0
          %v3211 = vadd.f32 0.0, %v3210
          %3212 = vdwg.mxu0
          %3213 = vmatprep.subr.bf16.mxu0 %v3139
          %3214 = vmatpush1.bf16.msra.mxu0 %v3138
          %3215 = vmatprep.subr.bf16.mxu0 %v3141
          %3216 = vmatpush1.bf16.msra.mxu0 %v3140
          %3217 = vmatprep.subr.bf16.mxu0 %v3143
          %3218 = vmatpush1.bf16.msra.mxu0 %v3142
          %3219 = vmatprep.subr.bf16.mxu0 %v3145
          %3220 = vmatpush1.bf16.msra.mxu0 %v3144
          %3221 = vmatprep.subr.bf16.mxu0 %v3147
          %3222 = vmatpush1.bf16.msra.mxu0 %v3146
          %3223 = vmatprep.subr.bf16.mxu0 %v3149
          %3224 = vmatpush1.bf16.msra.mxu0 %v3148
          %3225 = vmatprep.subr.bf16.mxu0 %v3151
          %3226 = vmatpush1.bf16.msra.mxu0 %v3150
          %3227 = vmatprep.subr.bf16.mxu0 %v3153
          %3228 = vmatpush1.bf16.msra.mxu0 %v3152
          %3229 = vmatprep.subr.bf16.mxu0 %v3155
          %3230 = vmatpush1.bf16.msra.mxu0 %v3154
          %3231 = vmatprep.subr.bf16.mxu0 %v3157
          %3232 = vmatpush1.bf16.msra.mxu0 %v3156
          %3233 = vmatprep.subr.bf16.mxu0 %v3159
          %3234 = vmatpush1.bf16.msra.mxu0 %v3158
          %3235 = vmatprep.subr.bf16.mxu0 %v3161
          %3236 = vmatpush1.bf16.msra.mxu0 %v3160
          %3237 = vmatprep.subr.bf16.mxu0 %v3163
          %3238 = vmatpush1.bf16.msra.mxu0 %v3162
          %3239 = vmatprep.subr.bf16.mxu0 %v3165
          %3240 = vmatpush1.bf16.msra.mxu0 %v3164
          %3241 = vmatprep.subr.bf16.mxu0 %v3167
          %3242 = vmatpush1.bf16.msra.mxu0 %v3166
          %3243 = vmatprep.subr.bf16.mxu0 %v3169
          %3244 = vmatpush1.bf16.msra.mxu0 %v3168
          %3245 = vmatprep.mubr.bf16.mxu0 %v3073
          %3246 = vmatmul.mubr.bf16.gmra.mrb[0].mxu0 %v3072
          %v3247 = vpop.f32.mrb[0].mxu0
          %v3248 = vadd.f32 %v3205, %v3247
          %v3249 = vpop.f32.mrb[0].mxu0
          %v3250 = vadd.f32 %v3207, %v3249
          %v3251 = vpop.f32.mrb[0].mxu0
          %v3252 = vadd.f32 %v3209, %v3251
          %v3253 = vpop.f32.mrb[0].mxu0
          %v3254 = vadd.f32 %v3211, %v3253
          %3255 = vdwg.mxu0
          %v3256 = vld [vmem:[#allocation18] sm:$0x3]
          %v3258 = vlaneseq
          %v3259 = vshrl.u32 %v3258, 7
          %v3260 = vsub.s32 0, %v3259
          %v3261 = vrot.slane %v3256, %v3260
          %v3262 = vlaneseq
          %v3263 = vshrl.u32 %v3262, 7
          %v3264 = vsub.s32 1, %v3263
          %v3265 = vrot.slane %v3256, %v3264
          %v3268 = vmul.f32 %v3248, %v3261
          %v3269 = vmul.f32 %v3250, %v3265
          %v3270 = vmul.f32 %v3252, %v3261
          %v3271 = vmul.f32 %v3254, %v3265
          %v3272 = vld [vmem:[#allocation19] sm:$0x3]
          %v3274 = vlaneseq
          %v3275 = vshrl.u32 %v3274, 7
          %v3276 = vsub.s32 0, %v3275
          %v3277 = vrot.slane %v3272, %v3276
          %v3278 = vlaneseq
          %v3279 = vshrl.u32 %v3278, 7
          %v3280 = vsub.s32 1, %v3279
          %v3281 = vrot.slane %v3272, %v3280
          %v3284 = vadd.f32 %v3268, %v3277
          %v3285 = vadd.f32 %v3269, %v3281
          %v3286 = vadd.f32 %v3270, %v3277
          %v3287 = vadd.f32 %v3271, %v3281
          %s3288 = sld [smem:[#allocation25 + $0x2]]
          %vm3289 = vcmp.gt.f32.partialorder %v3284, 0.0
          %vm3290 = vcmp.gt.f32.partialorder %v3285, 0.0
          %vm3291 = vcmp.gt.f32.partialorder %v3286, 0.0
          %vm3292 = vcmp.gt.f32.partialorder %v3287, 0.0
          %v3293 = vstv %s3288
          %v3294 = vmul.f32 %v3293, %v3284
          %v3295 = vmul.f32 %v3293, %v3285
          %v3296 = vmul.f32 %v3293, %v3286
          %v3297 = vmul.f32 %v3293, %v3287
          %v3298 = vsel %vm3289, %v3284, %v3294
          %v3299 = vsel %vm3290, %v3285, %v3295
          %v3300 = vsel %vm3291, %v3286, %v3296
          %v3301 = vsel %vm3292, %v3287, %v3297
          %v3302 = vpack.c.bf16 %v3300, %v3298
          %v3303 = vpack.c.bf16 %v3301, %v3299
          %v3304 = vld [vmem:[#allocation21] sm:$0xff]
          %v3305 = vld [vmem:[#allocation21 + $0x8] sm:$0xff]
          %v3306 = vld [vmem:[#allocation21 + $0x10] sm:$0xff]
          %v3307 = vld [vmem:[#allocation21 + $0x18] sm:$0xff]
          %v3308 = vld [vmem:[#allocation21 + $0x20] sm:$0xff]
          %v3309 = vld [vmem:[#allocation21 + $0x28] sm:$0xff]
          %v3310 = vld [vmem:[#allocation21 + $0x30] sm:$0xff]
          %v3311 = vld [vmem:[#allocation21 + $0x38] sm:$0xff]
          %v3312 = vunpack.c.l.s8.bf16 %v3304
          %v3313 = vunpack.c.h.s8.bf16 %v3304
          %v3314 = vunpack.c.l.s8.bf16 %v3305
          %v3315 = vunpack.c.h.s8.bf16 %v3305
          %v3316 = vunpack.c.l.s8.bf16 %v3306
          %v3317 = vunpack.c.h.s8.bf16 %v3306
          %v3318 = vunpack.c.l.s8.bf16 %v3307
          %v3319 = vunpack.c.h.s8.bf16 %v3307
          %v3320 = vunpack.c.l.s8.bf16 %v3308
          %v3321 = vunpack.c.h.s8.bf16 %v3308
          %v3322 = vunpack.c.l.s8.bf16 %v3309
          %v3323 = vunpack.c.h.s8.bf16 %v3309
          %v3324 = vunpack.c.l.s8.bf16 %v3310
          %v3325 = vunpack.c.h.s8.bf16 %v3310
          %v3326 = vunpack.c.l.s8.bf16 %v3311
          %v3327 = vunpack.c.h.s8.bf16 %v3311
          %3328 = vmatprep.subr.bf16.mxu0 0
          %3329 = vmatpush1.bf16.msra.mxu0 %v3312
          %3330 = vmatprep.subr.bf16.mxu0 0
          %3331 = vmatpush1.bf16.msra.mxu0 %v3313
          %3332 = vmatprep.subr.bf16.mxu0 0
          %3333 = vmatpush1.bf16.msra.mxu0 %v3314
          %3334 = vmatprep.subr.bf16.mxu0 0
          %3335 = vmatpush1.bf16.msra.mxu0 %v3315
          %3336 = vmatprep.subr.bf16.mxu0 0
          %3337 = vmatpush1.bf16.msra.mxu0 %v3316
          %3338 = vmatprep.subr.bf16.mxu0 0
          %3339 = vmatpush1.bf16.msra.mxu0 %v3317
          %3340 = vmatprep.subr.bf16.mxu0 0
          %3341 = vmatpush1.bf16.msra.mxu0 %v3318
          %3342 = vmatprep.subr.bf16.mxu0 0
          %3343 = vmatpush1.bf16.msra.mxu0 %v3319
          %3344 = vmatprep.subr.bf16.mxu0 0
          %3345 = vmatpush1.bf16.msra.mxu0 %v3320
          %3346 = vmatprep.subr.bf16.mxu0 0
          %3347 = vmatpush1.bf16.msra.mxu0 %v3321
          %3348 = vmatprep.subr.bf16.mxu0 0
          %3349 = vmatpush1.bf16.msra.mxu0 %v3322
          %3350 = vmatprep.subr.bf16.mxu0 0
          %3351 = vmatpush1.bf16.msra.mxu0 %v3323
          %3352 = vmatprep.subr.bf16.mxu0 0
          %3353 = vmatpush1.bf16.msra.mxu0 %v3324
          %3354 = vmatprep.subr.bf16.mxu0 0
          %3355 = vmatpush1.bf16.msra.mxu0 %v3325
          %3356 = vmatprep.subr.bf16.mxu0 0
          %3357 = vmatpush1.bf16.msra.mxu0 %v3326
          %3358 = vmatprep.subr.bf16.mxu0 0
          %3359 = vmatpush1.bf16.msra.mxu0 %v3327
          %3360 = vmatprep.mubr.bf16.mxu0 %v3303
          %3361 = vmatmul.mubr.bf16.gmra.mrb[0].mxu0 %v3302
          %v3362 = vpop.f32.mrb[0].mxu0
          %v3363 = vadd.f32 0.0, %v3362
          %v3364 = vpop.f32.mrb[0].mxu0
          %v3365 = vpop.f32.mrb[0].mxu0
          %v3366 = vadd.f32 0.0, %v3365
          %v3367 = vpop.f32.mrb[0].mxu0
          %3368 = vdwg.mxu0
          %v3369 = vld [vmem:[#allocation22] sm:$0x1]
          %v3371 = vlaneseq
          %v3372 = vshrl.u32 %v3371, 7
          %v3373 = vsub.s32 0, %v3372
          %v3374 = vrot.slane %v3369, %v3373
          %v3376 = vmul.f32 %v3363, %v3374
          %v3377 = vmul.f32 %v3366, %v3374
          %v3378 = vld [vmem:[#allocation24] sm:$0x1]
          %v3380 = vlaneseq
          %v3381 = vshrl.u32 %v3380, 7
          %v3382 = vsub.s32 0, %v3381
          %v3383 = vrot.slane %v3378, %v3382
          %v3385 = vadd.f32 %v3376, %v3383
          %v3386 = vadd.f32 %v3377, %v3383
          %v3387 = vpack.c.bf16 %v3386, %v3385
          %v3389 = vunpack.c.l.b16 %v3387
          %v3390 = vunpack.c.h.b16 %v3387
          %v3391 = vpack.c.b16 %v3389, %v3389
          %v3392 = vpack.c.b16 %v3390, %v3390
          %3395 = vst [vmem:[#allocation26] sm:$0xf] %v3391
          %3396 = vst [vmem:[#allocation26 + $0x4] sm:$0xf] %v3392
        $region140: #{tpu_custom_call.1} parent=75 // pred_fallthru
          _
        // Predicated region
        $region141: #{tpu_custom_call.1} parent=75 // pred_check
          %p3397 = pneg %p374
        $region142: #{tpu_custom_call.1} parent=75 // pred_check_branch
          %3399 = sbr.rel (%p3397) target = $region144
        $region143: #{tpu_custom_call.1} parent=75 // pred_region
          %s3400 = smul.u32 2, %s42
          %s3402 = ssub.s32 128, 128
          %3403 = vsyncadd [#allocation5], %s3402
          %s3404 = smul.addr %s3400, 64
          %s3405 = scalar_lea.hbm %s14, %s3404
          %s3406 = sshll.u32 [#allocation26], 4
          %s3407 = int_to_ptr.vmem [resolvable:$true] %s3406
          %3412 = dma.vmem_to_hbm [thread:$0]  %s3407, 128, %s3405, [#allocation5], 64, 64, 4
        $region144: #{tpu_custom_call.1} parent=75 // pred_fallthru
          _
        // Predicated region
        $region145: #{tpu_custom_call.1} parent=75 // pred_check
          %p3413 = pneg %p374
        $region146: #{tpu_custom_call.1} parent=75 // pred_check_branch
          %3415 = sbr.rel (%p3413) target = $region148
        $region147: #{tpu_custom_call.1} parent=75 // pred_region
          %3416 = dma.done [#allocation5], 128
        $region148: #{tpu_custom_call.1} parent=75 // pred_fallthru
          _
      $region76: #{tpu_custom_call.1} parent=5 // pred_fallthru
        _
      %p3417 = scmp.le.s32.totalorder 2, %s33
      // Predicated region
      $region149: #{tpu_custom_call.1} parent=5 // pred_check
        %p3418 = pneg %p3417
      $region150: #{tpu_custom_call.1} parent=5 // pred_check_branch
        %3420 = sbr.rel (%p3418) target = $region152
      $region151: #{tpu_custom_call.1} parent=5 // pred_region
        %s3421 = ssub.s32 %s33, 2
      $region152: #{tpu_custom_call.1} parent=5 // pred_fallthru
        _
    $region6: #{tpu_custom_call.1} parent=1 // loop_footer
      %s37 = sadd.s32 1, %s33
    $region7: #{tpu_custom_call.1} parent=1 // loop_footer_branch
      %32 = sbr.rel target = $region3
    $region8: #{tpu_custom_call.1} parent=1 // loop_exit
      _
    %3422 = vsyncpa [#allocation4], 1
    %s3423 = scalar_lea.sflag [#allocation4], 1
    %3424 = vsyncpa %s3423, 1
    %3425 = vsyncpa [#allocation8], 1
    %s3426 = scalar_lea.sflag [#allocation8], 1
    %3427 = vsyncpa %s3426, 1
    %3428 = vsyncpa [#allocation11], 1
    %3429 = vsyncpa [#allocation14], 1
    %3430 = vsyncpa [#allocation17], 1
    %3431 = vsyncpa [#allocation20], 1
    %3432 = vsyncpa [#allocation23], 1
    %3433 = vsyncpa [#allocation5], 1
    %s3434 = scalar_lea.sflag [#allocation5], 1
    %3435 = vsyncpa %s3434, 1
    %3436 = vsyncpa [#allocation6], 1
    %s3437 = scalar_lea.sflag [#allocation6], 1
    %3438 = vsyncpa %s3437, 1

</llo_original>
